<compile_context>
chip_gen: v7x
topology: tpu7x:2x2x1
jax: 0.10.0
libtpu: 0.0.40
codegen_flags: <defaults>
</compile_context>

<pallas_src>
import functools

import jax
import jax.numpy as jnp
from jax.experimental import pallas as pl
from jax.experimental.pallas import tpu as pltpu


LANE = 128
SIGMA_BASE = 64          # lane where the packed sigma block starts
# PVCNN SharedMLP / embedf use LeakyReLU(0.1) (NOT the nn.LeakyReLU default).
LEAKY_SLOPE = 0.1


def _round_up(n, m):
    return (n + m - 1) // m * m


# ----------------------------------------------------------------------------
# Fused kernel: whole point-wise MLP chain + latent head, per (tm, 128) tile.
#   refs = (x_ref, w_slab_ref, b_slab_ref, out_ref)
# ----------------------------------------------------------------------------
def _fused_pvc_kernel(x_ref, w_ref, b_ref, out_ref, *, layer_dims, input_dim,
                      skip_weight, sigma_offset, slope):
    n_layers = len(layer_dims)
    x_bf16 = x_ref[...]                       # (tm, 128) bf16; lanes >= D are 0
    h = x_bf16
    for l, (kp, cp) in enumerate(layer_dims):  # statically unrolled layer chain
        w = w_ref[l, :kp, :cp]                # static slice of the weight slab
        b = b_ref[l, :, :cp]                  # (1, cp) f32 bias
        # bf16 MXU matmul, f32 accumulation; bias-add / activation in f32.
        y = jnp.dot(h, w, preferred_element_type=jnp.float32) + b
        if l < n_layers - 1:
            y = jnp.maximum(y, slope * y)     # LeakyReLU, 2 VALU ops
            h = y.astype(jnp.bfloat16)        # bf16 inter-layer activations
        else:
            h = y                             # final classifier layer: f32, no act
    out = h                                   # (tm, 128) f32, already packed layout:
    #   lanes [0, D)            : pt_mu (raw)
    #   lanes [D, D+Z)          : ft_mu
    #   lanes [64, 64+D)        : pt_sigma (raw)
    #   lanes [64+D, 64+D+Z)    : ft_sigma
    D = input_dim
    lane = jax.lax.broadcasted_iota(jnp.int32, out.shape, 1)
    x_f32 = x_bf16.astype(jnp.float32)
    packed = jnp.where(lane < D, skip_weight * out + x_f32, out)
    sig_mask = jnp.logical_and(lane >= SIGMA_BASE, lane < SIGMA_BASE + D)
    packed = packed - jnp.where(sig_mask, sigma_offset, 0.0)
    out_ref[...] = packed                     # one full-lane (unmasked) store


# ----------------------------------------------------------------------------
# Parameter construction (deterministic, synthetic) + lane padding + slabs
#   SA MLPs : (32,64) (64,128) (128,256) (128,128,128)
#   FP MLPs : (128,128) (128,128) (128,128) (128,128,64)
#   classifier: [128, dropout, num_classes]   (dropout == identity at eval)
# ----------------------------------------------------------------------------
def build_unet_params(key, in_channels, num_classes):
    sa_channels = [(32, 64), (64, 128), (128, 256), (128, 128, 128)]
    fp_channels = [(128, 128), (128, 128), (128, 128), (128, 128, 64)]
    widths = [in_channels]
    for blk in sa_channels:
        widths.extend(blk)
    for blk in fp_channels:
        widths.extend(blk)
    widths.extend([128, num_classes])

    params = []
    for li in range(len(widths) - 1):
        cin, cout = widths[li], widths[li + 1]
        key, wk = jax.random.split(key)
        w = (jax.random.normal(wk, (cin, cout), jnp.float32)
             * jnp.sqrt(2.0 / cin))
        b = jnp.zeros((cout,), jnp.float32)
        params.append((w, b))
    return params


def _packed_class_permutation(input_dim, zdim, num_classes):
    """Destination lane of each raw classifier column in the packed layout."""
    D, Z = input_dim, zdim
    assert num_classes == 2 * (D + Z)
    assert D + Z <= SIGMA_BASE, "packed mu/sigma layout needs input_dim+zdim <= 64"
    dest = (list(range(D))                                   # pt_mu   -> [0, D)
            + [SIGMA_BASE + j for j in range(D)]             # pt_sig  -> [64, 64+D)
            + [D + j for j in range(Z)]                      # ft_mu   -> [D, D+Z)
            + [SIGMA_BASE + D + j for j in range(Z)])        # ft_sig  -> [64+D, ..)
    return jnp.array(dest, jnp.int32)


def pad_params(params, class_perm=None, dtype=jnp.bfloat16):
    """Zero-pad every (cin, cout) to multiples of 128; weights in bf16.

    If class_perm is given, the LAST layer's columns are scattered to the
    packed-output lanes (pure column permutation => numerically identical)."""
    padded = []
    n = len(params)
    for li, (w, b) in enumerate(params):
        cin, cout = w.shape
        kp = _round_up(max(cin, LANE), LANE)
        cp = _round_up(max(cout, LANE), LANE)
        if class_perm is not None and li == n - 1:
            cols = class_perm
        else:
            cols = jnp.arange(cout, dtype=jnp.int32)
        wp = jnp.zeros((kp, cp), dtype).at[:cin, cols].set(w.astype(dtype))
        bp = jnp.zeros((1, cp), jnp.float32).at[0, cols].set(b)
        padded.append((wp, bp))
    return padded


def build_kernel_slabs(padded_params):
    """Concatenate all layers into one weight slab and one bias slab."""
    L = len(padded_params)
    kmax = max(w.shape[0] for w, _ in padded_params)
    cmax = max(w.shape[1] for w, _ in padded_params)
    w_slab = jnp.zeros((L, kmax, cmax), padded_params[0][0].dtype)
    b_slab = jnp.zeros((L, 1, cmax), jnp.float32)
    layer_dims = []
    for l, (wp, bp) in enumerate(padded_params):
        kp, cp = wp.shape
        w_slab = w_slab.at[l, :kp, :cp].set(wp)
        b_slab = b_slab.at[l, :, :cp].set(bp)
        layer_dims.append((kp, cp))
    return w_slab, b_slab, tuple(layer_dims)


# ----------------------------------------------------------------------------
# Tile policy: 1 grid step for small M (v5e/v6e single TC); 1024-row tiles and
# a ("parallel",) grid only when M is big enough that a v7x dual-TC split
# still leaves each core compute-bound.
# ----------------------------------------------------------------------------
def _choose_tile(M, tm_max=1024):
    if M <= tm_max:
        return _round_up(max(M, 8), 8)
    return tm_max


# ----------------------------------------------------------------------------
# Forward pass (PointTransPVC semantics), single fused pallas_call
# ----------------------------------------------------------------------------
def point_trans_pvc_forward(x, style, w_slab, b_slab, layer_dims, *, input_dim,
                            zdim, skip_weight, pts_sigma_offset, tm_max=1024):
    """x: (B, N, D) latent points, style: (B, style_dim) (unused, see TODO)."""
    del style  # TODO(synk): style drives AdaGN inside SharedMLP (not provided).
    B, N, D = x.shape
    assert D == input_dim
    assert input_dim + zdim <= SIGMA_BASE
    M = B * N

    tm = _choose_tile(M, tm_max)
    Mp = _round_up(M, tm)

    # Lane-padded bf16 input slab (halves the input DMA vs f32).
    x_pad = jnp.zeros((Mp, LANE), jnp.bfloat16).at[:M, :D].set(
        x.reshape(M, D).astype(jnp.bfloat16))

    flops = sum(2 * Mp * kp * cp for kp, cp in layer_dims)
    bytes_accessed = (int(x_pad.size) * 2 + int(w_slab.size) * 2
                      + int(b_slab.size) * 4 + Mp * LANE * 4)

    kernel = functools.partial(
        _fused_pvc_kernel, layer_dims=layer_dims, input_dim=input_dim,
        skip_weight=skip_weight, sigma_offset=pts_sigma_offset,
        slope=LEAKY_SLOPE)

    out_pad = pl.pallas_call(
        kernel,
        out_shape=jax.ShapeDtypeStruct((Mp, LANE), jnp.float32),
        grid=(Mp // tm,),
        in_specs=[
            pl.BlockSpec((tm, LANE), lambda i: (i, 0)),
            # Full-array slabs with constant block index => VMEM-resident.
            pl.BlockSpec(w_slab.shape, lambda i: (0, 0, 0)),
            pl.BlockSpec(b_slab.shape, lambda i: (0, 0, 0)),
        ],
        out_specs=pl.BlockSpec((tm, LANE), lambda i: (i, 0)),
        compiler_params=pltpu.CompilerParams(
            dimension_semantics=("parallel",),
            vmem_limit_bytes=40 * 1024 * 1024),
        cost_estimate=pl.CostEstimate(flops=flops, transcendentals=0,
                                      bytes_accessed=bytes_accessed),
    )(x_pad, w_slab, b_slab)

    # Slice the packed lane-dense slab back to real widths in XLA.
    Cl = input_dim + zdim
    mu_1d = out_pad[:M, :Cl].reshape(B, N * Cl)
    sigma_1d = out_pad[:M, SIGMA_BASE:SIGMA_BASE + Cl].reshape(B, N * Cl)
    return {'mu_1d': mu_1d, 'sigma_1d': sigma_1d}


# ----------------------------------------------------------------------------
# Pure-JAX reference (same bf16 math, UNPERMUTED classifier layout)
# ----------------------------------------------------------------------------
def reference_forward(x, padded_params, *, input_dim, zdim, skip_weight,
                      pts_sigma_offset):
    B, N, D = x.shape
    M = B * N
    xb = jnp.zeros((M, LANE), jnp.bfloat16).at[:, :D].set(
        x.reshape(M, D).astype(jnp.bfloat16))
    h = xb
    n = len(padded_params)
    for l, (wp, bp) in enumerate(padded_params):
        y = jnp.dot(h, wp, preferred_element_type=jnp.float32) + bp
        if l < n - 1:
            y = jnp.maximum(y, LEAKY_SLOPE * y)
            h = y.astype(jnp.bfloat16)
        else:
            h = y
    out = h[:, :2 * (input_dim + zdim)]
    xf = xb[:, :input_dim].astype(jnp.float32)
    pt_mu = skip_weight * out[:, :input_dim] + xf
    pt_sigma = out[:, input_dim:2 * input_dim] - pts_sigma_offset
    if zdim > 0:
        mu = jnp.concatenate(
            [pt_mu, out[:, 2 * input_dim:2 * input_dim + zdim]], axis=-1)
        sigma = jnp.concatenate(
            [pt_sigma, out[:, 2 * input_dim + zdim:]], axis=-1)
    else:
        mu, sigma = pt_mu, pt_sigma
    return mu.reshape(B, -1), sigma.reshape(B, -1)


# ----------------------------------------------------------------------------
# Main
# ----------------------------------------------------------------------------
if __name__ == "__main__":
    B, N, input_dim = 2, 64, 3
    zdim = 4
    style_dim = 32
    skip_weight = 0.01
    pts_sigma_offset = 6.0
    num_classes = 2 * zdim + 2 * input_dim          # 14

    key = jax.random.PRNGKey(0)
    kx, ks, kp = jax.random.split(key, 3)
    x = jax.random.normal(kx, (B, N, input_dim), jnp.float32)
    style = jax.random.normal(ks, (B, style_dim), jnp.float32)

    raw_params = build_unet_params(kp, in_channels=input_dim,
                                   num_classes=num_classes)
    perm = _packed_class_permutation(input_dim, zdim, num_classes)
    padded_ref = pad_params(raw_params, class_perm=None)      # reference layout
    padded_krn = pad_params(raw_params, class_perm=perm)      # packed layout
    w_slab, b_slab, layer_dims = build_kernel_slabs(padded_krn)

    out = point_trans_pvc_forward(
        x, style, w_slab, b_slab, layer_dims, input_dim=input_dim, zdim=zdim,
        skip_weight=skip_weight, pts_sigma_offset=pts_sigma_offset)
    jax.block_until_ready(out)

    Cl = input_dim + zdim
    assert out['mu_1d'].shape == (B, N * Cl)
    assert out['sigma_1d'].shape == (B, N * Cl)

    mu_ref, sigma_ref = reference_forward(
        x, padded_ref, input_dim=input_dim, zdim=zdim,
        skip_weight=skip_weight, pts_sigma_offset=pts_sigma_offset)
    assert bool(jnp.all(jnp.isfinite(out['mu_1d'])))
    assert bool(jnp.all(jnp.isfinite(out['sigma_1d'])))
    # Kernel and reference share the same padded-bf16 math path => tight check.
    assert bool(jnp.max(jnp.abs(out['mu_1d'] - mu_ref)) < 1e-4)
    assert bool(jnp.max(jnp.abs(out['sigma_1d'] - sigma_ref)) < 1e-4)

    print("KERNEL_OK")
</pallas_src>

<mosaic_0001>
module attributes {stable_mosaic.version = 11 : i64} {
  func.func @_fused_pvc_kernel(%arg0: i32, %arg1: memref<128x128xbf16, #tpu.memory_space<vmem>>, %arg2: memref<20x256x256xbf16, #tpu.memory_space<vmem>>, %arg3: memref<20x1x256xf32, #tpu.memory_space<vmem>>, %arg4: memref<128x128xf32, #tpu.memory_space<vmem>>) attributes {dimension_semantics = [#tpu.dimension_semantics<parallel>], iteration_bounds = array<i64: 1>, scalar_prefetch = 0 : i64, scratch_operands = 0 : i64, tpu.core_type = #tpu.core_type<tc>, window_params = [{transform_indices = @transform_0, window_bounds = array<i64: 128, 128>}, {pipeline_mode = #tpu.pipeline_mode<synchronous>, transform_indices = @transform_1, window_bounds = array<i64: 20, 256, 256>}, {pipeline_mode = #tpu.pipeline_mode<synchronous>, transform_indices = @transform_2, window_bounds = array<i64: 20, 1, 256>}, {transform_indices = @transform_3, window_bounds = array<i64: 128, 128>}]} {
    %c0 = arith.constant 0 : index
    %c0_0 = arith.constant 0 : index
    %0 = vector.load %arg1[%c0, %c0_0] : memref<128x128xbf16, #tpu.memory_space<vmem>>, vector<128x128xbf16>
    %c0_1 = arith.constant 0 : index
    %c0_2 = arith.constant 0 : index
    %c0_3 = arith.constant 0 : index
    %1 = vector.load %arg2[%c0_1, %c0_2, %c0_3] : memref<20x256x256xbf16, #tpu.memory_space<vmem>>, vector<1x128x128xbf16>
    %2 = vector.shape_cast %1 : vector<1x128x128xbf16> to vector<128x128xbf16>
    %c0_4 = arith.constant 0 : index
    %c0_5 = arith.constant 0 : index
    %c0_6 = arith.constant 0 : index
    %3 = vector.load %arg3[%c0_4, %c0_5, %c0_6] : memref<20x1x256xf32, #tpu.memory_space<vmem>>, vector<1x1x128xf32>
    %4 = vector.shape_cast %3 : vector<1x1x128xf32> to vector<1x128xf32>
    %cst = arith.constant dense<0.000000e+00> : vector<128x128xf32>
    %5 = tpu.matmul %0, %2, %cst {dimension_numbers = #tpu.dot_dimension_numbers<[1], [0], [0], [1], [0, 0, 1, 1], [], []>} : vector<128x128xbf16>, vector<128x128xbf16>, vector<128x128xf32> -> vector<128x128xf32>
    %6 = vector.broadcast %4 : vector<1x128xf32> to vector<128x128xf32>
    %7 = arith.addf %5, %6 : vector<128x128xf32>
    %cst_7 = arith.constant 1.000000e-01 : f32
    %8 = vector.broadcast %cst_7 : f32 to vector<128x128xf32>
    %9 = arith.mulf %8, %7 : vector<128x128xf32>
    %10 = arith.maximumf %7, %9 : vector<128x128xf32>
    %11 = arith.truncf %10 : vector<128x128xf32> to vector<128x128xbf16>
    %c1 = arith.constant 1 : index
    %c0_8 = arith.constant 0 : index
    %c0_9 = arith.constant 0 : index
    %12 = vector.load %arg2[%c1, %c0_8, %c0_9] : memref<20x256x256xbf16, #tpu.memory_space<vmem>>, vector<1x128x128xbf16>
    %13 = vector.shape_cast %12 : vector<1x128x128xbf16> to vector<128x128xbf16>
    %c1_10 = arith.constant 1 : index
    %c0_11 = arith.constant 0 : index
    %c0_12 = arith.constant 0 : index
    %14 = vector.load %arg3[%c1_10, %c0_11, %c0_12] : memref<20x1x256xf32, #tpu.memory_space<vmem>>, vector<1x1x128xf32>
    %15 = vector.shape_cast %14 : vector<1x1x128xf32> to vector<1x128xf32>
    %cst_13 = arith.constant dense<0.000000e+00> : vector<128x128xf32>
    %16 = tpu.matmul %11, %13, %cst_13 {dimension_numbers = #tpu.dot_dimension_numbers<[1], [0], [0], [1], [0, 0, 1, 1], [], []>} : vector<128x128xbf16>, vector<128x128xbf16>, vector<128x128xf32> -> vector<128x128xf32>
    %17 = vector.broadcast %15 : vector<1x128xf32> to vector<128x128xf32>
    %18 = arith.addf %16, %17 : vector<128x128xf32>
    %cst_14 = arith.constant 1.000000e-01 : f32
    %19 = vector.broadcast %cst_14 : f32 to vector<128x128xf32>
    %20 = arith.mulf %19, %18 : vector<128x128xf32>
    %21 = arith.maximumf %18, %20 : vector<128x128xf32>
    %22 = arith.truncf %21 : vector<128x128xf32> to vector<128x128xbf16>
    %c2 = arith.constant 2 : index
    %c0_15 = arith.constant 0 : index
    %c0_16 = arith.constant 0 : index
    %23 = vector.load %arg2[%c2, %c0_15, %c0_16] : memref<20x256x256xbf16, #tpu.memory_space<vmem>>, vector<1x128x128xbf16>
    %24 = vector.shape_cast %23 : vector<1x128x128xbf16> to vector<128x128xbf16>
    %c2_17 = arith.constant 2 : index
    %c0_18 = arith.constant 0 : index
    %c0_19 = arith.constant 0 : index
    %25 = vector.load %arg3[%c2_17, %c0_18, %c0_19] : memref<20x1x256xf32, #tpu.memory_space<vmem>>, vector<1x1x128xf32>
    %26 = vector.shape_cast %25 : vector<1x1x128xf32> to vector<1x128xf32>
    %cst_20 = arith.constant dense<0.000000e+00> : vector<128x128xf32>
    %27 = tpu.matmul %22, %24, %cst_20 {dimension_numbers = #tpu.dot_dimension_numbers<[1], [0], [0], [1], [0, 0, 1, 1], [], []>} : vector<128x128xbf16>, vector<128x128xbf16>, vector<128x128xf32> -> vector<128x128xf32>
    %28 = vector.broadcast %26 : vector<1x128xf32> to vector<128x128xf32>
    %29 = arith.addf %27, %28 : vector<128x128xf32>
    %cst_21 = arith.constant 1.000000e-01 : f32
    %30 = vector.broadcast %cst_21 : f32 to vector<128x128xf32>
    %31 = arith.mulf %30, %29 : vector<128x128xf32>
    %32 = arith.maximumf %29, %31 : vector<128x128xf32>
    %33 = arith.truncf %32 : vector<128x128xf32> to vector<128x128xbf16>
    %c3 = arith.constant 3 : index
    %c0_22 = arith.constant 0 : index
    %c0_23 = arith.constant 0 : index
    %34 = vector.load %arg2[%c3, %c0_22, %c0_23] : memref<20x256x256xbf16, #tpu.memory_space<vmem>>, vector<1x128x128xbf16>
    %35 = vector.shape_cast %34 : vector<1x128x128xbf16> to vector<128x128xbf16>
    %c3_24 = arith.constant 3 : index
    %c0_25 = arith.constant 0 : index
    %c0_26 = arith.constant 0 : index
    %36 = vector.load %arg3[%c3_24, %c0_25, %c0_26] : memref<20x1x256xf32, #tpu.memory_space<vmem>>, vector<1x1x128xf32>
    %37 = vector.shape_cast %36 : vector<1x1x128xf32> to vector<1x128xf32>
    %cst_27 = arith.constant dense<0.000000e+00> : vector<128x128xf32>
    %38 = tpu.matmul %33, %35, %cst_27 {dimension_numbers = #tpu.dot_dimension_numbers<[1], [0], [0], [1], [0, 0, 1, 1], [], []>} : vector<128x128xbf16>, vector<128x128xbf16>, vector<128x128xf32> -> vector<128x128xf32>
    %39 = vector.broadcast %37 : vector<1x128xf32> to vector<128x128xf32>
    %40 = arith.addf %38, %39 : vector<128x128xf32>
    %cst_28 = arith.constant 1.000000e-01 : f32
    %41 = vector.broadcast %cst_28 : f32 to vector<128x128xf32>
    %42 = arith.mulf %41, %40 : vector<128x128xf32>
    %43 = arith.maximumf %40, %42 : vector<128x128xf32>
    %44 = arith.truncf %43 : vector<128x128xf32> to vector<128x128xbf16>
    %c4 = arith.constant 4 : index
    %c0_29 = arith.constant 0 : index
    %c0_30 = arith.constant 0 : index
    %45 = vector.load %arg2[%c4, %c0_29, %c0_30] : memref<20x256x256xbf16, #tpu.memory_space<vmem>>, vector<1x128x128xbf16>
    %46 = vector.shape_cast %45 : vector<1x128x128xbf16> to vector<128x128xbf16>
    %c4_31 = arith.constant 4 : index
    %c0_32 = arith.constant 0 : index
    %c0_33 = arith.constant 0 : index
    %47 = vector.load %arg3[%c4_31, %c0_32, %c0_33] : memref<20x1x256xf32, #tpu.memory_space<vmem>>, vector<1x1x128xf32>
    %48 = vector.shape_cast %47 : vector<1x1x128xf32> to vector<1x128xf32>
    %cst_34 = arith.constant dense<0.000000e+00> : vector<128x128xf32>
    %49 = tpu.matmul %44, %46, %cst_34 {dimension_numbers = #tpu.dot_dimension_numbers<[1], [0], [0], [1], [0, 0, 1, 1], [], []>} : vector<128x128xbf16>, vector<128x128xbf16>, vector<128x128xf32> -> vector<128x128xf32>
    %50 = vector.broadcast %48 : vector<1x128xf32> to vector<128x128xf32>
    %51 = arith.addf %49, %50 : vector<128x128xf32>
    %cst_35 = arith.constant 1.000000e-01 : f32
    %52 = vector.broadcast %cst_35 : f32 to vector<128x128xf32>
    %53 = arith.mulf %52, %51 : vector<128x128xf32>
    %54 = arith.maximumf %51, %53 : vector<128x128xf32>
    %55 = arith.truncf %54 : vector<128x128xf32> to vector<128x128xbf16>
    %c5 = arith.constant 5 : index
    %c0_36 = arith.constant 0 : index
    %c0_37 = arith.constant 0 : index
    %56 = vector.load %arg2[%c5, %c0_36, %c0_37] : memref<20x256x256xbf16, #tpu.memory_space<vmem>>, vector<1x128x256xbf16>
    %57 = vector.shape_cast %56 : vector<1x128x256xbf16> to vector<128x256xbf16>
    %c5_38 = arith.constant 5 : index
    %c0_39 = arith.constant 0 : index
    %c0_40 = arith.constant 0 : index
    %58 = vector.load %arg3[%c5_38, %c0_39, %c0_40] : memref<20x1x256xf32, #tpu.memory_space<vmem>>, vector<1x1x256xf32>
    %59 = vector.shape_cast %58 : vector<1x1x256xf32> to vector<1x256xf32>
    %cst_41 = arith.constant dense<0.000000e+00> : vector<128x256xf32>
    %60 = tpu.matmul %55, %57, %cst_41 {dimension_numbers = #tpu.dot_dimension_numbers<[1], [0], [0], [1], [0, 0, 1, 1], [], []>} : vector<128x128xbf16>, vector<128x256xbf16>, vector<128x256xf32> -> vector<128x256xf32>
    %61 = vector.broadcast %59 : vector<1x256xf32> to vector<128x256xf32>
    %62 = arith.addf %60, %61 : vector<128x256xf32>
    %cst_42 = arith.constant 1.000000e-01 : f32
    %63 = vector.broadcast %cst_42 : f32 to vector<128x256xf32>
    %64 = arith.mulf %63, %62 : vector<128x256xf32>
    %65 = arith.maximumf %62, %64 : vector<128x256xf32>
    %66 = arith.truncf %65 : vector<128x256xf32> to vector<128x256xbf16>
    %c6 = arith.constant 6 : index
    %c0_43 = arith.constant 0 : index
    %c0_44 = arith.constant 0 : index
    %67 = vector.load %arg2[%c6, %c0_43, %c0_44] : memref<20x256x256xbf16, #tpu.memory_space<vmem>>, vector<1x256x128xbf16>
    %68 = vector.shape_cast %67 : vector<1x256x128xbf16> to vector<256x128xbf16>
    %c6_45 = arith.constant 6 : index
    %c0_46 = arith.constant 0 : index
    %c0_47 = arith.constant 0 : index
    %69 = vector.load %arg3[%c6_45, %c0_46, %c0_47] : memref<20x1x256xf32, #tpu.memory_space<vmem>>, vector<1x1x128xf32>
    %70 = vector.shape_cast %69 : vector<1x1x128xf32> to vector<1x128xf32>
    %cst_48 = arith.constant dense<0.000000e+00> : vector<128x128xf32>
    %71 = tpu.matmul %66, %68, %cst_48 {dimension_numbers = #tpu.dot_dimension_numbers<[1], [0], [0], [1], [0, 0, 1, 1], [], []>} : vector<128x256xbf16>, vector<256x128xbf16>, vector<128x128xf32> -> vector<128x128xf32>
    %72 = vector.broadcast %70 : vector<1x128xf32> to vector<128x128xf32>
    %73 = arith.addf %71, %72 : vector<128x128xf32>
    %cst_49 = arith.constant 1.000000e-01 : f32
    %74 = vector.broadcast %cst_49 : f32 to vector<128x128xf32>
    %75 = arith.mulf %74, %73 : vector<128x128xf32>
    %76 = arith.maximumf %73, %75 : vector<128x128xf32>
    %77 = arith.truncf %76 : vector<128x128xf32> to vector<128x128xbf16>
    %c7 = arith.constant 7 : index
    %c0_50 = arith.constant 0 : index
    %c0_51 = arith.constant 0 : index
    %78 = vector.load %arg2[%c7, %c0_50, %c0_51] : memref<20x256x256xbf16, #tpu.memory_space<vmem>>, vector<1x128x128xbf16>
    %79 = vector.shape_cast %78 : vector<1x128x128xbf16> to vector<128x128xbf16>
    %c7_52 = arith.constant 7 : index
    %c0_53 = arith.constant 0 : index
    %c0_54 = arith.constant 0 : index
    %80 = vector.load %arg3[%c7_52, %c0_53, %c0_54] : memref<20x1x256xf32, #tpu.memory_space<vmem>>, vector<1x1x128xf32>
    %81 = vector.shape_cast %80 : vector<1x1x128xf32> to vector<1x128xf32>
    %cst_55 = arith.constant dense<0.000000e+00> : vector<128x128xf32>
    %82 = tpu.matmul %77, %79, %cst_55 {dimension_numbers = #tpu.dot_dimension_numbers<[1], [0], [0], [1], [0, 0, 1, 1], [], []>} : vector<128x128xbf16>, vector<128x128xbf16>, vector<128x128xf32> -> vector<128x128xf32>
    %83 = vector.broadcast %81 : vector<1x128xf32> to vector<128x128xf32>
    %84 = arith.addf %82, %83 : vector<128x128xf32>
    %cst_56 = arith.constant 1.000000e-01 : f32
    %85 = vector.broadcast %cst_56 : f32 to vector<128x128xf32>
    %86 = arith.mulf %85, %84 : vector<128x128xf32>
    %87 = arith.maximumf %84, %86 : vector<128x128xf32>
    %88 = arith.truncf %87 : vector<128x128xf32> to vector<128x128xbf16>
    %c8 = arith.constant 8 : index
    %c0_57 = arith.constant 0 : index
    %c0_58 = arith.constant 0 : index
    %89 = vector.load %arg2[%c8, %c0_57, %c0_58] : memref<20x256x256xbf16, #tpu.memory_space<vmem>>, vector<1x128x128xbf16>
    %90 = vector.shape_cast %89 : vector<1x128x128xbf16> to vector<128x128xbf16>
    %c8_59 = arith.constant 8 : index
    %c0_60 = arith.constant 0 : index
    %c0_61 = arith.constant 0 : index
    %91 = vector.load %arg3[%c8_59, %c0_60, %c0_61] : memref<20x1x256xf32, #tpu.memory_space<vmem>>, vector<1x1x128xf32>
    %92 = vector.shape_cast %91 : vector<1x1x128xf32> to vector<1x128xf32>
    %cst_62 = arith.constant dense<0.000000e+00> : vector<128x128xf32>
    %93 = tpu.matmul %88, %90, %cst_62 {dimension_numbers = #tpu.dot_dimension_numbers<[1], [0], [0], [1], [0, 0, 1, 1], [], []>} : vector<128x128xbf16>, vector<128x128xbf16>, vector<128x128xf32> -> vector<128x128xf32>
    %94 = vector.broadcast %92 : vector<1x128xf32> to vector<128x128xf32>
    %95 = arith.addf %93, %94 : vector<128x128xf32>
    %cst_63 = arith.constant 1.000000e-01 : f32
    %96 = vector.broadcast %cst_63 : f32 to vector<128x128xf32>
    %97 = arith.mulf %96, %95 : vector<128x128xf32>
    %98 = arith.maximumf %95, %97 : vector<128x128xf32>
    %99 = arith.truncf %98 : vector<128x128xf32> to vector<128x128xbf16>
    %c9 = arith.constant 9 : index
    %c0_64 = arith.constant 0 : index
    %c0_65 = arith.constant 0 : index
    %100 = vector.load %arg2[%c9, %c0_64, %c0_65] : memref<20x256x256xbf16, #tpu.memory_space<vmem>>, vector<1x128x128xbf16>
    %101 = vector.shape_cast %100 : vector<1x128x128xbf16> to vector<128x128xbf16>
    %c9_66 = arith.constant 9 : index
    %c0_67 = arith.constant 0 : index
    %c0_68 = arith.constant 0 : index
    %102 = vector.load %arg3[%c9_66, %c0_67, %c0_68] : memref<20x1x256xf32, #tpu.memory_space<vmem>>, vector<1x1x128xf32>
    %103 = vector.shape_cast %102 : vector<1x1x128xf32> to vector<1x128xf32>
    %cst_69 = arith.constant dense<0.000000e+00> : vector<128x128xf32>
    %104 = tpu.matmul %99, %101, %cst_69 {dimension_numbers = #tpu.dot_dimension_numbers<[1], [0], [0], [1], [0, 0, 1, 1], [], []>} : vector<128x128xbf16>, vector<128x128xbf16>, vector<128x128xf32> -> vector<128x128xf32>
    %105 = vector.broadcast %103 : vector<1x128xf32> to vector<128x128xf32>
    %106 = arith.addf %104, %105 : vector<128x128xf32>
    %cst_70 = arith.constant 1.000000e-01 : f32
    %107 = vector.broadcast %cst_70 : f32 to vector<128x128xf32>
    %108 = arith.mulf %107, %106 : vector<128x128xf32>
    %109 = arith.maximumf %106, %108 : vector<128x128xf32>
    %110 = arith.truncf %109 : vector<128x128xf32> to vector<128x128xbf16>
    %c10 = arith.constant 10 : index
    %c0_71 = arith.constant 0 : index
    %c0_72 = arith.constant 0 : index
    %111 = vector.load %arg2[%c10, %c0_71, %c0_72] : memref<20x256x256xbf16, #tpu.memory_space<vmem>>, vector<1x128x128xbf16>
    %112 = vector.shape_cast %111 : vector<1x128x128xbf16> to vector<128x128xbf16>
    %c10_73 = arith.constant 10 : index
    %c0_74 = arith.constant 0 : index
    %c0_75 = arith.constant 0 : index
    %113 = vector.load %arg3[%c10_73, %c0_74, %c0_75] : memref<20x1x256xf32, #tpu.memory_space<vmem>>, vector<1x1x128xf32>
    %114 = vector.shape_cast %113 : vector<1x1x128xf32> to vector<1x128xf32>
    %cst_76 = arith.constant dense<0.000000e+00> : vector<128x128xf32>
    %115 = tpu.matmul %110, %112, %cst_76 {dimension_numbers = #tpu.dot_dimension_numbers<[1], [0], [0], [1], [0, 0, 1, 1], [], []>} : vector<128x128xbf16>, vector<128x128xbf16>, vector<128x128xf32> -> vector<128x128xf32>
    %116 = vector.broadcast %114 : vector<1x128xf32> to vector<128x128xf32>
    %117 = arith.addf %115, %116 : vector<128x128xf32>
    %cst_77 = arith.constant 1.000000e-01 : f32
    %118 = vector.broadcast %cst_77 : f32 to vector<128x128xf32>
    %119 = arith.mulf %118, %117 : vector<128x128xf32>
    %120 = arith.maximumf %117, %119 : vector<128x128xf32>
    %121 = arith.truncf %120 : vector<128x128xf32> to vector<128x128xbf16>
    %c11 = arith.constant 11 : index
    %c0_78 = arith.constant 0 : index
    %c0_79 = arith.constant 0 : index
    %122 = vector.load %arg2[%c11, %c0_78, %c0_79] : memref<20x256x256xbf16, #tpu.memory_space<vmem>>, vector<1x128x128xbf16>
    %123 = vector.shape_cast %122 : vector<1x128x128xbf16> to vector<128x128xbf16>
    %c11_80 = arith.constant 11 : index
    %c0_81 = arith.constant 0 : index
    %c0_82 = arith.constant 0 : index
    %124 = vector.load %arg3[%c11_80, %c0_81, %c0_82] : memref<20x1x256xf32, #tpu.memory_space<vmem>>, vector<1x1x128xf32>
    %125 = vector.shape_cast %124 : vector<1x1x128xf32> to vector<1x128xf32>
    %cst_83 = arith.constant dense<0.000000e+00> : vector<128x128xf32>
    %126 = tpu.matmul %121, %123, %cst_83 {dimension_numbers = #tpu.dot_dimension_numbers<[1], [0], [0], [1], [0, 0, 1, 1], [], []>} : vector<128x128xbf16>, vector<128x128xbf16>, vector<128x128xf32> -> vector<128x128xf32>
    %127 = vector.broadcast %125 : vector<1x128xf32> to vector<128x128xf32>
    %128 = arith.addf %126, %127 : vector<128x128xf32>
    %cst_84 = arith.constant 1.000000e-01 : f32
    %129 = vector.broadcast %cst_84 : f32 to vector<128x128xf32>
    %130 = arith.mulf %129, %128 : vector<128x128xf32>
    %131 = arith.maximumf %128, %130 : vector<128x128xf32>
    %132 = arith.truncf %131 : vector<128x128xf32> to vector<128x128xbf16>
    %c12 = arith.constant 12 : index
    %c0_85 = arith.constant 0 : index
    %c0_86 = arith.constant 0 : index
    %133 = vector.load %arg2[%c12, %c0_85, %c0_86] : memref<20x256x256xbf16, #tpu.memory_space<vmem>>, vector<1x128x128xbf16>
    %134 = vector.shape_cast %133 : vector<1x128x128xbf16> to vector<128x128xbf16>
    %c12_87 = arith.constant 12 : index
    %c0_88 = arith.constant 0 : index
    %c0_89 = arith.constant 0 : index
    %135 = vector.load %arg3[%c12_87, %c0_88, %c0_89] : memref<20x1x256xf32, #tpu.memory_space<vmem>>, vector<1x1x128xf32>
    %136 = vector.shape_cast %135 : vector<1x1x128xf32> to vector<1x128xf32>
    %cst_90 = arith.constant dense<0.000000e+00> : vector<128x128xf32>
    %137 = tpu.matmul %132, %134, %cst_90 {dimension_numbers = #tpu.dot_dimension_numbers<[1], [0], [0], [1], [0, 0, 1, 1], [], []>} : vector<128x128xbf16>, vector<128x128xbf16>, vector<128x128xf32> -> vector<128x128xf32>
    %138 = vector.broadcast %136 : vector<1x128xf32> to vector<128x128xf32>
    %139 = arith.addf %137, %138 : vector<128x128xf32>
    %cst_91 = arith.constant 1.000000e-01 : f32
    %140 = vector.broadcast %cst_91 : f32 to vector<128x128xf32>
    %141 = arith.mulf %140, %139 : vector<128x128xf32>
    %142 = arith.maximumf %139, %141 : vector<128x128xf32>
    %143 = arith.truncf %142 : vector<128x128xf32> to vector<128x128xbf16>
    %c13 = arith.constant 13 : index
    %c0_92 = arith.constant 0 : index
    %c0_93 = arith.constant 0 : index
    %144 = vector.load %arg2[%c13, %c0_92, %c0_93] : memref<20x256x256xbf16, #tpu.memory_space<vmem>>, vector<1x128x128xbf16>
    %145 = vector.shape_cast %144 : vector<1x128x128xbf16> to vector<128x128xbf16>
    %c13_94 = arith.constant 13 : index
    %c0_95 = arith.constant 0 : index
    %c0_96 = arith.constant 0 : index
    %146 = vector.load %arg3[%c13_94, %c0_95, %c0_96] : memref<20x1x256xf32, #tpu.memory_space<vmem>>, vector<1x1x128xf32>
    %147 = vector.shape_cast %146 : vector<1x1x128xf32> to vector<1x128xf32>
    %cst_97 = arith.constant dense<0.000000e+00> : vector<128x128xf32>
    %148 = tpu.matmul %143, %145, %cst_97 {dimension_numbers = #tpu.dot_dimension_numbers<[1], [0], [0], [1], [0, 0, 1, 1], [], []>} : vector<128x128xbf16>, vector<128x128xbf16>, vector<128x128xf32> -> vector<128x128xf32>
    %149 = vector.broadcast %147 : vector<1x128xf32> to vector<128x128xf32>
    %150 = arith.addf %148, %149 : vector<128x128xf32>
    %cst_98 = arith.constant 1.000000e-01 : f32
    %151 = vector.broadcast %cst_98 : f32 to vector<128x128xf32>
    %152 = arith.mulf %151, %150 : vector<128x128xf32>
    %153 = arith.maximumf %150, %152 : vector<128x128xf32>
    %154 = arith.truncf %153 : vector<128x128xf32> to vector<128x128xbf16>
    %c14 = arith.constant 14 : index
    %c0_99 = arith.constant 0 : index
    %c0_100 = arith.constant 0 : index
    %155 = vector.load %arg2[%c14, %c0_99, %c0_100] : memref<20x256x256xbf16, #tpu.memory_space<vmem>>, vector<1x128x128xbf16>
    %156 = vector.shape_cast %155 : vector<1x128x128xbf16> to vector<128x128xbf16>
    %c14_101 = arith.constant 14 : index
    %c0_102 = arith.constant 0 : index
    %c0_103 = arith.constant 0 : index
    %157 = vector.load %arg3[%c14_101, %c0_102, %c0_103] : memref<20x1x256xf32, #tpu.memory_space<vmem>>, vector<1x1x128xf32>
    %158 = vector.shape_cast %157 : vector<1x1x128xf32> to vector<1x128xf32>
    %cst_104 = arith.constant dense<0.000000e+00> : vector<128x128xf32>
    %159 = tpu.matmul %154, %156, %cst_104 {dimension_numbers = #tpu.dot_dimension_numbers<[1], [0], [0], [1], [0, 0, 1, 1], [], []>} : vector<128x128xbf16>, vector<128x128xbf16>, vector<128x128xf32> -> vector<128x128xf32>
    %160 = vector.broadcast %158 : vector<1x128xf32> to vector<128x128xf32>
    %161 = arith.addf %159, %160 : vector<128x128xf32>
    %cst_105 = arith.constant 1.000000e-01 : f32
    %162 = vector.broadcast %cst_105 : f32 to vector<128x128xf32>
    %163 = arith.mulf %162, %161 : vector<128x128xf32>
    %164 = arith.maximumf %161, %163 : vector<128x128xf32>
    %165 = arith.truncf %164 : vector<128x128xf32> to vector<128x128xbf16>
    %c15 = arith.constant 15 : index
    %c0_106 = arith.constant 0 : index
    %c0_107 = arith.constant 0 : index
    %166 = vector.load %arg2[%c15, %c0_106, %c0_107] : memref<20x256x256xbf16, #tpu.memory_space<vmem>>, vector<1x128x128xbf16>
    %167 = vector.shape_cast %166 : vector<1x128x128xbf16> to vector<128x128xbf16>
    %c15_108 = arith.constant 15 : index
    %c0_109 = arith.constant 0 : index
    %c0_110 = arith.constant 0 : index
    %168 = vector.load %arg3[%c15_108, %c0_109, %c0_110] : memref<20x1x256xf32, #tpu.memory_space<vmem>>, vector<1x1x128xf32>
    %169 = vector.shape_cast %168 : vector<1x1x128xf32> to vector<1x128xf32>
    %cst_111 = arith.constant dense<0.000000e+00> : vector<128x128xf32>
    %170 = tpu.matmul %165, %167, %cst_111 {dimension_numbers = #tpu.dot_dimension_numbers<[1], [0], [0], [1], [0, 0, 1, 1], [], []>} : vector<128x128xbf16>, vector<128x128xbf16>, vector<128x128xf32> -> vector<128x128xf32>
    %171 = vector.broadcast %169 : vector<1x128xf32> to vector<128x128xf32>
    %172 = arith.addf %170, %171 : vector<128x128xf32>
    %cst_112 = arith.constant 1.000000e-01 : f32
    %173 = vector.broadcast %cst_112 : f32 to vector<128x128xf32>
    %174 = arith.mulf %173, %172 : vector<128x128xf32>
    %175 = arith.maximumf %172, %174 : vector<128x128xf32>
    %176 = arith.truncf %175 : vector<128x128xf32> to vector<128x128xbf16>
    %c16 = arith.constant 16 : index
    %c0_113 = arith.constant 0 : index
    %c0_114 = arith.constant 0 : index
    %177 = vector.load %arg2[%c16, %c0_113, %c0_114] : memref<20x256x256xbf16, #tpu.memory_space<vmem>>, vector<1x128x128xbf16>
    %178 = vector.shape_cast %177 : vector<1x128x128xbf16> to vector<128x128xbf16>
    %c16_115 = arith.constant 16 : index
    %c0_116 = arith.constant 0 : index
    %c0_117 = arith.constant 0 : index
    %179 = vector.load %arg3[%c16_115, %c0_116, %c0_117] : memref<20x1x256xf32, #tpu.memory_space<vmem>>, vector<1x1x128xf32>
    %180 = vector.shape_cast %179 : vector<1x1x128xf32> to vector<1x128xf32>
    %cst_118 = arith.constant dense<0.000000e+00> : vector<128x128xf32>
    %181 = tpu.matmul %176, %178, %cst_118 {dimension_numbers = #tpu.dot_dimension_numbers<[1], [0], [0], [1], [0, 0, 1, 1], [], []>} : vector<128x128xbf16>, vector<128x128xbf16>, vector<128x128xf32> -> vector<128x128xf32>
    %182 = vector.broadcast %180 : vector<1x128xf32> to vector<128x128xf32>
    %183 = arith.addf %181, %182 : vector<128x128xf32>
    %cst_119 = arith.constant 1.000000e-01 : f32
    %184 = vector.broadcast %cst_119 : f32 to vector<128x128xf32>
    %185 = arith.mulf %184, %183 : vector<128x128xf32>
    %186 = arith.maximumf %183, %185 : vector<128x128xf32>
    %187 = arith.truncf %186 : vector<128x128xf32> to vector<128x128xbf16>
    %c17 = arith.constant 17 : index
    %c0_120 = arith.constant 0 : index
    %c0_121 = arith.constant 0 : index
    %188 = vector.load %arg2[%c17, %c0_120, %c0_121] : memref<20x256x256xbf16, #tpu.memory_space<vmem>>, vector<1x128x128xbf16>
    %189 = vector.shape_cast %188 : vector<1x128x128xbf16> to vector<128x128xbf16>
    %c17_122 = arith.constant 17 : index
    %c0_123 = arith.constant 0 : index
    %c0_124 = arith.constant 0 : index
    %190 = vector.load %arg3[%c17_122, %c0_123, %c0_124] : memref<20x1x256xf32, #tpu.memory_space<vmem>>, vector<1x1x128xf32>
    %191 = vector.shape_cast %190 : vector<1x1x128xf32> to vector<1x128xf32>
    %cst_125 = arith.constant dense<0.000000e+00> : vector<128x128xf32>
    %192 = tpu.matmul %187, %189, %cst_125 {dimension_numbers = #tpu.dot_dimension_numbers<[1], [0], [0], [1], [0, 0, 1, 1], [], []>} : vector<128x128xbf16>, vector<128x128xbf16>, vector<128x128xf32> -> vector<128x128xf32>
    %193 = vector.broadcast %191 : vector<1x128xf32> to vector<128x128xf32>
    %194 = arith.addf %192, %193 : vector<128x128xf32>
    %cst_126 = arith.constant 1.000000e-01 : f32
    %195 = vector.broadcast %cst_126 : f32 to vector<128x128xf32>
    %196 = arith.mulf %195, %194 : vector<128x128xf32>
    %197 = arith.maximumf %194, %196 : vector<128x128xf32>
    %198 = arith.truncf %197 : vector<128x128xf32> to vector<128x128xbf16>
    %c18 = arith.constant 18 : index
    %c0_127 = arith.constant 0 : index
    %c0_128 = arith.constant 0 : index
    %199 = vector.load %arg2[%c18, %c0_127, %c0_128] : memref<20x256x256xbf16, #tpu.memory_space<vmem>>, vector<1x128x128xbf16>
    %200 = vector.shape_cast %199 : vector<1x128x128xbf16> to vector<128x128xbf16>
    %c18_129 = arith.constant 18 : index
    %c0_130 = arith.constant 0 : index
    %c0_131 = arith.constant 0 : index
    %201 = vector.load %arg3[%c18_129, %c0_130, %c0_131] : memref<20x1x256xf32, #tpu.memory_space<vmem>>, vector<1x1x128xf32>
    %202 = vector.shape_cast %201 : vector<1x1x128xf32> to vector<1x128xf32>
    %cst_132 = arith.constant dense<0.000000e+00> : vector<128x128xf32>
    %203 = tpu.matmul %198, %200, %cst_132 {dimension_numbers = #tpu.dot_dimension_numbers<[1], [0], [0], [1], [0, 0, 1, 1], [], []>} : vector<128x128xbf16>, vector<128x128xbf16>, vector<128x128xf32> -> vector<128x128xf32>
    %204 = vector.broadcast %202 : vector<1x128xf32> to vector<128x128xf32>
    %205 = arith.addf %203, %204 : vector<128x128xf32>
    %cst_133 = arith.constant 1.000000e-01 : f32
    %206 = vector.broadcast %cst_133 : f32 to vector<128x128xf32>
    %207 = arith.mulf %206, %205 : vector<128x128xf32>
    %208 = arith.maximumf %205, %207 : vector<128x128xf32>
    %209 = arith.truncf %208 : vector<128x128xf32> to vector<128x128xbf16>
    %c19 = arith.constant 19 : index
    %c0_134 = arith.constant 0 : index
    %c0_135 = arith.constant 0 : index
    %210 = vector.load %arg2[%c19, %c0_134, %c0_135] : memref<20x256x256xbf16, #tpu.memory_space<vmem>>, vector<1x128x128xbf16>
    %211 = vector.shape_cast %210 : vector<1x128x128xbf16> to vector<128x128xbf16>
    %c19_136 = arith.constant 19 : index
    %c0_137 = arith.constant 0 : index
    %c0_138 = arith.constant 0 : index
    %212 = vector.load %arg3[%c19_136, %c0_137, %c0_138] : memref<20x1x256xf32, #tpu.memory_space<vmem>>, vector<1x1x128xf32>
    %213 = vector.shape_cast %212 : vector<1x1x128xf32> to vector<1x128xf32>
    %cst_139 = arith.constant dense<0.000000e+00> : vector<128x128xf32>
    %214 = tpu.matmul %209, %211, %cst_139 {dimension_numbers = #tpu.dot_dimension_numbers<[1], [0], [0], [1], [0, 0, 1, 1], [], []>} : vector<128x128xbf16>, vector<128x128xbf16>, vector<128x128xf32> -> vector<128x128xf32>
    %215 = vector.broadcast %213 : vector<1x128xf32> to vector<128x128xf32>
    %216 = arith.addf %214, %215 : vector<128x128xf32>
    %217 = tpu.iota {dimensions = array<i32: 1>} : vector<128x128xi32>
    %218 = arith.extf %0 : vector<128x128xbf16> to vector<128x128xf32>
    %c3_i32 = arith.constant 3 : i32
    %219 = vector.broadcast %c3_i32 : i32 to vector<128x128xi32>
    %220 = arith.cmpi slt, %217, %219 : vector<128x128xi32>
    %cst_140 = arith.constant 0.00999999977 : f32
    %221 = vector.broadcast %cst_140 : f32 to vector<128x128xf32>
    %222 = arith.mulf %221, %216 : vector<128x128xf32>
    %223 = arith.addf %222, %218 : vector<128x128xf32>
    %224 = arith.select %220, %223, %216 : vector<128x128xi1>, vector<128x128xf32>
    %c64_i32 = arith.constant 64 : i32
    %225 = vector.broadcast %c64_i32 : i32 to vector<128x128xi32>
    %226 = arith.cmpi sge, %217, %225 : vector<128x128xi32>
    %c67_i32 = arith.constant 67 : i32
    %227 = vector.broadcast %c67_i32 : i32 to vector<128x128xi32>
    %228 = arith.cmpi slt, %217, %227 : vector<128x128xi32>
    %229 = arith.andi %226, %228 : vector<128x128xi1>
    %cst_141 = arith.constant 6.000000e+00 : f32
    %cst_142 = arith.constant 0.000000e+00 : f32
    %230 = vector.broadcast %cst_141 : f32 to vector<128x128xf32>
    %231 = vector.broadcast %cst_142 : f32 to vector<128x128xf32>
    %232 = arith.select %229, %230, %231 : vector<128x128xi1>, vector<128x128xf32>
    %233 = arith.subf %224, %232 : vector<128x128xf32>
    %c0_143 = arith.constant 0 : index
    %c0_144 = arith.constant 0 : index
    %234 = vector.load %arg4[%c0_143, %c0_144] : memref<128x128xf32, #tpu.memory_space<vmem>>, vector<128x128xf32>
    tpu.vector_store %arg4[%c0_143, %c0_144], %233 {strides = array<i32>} : memref<128x128xf32, #tpu.memory_space<vmem>>, vector<128x128xf32>,
    return
  }
  func.func @transform_0(%arg0: i32) -> (i32, i32) {
    %c0_i32 = arith.constant 0 : i32
    %c0_i32_0 = arith.constant 0 : i32
    return %arg0, %c0_i32 : i32, i32
  }
  func.func @transform_1(%arg0: i32) -> (i32, i32, i32) {
    %c0_i32 = arith.constant 0 : i32
    %c0_i32_0 = arith.constant 0 : i32
    %c0_i32_1 = arith.constant 0 : i32
    %c0_i32_2 = arith.constant 0 : i32
    return %c0_i32, %c0_i32_0, %c0_i32_1 : i32, i32, i32
  }
  func.func @transform_2(%arg0: i32) -> (i32, i32, i32) {
    %c0_i32 = arith.constant 0 : i32
    %c0_i32_0 = arith.constant 0 : i32
    %c0_i32_1 = arith.constant 0 : i32
    %c0_i32_2 = arith.constant 0 : i32
    return %c0_i32, %c0_i32_0, %c0_i32_1 : i32, i32, i32
  }
  func.func @transform_3(%arg0: i32) -> (i32, i32) {
    %c0_i32 = arith.constant 0 : i32
    %c0_i32_0 = arith.constant 0 : i32
    return %arg0, %c0_i32 : i32, i32
  }
}

</mosaic_0001>

<llo_original>
// kernel: tpu_custom_call.1
$region0: #{tpu_custom_call.1}
  #allocation0 [shape = 'u32[]', space=smem, size = 0x4, offset = 0x4, fixed_abs, tag = 'smem constant byte address 0x4 - core index']
  #allocation1 [shape = 'u32[144,128]{1,0:T(1,128)}', space=vmem, size = 0x12000, scoped, tag = 'internal scratch']
  %s0 = inlined_call_operand.hbm [shape: bf16[128,128], index: 0, kind: input, shape index: {}]
  %s1 = inlined_call_operand.hbm [shape: bf16[20,256,256], index: 1, kind: input, shape index: {}]
  %s2 = inlined_call_operand.hbm [shape: f32[20,1,256], index: 2, kind: input, shape index: {}]
  %s3 = inlined_call_operand.hbm [shape: f32[128,128], index: 3, kind: output, shape index: {}]
  %s4 = sld [smem:[#allocation0]]
  $region34: #{tpu_custom_call.1} parent=0
    _
  %s6 = ssub.s32 1, %s4
  %s7 = scalar_select 0, %s6, %s4
  $region1: #{tpu_custom_call.1} parent=0
    #allocation2 [shape = 'u8[32768]{0}', space=vmem, size = 0x8000, scoped, tag = 'input window, operand 0, single buffered']
    #allocation3 [shape = 's32[1]{0}', space=sflag, size = 0x4, scoped, tag = 'scoped memory for tpu_custom_call.1']
    #allocation4 [shape = 's32[1]{0}', space=sflag, size = 0x4, scoped, tag = 'scoped memory for tpu_custom_call.1']
    #allocation5 [shape = 'u8[2621440]{0}', space=vmem, size = 0x280000, scoped, tag = 'input window, operand 1, single buffered']
    #allocation6 [shape = 's32[1]{0}', space=sflag, size = 0x4, scoped, tag = 'scoped memory for tpu_custom_call.1']
    #allocation7 [shape = 'u8[20480]{0}', space=vmem, size = 0x5000, scoped, tag = 'input window, operand 2, single buffered']
    #allocation8 [shape = 'u8[65536]{0}', space=vmem, size = 0x10000, scoped, tag = 'output window, operand 0, single buffered']
    %8 = vsyncpa [#allocation3], 0
    %9 = vsyncpa [#allocation6], 0
    %10 = vsyncpa [#allocation4], 0
    // Predicated region
    $region2: #{tpu_custom_call.1} parent=1 // pred_check
      _
    $region3: #{tpu_custom_call.1} parent=1 // pred_check_branch
      %12 = sbr.rel (0) target = $region5
    $region4: #{tpu_custom_call.1} parent=1 // pred_region
      %s14 = ssub.s32 1024, 1024
      %15 = vsyncadd [#allocation3], %s14
      %s16 = sshll.u32 [#allocation2], 4
      %s17 = int_to_ptr.vmem [resolvable:$true] %s16
      %22 = dma.hbm_to_vmem [thread:$0]  %s0, 1024, %s17, [#allocation3], 64, 64, 4
    $region5: #{tpu_custom_call.1} parent=1 // pred_fallthru
      _
    // Predicated region
    $region6: #{tpu_custom_call.1} parent=1 // pred_check
      _
    $region7: #{tpu_custom_call.1} parent=1 // pred_check_branch
      %24 = sbr.rel (0) target = $region9
    $region8: #{tpu_custom_call.1} parent=1 // pred_region
      %s26 = ssub.s32 81920, 81920
      %27 = vsyncadd [#allocation6], %s26
      %s28 = sshll.u32 [#allocation5], 4
      %s29 = int_to_ptr.vmem [resolvable:$true] %s28
      %34 = dma.hbm_to_vmem [thread:$0]  %s1, 81920, %s29, [#allocation6], 128, 128, 8
    $region9: #{tpu_custom_call.1} parent=1 // pred_fallthru
      _
    // Predicated region
    $region10: #{tpu_custom_call.1} parent=1 // pred_check
      _
    $region11: #{tpu_custom_call.1} parent=1 // pred_check_branch
      %36 = sbr.rel (0) target = $region13
    $region12: #{tpu_custom_call.1} parent=1 // pred_region
      %s38 = ssub.s32 640, 640
      %39 = vsyncadd [#allocation6], %s38
      %s40 = sshll.u32 [#allocation7], 4
      %s41 = int_to_ptr.vmem [resolvable:$true] %s40
      %46 = dma.hbm_to_vmem [thread:$0]  %s2, 640, %s41, [#allocation6], 32, 32, 2
    $region13: #{tpu_custom_call.1} parent=1 // pred_fallthru
      _
    // Predicated region
    $region14: #{tpu_custom_call.1} parent=1 // pred_check
      _
    $region15: #{tpu_custom_call.1} parent=1 // pred_check_branch
      %48 = sbr.rel (0) target = $region17
    $region16: #{tpu_custom_call.1} parent=1 // pred_region
      %49 = dma.done [#allocation3], 1024
    $region17: #{tpu_custom_call.1} parent=1 // pred_fallthru
      _
    // Predicated region
    $region18: #{tpu_custom_call.1} parent=1 // pred_check
      _
    $region19: #{tpu_custom_call.1} parent=1 // pred_check_branch
      %51 = sbr.rel (0) target = $region21
    $region20: #{tpu_custom_call.1} parent=1 // pred_region
      %52 = dma.done [#allocation6], 81920
    $region21: #{tpu_custom_call.1} parent=1 // pred_fallthru
      _
    // Predicated region
    $region22: #{tpu_custom_call.1} parent=1 // pred_check
      _
    $region23: #{tpu_custom_call.1} parent=1 // pred_check_branch
      %54 = sbr.rel (0) target = $region25
    $region24: #{tpu_custom_call.1} parent=1 // pred_region
      %55 = dma.done [#allocation6], 640
    $region25: #{tpu_custom_call.1} parent=1 // pred_fallthru
      _
    %v57 = vld [vmem:[#allocation2] sm:$0xf]
    %v58 = vld [vmem:[#allocation2 + $0x4] sm:$0xf]
    %v59 = vld [vmem:[#allocation2 + $0x8] sm:$0xf]
    %v60 = vld [vmem:[#allocation2 + $0xc] sm:$0xf]
    %v61 = vld [vmem:[#allocation2 + $0x10] sm:$0xf]
    %v62 = vld [vmem:[#allocation2 + $0x14] sm:$0xf]
    %v63 = vld [vmem:[#allocation2 + $0x18] sm:$0xf]
    %v64 = vld [vmem:[#allocation2 + $0x1c] sm:$0xf]
    %v65 = vld [vmem:[#allocation2 + $0x20] sm:$0xf]
    %v66 = vld [vmem:[#allocation2 + $0x24] sm:$0xf]
    %v67 = vld [vmem:[#allocation2 + $0x28] sm:$0xf]
    %v68 = vld [vmem:[#allocation2 + $0x2c] sm:$0xf]
    %v69 = vld [vmem:[#allocation2 + $0x30] sm:$0xf]
    %v70 = vld [vmem:[#allocation2 + $0x34] sm:$0xf]
    %v71 = vld [vmem:[#allocation2 + $0x38] sm:$0xf]
    %v72 = vld [vmem:[#allocation2 + $0x3c] sm:$0xf]
    %v73 = vld [vmem:[#allocation5] sm:$0xf]
    %v74 = vld [vmem:[#allocation5 + $0x8] sm:$0xf]
    %v75 = vld [vmem:[#allocation5 + $0x10] sm:$0xf]
    %v76 = vld [vmem:[#allocation5 + $0x18] sm:$0xf]
    %v77 = vld [vmem:[#allocation5 + $0x20] sm:$0xf]
    %v78 = vld [vmem:[#allocation5 + $0x28] sm:$0xf]
    %v79 = vld [vmem:[#allocation5 + $0x30] sm:$0xf]
    %v80 = vld [vmem:[#allocation5 + $0x38] sm:$0xf]
    %v81 = vld [vmem:[#allocation5 + $0x40] sm:$0xf]
    %v82 = vld [vmem:[#allocation5 + $0x48] sm:$0xf]
    %v83 = vld [vmem:[#allocation5 + $0x50] sm:$0xf]
    %v84 = vld [vmem:[#allocation5 + $0x58] sm:$0xf]
    %v85 = vld [vmem:[#allocation5 + $0x60] sm:$0xf]
    %v86 = vld [vmem:[#allocation5 + $0x68] sm:$0xf]
    %v87 = vld [vmem:[#allocation5 + $0x70] sm:$0xf]
    %v88 = vld [vmem:[#allocation5 + $0x78] sm:$0xf]
    %v89 = vld [vmem:[#allocation7] sm:$0x1]
    %v91 = vlaneseq
    %v92 = vshrl.u32 %v91, 7
    %v93 = vsub.s32 0, %v92
    %v94 = vrot.slane %v89, %v93
    %v112 = vunpack.c.l.b16 %v57
    %v113 = vunpack.c.l.b16 %v58
    %v114 = vunpack.c.l.b16 %v59
    %v115 = vunpack.c.l.b16 %v60
    %v116 = vunpack.c.l.b16 %v61
    %v117 = vunpack.c.l.b16 %v62
    %v118 = vunpack.c.l.b16 %v63
    %v119 = vunpack.c.l.b16 %v64
    %v120 = vunpack.c.l.b16 %v65
    %v121 = vunpack.c.l.b16 %v66
    %v122 = vunpack.c.l.b16 %v67
    %v123 = vunpack.c.l.b16 %v68
    %v124 = vunpack.c.l.b16 %v69
    %v125 = vunpack.c.l.b16 %v70
    %v126 = vunpack.c.l.b16 %v71
    %v127 = vunpack.c.l.b16 %v72
    %v128 = vpack.c.b16 %v113, %v112
    %v129 = vpack.c.b16 %v115, %v114
    %v130 = vpack.c.b16 %v117, %v116
    %v131 = vpack.c.b16 %v119, %v118
    %v132 = vpack.c.b16 %v121, %v120
    %v133 = vpack.c.b16 %v123, %v122
    %v134 = vpack.c.b16 %v125, %v124
    %v135 = vpack.c.b16 %v127, %v126
    %v160 = vunpack.c.l.b16 %v73
    %v161 = vunpack.c.l.b16 %v74
    %v162 = vunpack.c.l.b16 %v75
    %v163 = vunpack.c.l.b16 %v76
    %v164 = vunpack.c.l.b16 %v77
    %v165 = vunpack.c.l.b16 %v78
    %v166 = vunpack.c.l.b16 %v79
    %v167 = vunpack.c.l.b16 %v80
    %v168 = vunpack.c.l.b16 %v81
    %v169 = vunpack.c.l.b16 %v82
    %v170 = vunpack.c.l.b16 %v83
    %v171 = vunpack.c.l.b16 %v84
    %v172 = vunpack.c.l.b16 %v85
    %v173 = vunpack.c.l.b16 %v86
    %v174 = vunpack.c.l.b16 %v87
    %v175 = vunpack.c.l.b16 %v88
    %v176 = vpack.c.b16 %v161, %v160
    %v177 = vpack.c.b16 %v163, %v162
    %v178 = vpack.c.b16 %v165, %v164
    %v179 = vpack.c.b16 %v167, %v166
    %v180 = vpack.c.b16 %v169, %v168
    %v181 = vpack.c.b16 %v171, %v170
    %v182 = vpack.c.b16 %v173, %v172
    %v183 = vpack.c.b16 %v175, %v174
    %192 = vmatprep.subr.bf16.mxu0 0
    %193 = vmatpush1.bf16.msra.mxu0 %v176
    %194 = vmatprep.subr.bf16.mxu0 0
    %195 = vmatpush1.bf16.msra.mxu0 %v177
    %196 = vmatprep.subr.bf16.mxu0 0
    %197 = vmatpush1.bf16.msra.mxu0 %v178
    %198 = vmatprep.subr.bf16.mxu0 0
    %199 = vmatpush1.bf16.msra.mxu0 %v179
    %200 = vmatprep.subr.bf16.mxu0 0
    %201 = vmatpush1.bf16.msra.mxu0 %v180
    %202 = vmatprep.subr.bf16.mxu0 0
    %203 = vmatpush1.bf16.msra.mxu0 %v181
    %204 = vmatprep.subr.bf16.mxu0 0
    %205 = vmatpush1.bf16.msra.mxu0 %v182
    %206 = vmatprep.subr.bf16.mxu0 0
    %207 = vmatpush1.bf16.msra.mxu0 %v183
    %208 = vmatprep.subr.bf16.mxu0 0
    %209 = vmatpush1.bf16.msra.mxu0 0
    %210 = vmatprep.subr.bf16.mxu0 0
    %211 = vmatpush1.bf16.msra.mxu0 0
    %212 = vmatprep.subr.bf16.mxu0 0
    %213 = vmatpush1.bf16.msra.mxu0 0
    %214 = vmatprep.subr.bf16.mxu0 0
    %215 = vmatpush1.bf16.msra.mxu0 0
    %216 = vmatprep.subr.bf16.mxu0 0
    %217 = vmatpush1.bf16.msra.mxu0 0
    %218 = vmatprep.subr.bf16.mxu0 0
    %219 = vmatpush1.bf16.msra.mxu0 0
    %220 = vmatprep.subr.bf16.mxu0 0
    %221 = vmatpush1.bf16.msra.mxu0 0
    %222 = vmatprep.subr.bf16.mxu0 0
    %223 = vmatpush1.bf16.msra.mxu0 0
    %224 = vmatprep.mubr.bf16.mxu0 0
    %225 = vmatmul.mubr.bf16.gmra.mrb[0].mxu0 %v128
    %v226 = vpop.f32.mrb[0].mxu0
    %v227 = vadd.f32 %v94, %v226
    %v228 = vpop.f32.mrb[0].mxu0
    %v229 = vpop.f32.mrb[0].mxu0
    %v230 = vadd.f32 %v94, %v229
    %v231 = vpop.f32.mrb[0].mxu0
    %232 = vmatprep.mubr.bf16.mxu0 0
    %233 = vmatmul.mubr.bf16.gmra.mrb[0].mxu0 %v129
    %v234 = vpop.f32.mrb[0].mxu0
    %v235 = vadd.f32 %v94, %v234
    %v236 = vpop.f32.mrb[0].mxu0
    %v237 = vpop.f32.mrb[0].mxu0
    %v238 = vadd.f32 %v94, %v237
    %v239 = vpop.f32.mrb[0].mxu0
    %240 = vmatprep.mubr.bf16.mxu0 0
    %241 = vmatmul.mubr.bf16.gmra.mrb[0].mxu0 %v130
    %v242 = vpop.f32.mrb[0].mxu0
    %v243 = vadd.f32 %v94, %v242
    %v244 = vpop.f32.mrb[0].mxu0
    %v245 = vpop.f32.mrb[0].mxu0
    %v246 = vadd.f32 %v94, %v245
    %v247 = vpop.f32.mrb[0].mxu0
    %248 = vmatprep.mubr.bf16.mxu0 0
    %249 = vmatmul.mubr.bf16.gmra.mrb[0].mxu0 %v131
    %v250 = vpop.f32.mrb[0].mxu0
    %v251 = vadd.f32 %v94, %v250
    %v252 = vpop.f32.mrb[0].mxu0
    %v253 = vpop.f32.mrb[0].mxu0
    %v254 = vadd.f32 %v94, %v253
    %v255 = vpop.f32.mrb[0].mxu0
    %256 = vmatprep.mubr.bf16.mxu0 0
    %257 = vmatmul.mubr.bf16.gmra.mrb[0].mxu0 %v132
    %v258 = vpop.f32.mrb[0].mxu0
    %v259 = vadd.f32 %v94, %v258
    %v260 = vpop.f32.mrb[0].mxu0
    %v261 = vpop.f32.mrb[0].mxu0
    %v262 = vadd.f32 %v94, %v261
    %v263 = vpop.f32.mrb[0].mxu0
    %264 = vmatprep.mubr.bf16.mxu0 0
    %265 = vmatmul.mubr.bf16.gmra.mrb[0].mxu0 %v133
    %v266 = vpop.f32.mrb[0].mxu0
    %v267 = vadd.f32 %v94, %v266
    %v268 = vpop.f32.mrb[0].mxu0
    %v269 = vpop.f32.mrb[0].mxu0
    %v270 = vadd.f32 %v94, %v269
    %v271 = vpop.f32.mrb[0].mxu0
    %272 = vmatprep.mubr.bf16.mxu0 0
    %273 = vmatmul.mubr.bf16.gmra.mrb[0].mxu0 %v134
    %v274 = vpop.f32.mrb[0].mxu0
    %v275 = vadd.f32 %v94, %v274
    %v276 = vpop.f32.mrb[0].mxu0
    %v277 = vpop.f32.mrb[0].mxu0
    %v278 = vadd.f32 %v94, %v277
    %v279 = vpop.f32.mrb[0].mxu0
    %280 = vmatprep.mubr.bf16.mxu0 0
    %281 = vmatmul.mubr.bf16.gmra.mrb[0].mxu0 %v135
    %v282 = vpop.f32.mrb[0].mxu0
    %v283 = vadd.f32 %v94, %v282
    %v284 = vpop.f32.mrb[0].mxu0
    %v285 = vpop.f32.mrb[0].mxu0
    %v286 = vadd.f32 %v94, %v285
    %v287 = vpop.f32.mrb[0].mxu0
    %288 = vdwg.mxu0
    %v289 = vmul.f32 %v227, 0.1
    %v290 = vmul.f32 %v230, 0.1
    %v291 = vmul.f32 %v235, 0.1
    %v292 = vmul.f32 %v238, 0.1
    %v293 = vmul.f32 %v243, 0.1
    %v294 = vmul.f32 %v246, 0.1
    %v295 = vmul.f32 %v251, 0.1
    %v296 = vmul.f32 %v254, 0.1
    %v297 = vmul.f32 %v259, 0.1
    %v298 = vmul.f32 %v262, 0.1
    %v299 = vmul.f32 %v267, 0.1
    %v300 = vmul.f32 %v270, 0.1
    %v301 = vmul.f32 %v275, 0.1
    %v302 = vmul.f32 %v278, 0.1
    %v303 = vmul.f32 %v283, 0.1
    %v304 = vmul.f32 %v286, 0.1
    %v305 = vmax.f32 %v227, %v289
    %v306 = vmax.f32 %v230, %v290
    %v307 = vmax.f32 %v235, %v291
    %v308 = vmax.f32 %v238, %v292
    %v309 = vmax.f32 %v243, %v293
    %v310 = vmax.f32 %v246, %v294
    %v311 = vmax.f32 %v251, %v295
    %v312 = vmax.f32 %v254, %v296
    %v313 = vmax.f32 %v259, %v297
    %v314 = vmax.f32 %v262, %v298
    %v315 = vmax.f32 %v267, %v299
    %v316 = vmax.f32 %v270, %v300
    %v317 = vmax.f32 %v275, %v301
    %v318 = vmax.f32 %v278, %v302
    %v319 = vmax.f32 %v283, %v303
    %v320 = vmax.f32 %v286, %v304
    %v321 = vpack.c.bf16 %v306, %v305
    %v322 = vpack.c.bf16 %v308, %v307
    %v323 = vpack.c.bf16 %v310, %v309
    %v324 = vpack.c.bf16 %v312, %v311
    %v325 = vpack.c.bf16 %v314, %v313
    %v326 = vpack.c.bf16 %v316, %v315
    %v327 = vpack.c.bf16 %v318, %v317
    %v328 = vpack.c.bf16 %v320, %v319
    %s329 = scalar_lea.vmem [#allocation5], 256
    %v330 = vld [vmem:[%s329] sm:$0xf]
    %v331 = vld [vmem:[%s329 + $0x8] sm:$0xf]
    %v332 = vld [vmem:[%s329 + $0x10] sm:$0xf]
    %v333 = vld [vmem:[%s329 + $0x18] sm:$0xf]
    %v334 = vld [vmem:[%s329 + $0x20] sm:$0xf]
    %v335 = vld [vmem:[%s329 + $0x28] sm:$0xf]
    %v336 = vld [vmem:[%s329 + $0x30] sm:$0xf]
    %v337 = vld [vmem:[%s329 + $0x38] sm:$0xf]
    %v338 = vld [vmem:[%s329 + $0x40] sm:$0xf]
    %v339 = vld [vmem:[%s329 + $0x48] sm:$0xf]
    %v340 = vld [vmem:[%s329 + $0x50] sm:$0xf]
    %v341 = vld [vmem:[%s329 + $0x58] sm:$0xf]
    %v342 = vld [vmem:[%s329 + $0x60] sm:$0xf]
    %v343 = vld [vmem:[%s329 + $0x68] sm:$0xf]
    %v344 = vld [vmem:[%s329 + $0x70] sm:$0xf]
    %v345 = vld [vmem:[%s329 + $0x78] sm:$0xf]
    %s346 = scalar_lea.vmem [#allocation7], 2
    %v347 = vld [vmem:[%s346] sm:$0x1]
    %v349 = vlaneseq
    %v350 = vshrl.u32 %v349, 7
    %v351 = vsub.s32 0, %v350
    %v352 = vrot.slane %v347, %v351
    %v370 = vunpack.c.l.b16 %v330
    %v371 = vunpack.c.l.b16 %v331
    %v372 = vunpack.c.l.b16 %v332
    %v373 = vunpack.c.l.b16 %v333
    %v374 = vunpack.c.l.b16 %v334
    %v375 = vunpack.c.l.b16 %v335
    %v376 = vunpack.c.l.b16 %v336
    %v377 = vunpack.c.l.b16 %v337
    %v378 = vunpack.c.l.b16 %v338
    %v379 = vunpack.c.l.b16 %v339
    %v380 = vunpack.c.l.b16 %v340
    %v381 = vunpack.c.l.b16 %v341
    %v382 = vunpack.c.l.b16 %v342
    %v383 = vunpack.c.l.b16 %v343
    %v384 = vunpack.c.l.b16 %v344
    %v385 = vunpack.c.l.b16 %v345
    %v386 = vpack.c.b16 %v371, %v370
    %v387 = vpack.c.b16 %v373, %v372
    %v388 = vpack.c.b16 %v375, %v374
    %v389 = vpack.c.b16 %v377, %v376
    %v390 = vpack.c.b16 %v379, %v378
    %v391 = vpack.c.b16 %v381, %v380
    %v392 = vpack.c.b16 %v383, %v382
    %v393 = vpack.c.b16 %v385, %v384
    %402 = vmatprep.subr.bf16.mxu0 0
    %403 = vmatpush1.bf16.msra.mxu0 %v386
    %404 = vmatprep.subr.bf16.mxu0 0
    %405 = vmatpush1.bf16.msra.mxu0 %v387
    %406 = vmatprep.subr.bf16.mxu0 0
    %407 = vmatpush1.bf16.msra.mxu0 %v388
    %408 = vmatprep.subr.bf16.mxu0 0
    %409 = vmatpush1.bf16.msra.mxu0 %v389
    %410 = vmatprep.subr.bf16.mxu0 0
    %411 = vmatpush1.bf16.msra.mxu0 %v390
    %412 = vmatprep.subr.bf16.mxu0 0
    %413 = vmatpush1.bf16.msra.mxu0 %v391
    %414 = vmatprep.subr.bf16.mxu0 0
    %415 = vmatpush1.bf16.msra.mxu0 %v392
    %416 = vmatprep.subr.bf16.mxu0 0
    %417 = vmatpush1.bf16.msra.mxu0 %v393
    %418 = vmatprep.subr.bf16.mxu0 0
    %419 = vmatpush1.bf16.msra.mxu0 0
    %420 = vmatprep.subr.bf16.mxu0 0
    %421 = vmatpush1.bf16.msra.mxu0 0
    %422 = vmatprep.subr.bf16.mxu0 0
    %423 = vmatpush1.bf16.msra.mxu0 0
    %424 = vmatprep.subr.bf16.mxu0 0
    %425 = vmatpush1.bf16.msra.mxu0 0
    %426 = vmatprep.subr.bf16.mxu0 0
    %427 = vmatpush1.bf16.msra.mxu0 0
    %428 = vmatprep.subr.bf16.mxu0 0
    %429 = vmatpush1.bf16.msra.mxu0 0
    %430 = vmatprep.subr.bf16.mxu0 0
    %431 = vmatpush1.bf16.msra.mxu0 0
    %432 = vmatprep.subr.bf16.mxu0 0
    %433 = vmatpush1.bf16.msra.mxu0 0
    %434 = vmatprep.mubr.bf16.mxu0 0
    %435 = vmatmul.mubr.bf16.gmra.mrb[0].mxu0 %v321
    %v436 = vpop.f32.mrb[0].mxu0
    %v437 = vadd.f32 %v352, %v436
    %v438 = vpop.f32.mrb[0].mxu0
    %v439 = vpop.f32.mrb[0].mxu0
    %v440 = vadd.f32 %v352, %v439
    %v441 = vpop.f32.mrb[0].mxu0
    %442 = vmatprep.mubr.bf16.mxu0 0
    %443 = vmatmul.mubr.bf16.gmra.mrb[0].mxu0 %v322
    %v444 = vpop.f32.mrb[0].mxu0
    %v445 = vadd.f32 %v352, %v444
    %v446 = vpop.f32.mrb[0].mxu0
    %v447 = vpop.f32.mrb[0].mxu0
    %v448 = vadd.f32 %v352, %v447
    %v449 = vpop.f32.mrb[0].mxu0
    %450 = vmatprep.mubr.bf16.mxu0 0
    %451 = vmatmul.mubr.bf16.gmra.mrb[0].mxu0 %v323
    %v452 = vpop.f32.mrb[0].mxu0
    %v453 = vadd.f32 %v352, %v452
    %v454 = vpop.f32.mrb[0].mxu0
    %v455 = vpop.f32.mrb[0].mxu0
    %v456 = vadd.f32 %v352, %v455
    %v457 = vpop.f32.mrb[0].mxu0
    %458 = vmatprep.mubr.bf16.mxu0 0
    %459 = vmatmul.mubr.bf16.gmra.mrb[0].mxu0 %v324
    %v460 = vpop.f32.mrb[0].mxu0
    %v461 = vadd.f32 %v352, %v460
    %v462 = vpop.f32.mrb[0].mxu0
    %v463 = vpop.f32.mrb[0].mxu0
    %v464 = vadd.f32 %v352, %v463
    %v465 = vpop.f32.mrb[0].mxu0
    %466 = vmatprep.mubr.bf16.mxu0 0
    %467 = vmatmul.mubr.bf16.gmra.mrb[0].mxu0 %v325
    %v468 = vpop.f32.mrb[0].mxu0
    %v469 = vadd.f32 %v352, %v468
    %v470 = vpop.f32.mrb[0].mxu0
    %v471 = vpop.f32.mrb[0].mxu0
    %v472 = vadd.f32 %v352, %v471
    %v473 = vpop.f32.mrb[0].mxu0
    %474 = vmatprep.mubr.bf16.mxu0 0
    %475 = vmatmul.mubr.bf16.gmra.mrb[0].mxu0 %v326
    %v476 = vpop.f32.mrb[0].mxu0
    %v477 = vadd.f32 %v352, %v476
    %v478 = vpop.f32.mrb[0].mxu0
    %v479 = vpop.f32.mrb[0].mxu0
    %v480 = vadd.f32 %v352, %v479
    %v481 = vpop.f32.mrb[0].mxu0
    %482 = vmatprep.mubr.bf16.mxu0 0
    %483 = vmatmul.mubr.bf16.gmra.mrb[0].mxu0 %v327
    %v484 = vpop.f32.mrb[0].mxu0
    %v485 = vadd.f32 %v352, %v484
    %v486 = vpop.f32.mrb[0].mxu0
    %v487 = vpop.f32.mrb[0].mxu0
    %v488 = vadd.f32 %v352, %v487
    %v489 = vpop.f32.mrb[0].mxu0
    %490 = vmatprep.mubr.bf16.mxu0 0
    %491 = vmatmul.mubr.bf16.gmra.mrb[0].mxu0 %v328
    %v492 = vpop.f32.mrb[0].mxu0
    %v493 = vadd.f32 %v352, %v492
    %v494 = vpop.f32.mrb[0].mxu0
    %v495 = vpop.f32.mrb[0].mxu0
    %v496 = vadd.f32 %v352, %v495
    %v497 = vpop.f32.mrb[0].mxu0
    %498 = vdwg.mxu0
    %v499 = vmul.f32 %v437, 0.1
    %v500 = vmul.f32 %v440, 0.1
    %v501 = vmul.f32 %v445, 0.1
    %v502 = vmul.f32 %v448, 0.1
    %v503 = vmul.f32 %v453, 0.1
    %v504 = vmul.f32 %v456, 0.1
    %v505 = vmul.f32 %v461, 0.1
    %v506 = vmul.f32 %v464, 0.1
    %v507 = vmul.f32 %v469, 0.1
    %v508 = vmul.f32 %v472, 0.1
    %v509 = vmul.f32 %v477, 0.1
    %v510 = vmul.f32 %v480, 0.1
    %v511 = vmul.f32 %v485, 0.1
    %v512 = vmul.f32 %v488, 0.1
    %v513 = vmul.f32 %v493, 0.1
    %v514 = vmul.f32 %v496, 0.1
    %v515 = vmax.f32 %v437, %v499
    %v516 = vmax.f32 %v440, %v500
    %v517 = vmax.f32 %v445, %v501
    %v518 = vmax.f32 %v448, %v502
    %v519 = vmax.f32 %v453, %v503
    %v520 = vmax.f32 %v456, %v504
    %v521 = vmax.f32 %v461, %v505
    %v522 = vmax.f32 %v464, %v506
    %v523 = vmax.f32 %v469, %v507
    %v524 = vmax.f32 %v472, %v508
    %v525 = vmax.f32 %v477, %v509
    %v526 = vmax.f32 %v480, %v510
    %v527 = vmax.f32 %v485, %v511
    %v528 = vmax.f32 %v488, %v512
    %v529 = vmax.f32 %v493, %v513
    %v530 = vmax.f32 %v496, %v514
    %v531 = vpack.c.bf16 %v516, %v515
    %v532 = vpack.c.bf16 %v518, %v517
    %v533 = vpack.c.bf16 %v520, %v519
    %v534 = vpack.c.bf16 %v522, %v521
    %v535 = vpack.c.bf16 %v524, %v523
    %v536 = vpack.c.bf16 %v526, %v525
    %v537 = vpack.c.bf16 %v528, %v527
    %v538 = vpack.c.bf16 %v530, %v529
    %s539 = scalar_lea.vmem [#allocation5], 512
    %v540 = vld [vmem:[%s539] sm:$0xf]
    %v541 = vld [vmem:[%s539 + $0x8] sm:$0xf]
    %v542 = vld [vmem:[%s539 + $0x10] sm:$0xf]
    %v543 = vld [vmem:[%s539 + $0x18] sm:$0xf]
    %v544 = vld [vmem:[%s539 + $0x20] sm:$0xf]
    %v545 = vld [vmem:[%s539 + $0x28] sm:$0xf]
    %v546 = vld [vmem:[%s539 + $0x30] sm:$0xf]
    %v547 = vld [vmem:[%s539 + $0x38] sm:$0xf]
    %v548 = vld [vmem:[%s539 + $0x40] sm:$0xf]
    %v549 = vld [vmem:[%s539 + $0x48] sm:$0xf]
    %v550 = vld [vmem:[%s539 + $0x50] sm:$0xf]
    %v551 = vld [vmem:[%s539 + $0x58] sm:$0xf]
    %v552 = vld [vmem:[%s539 + $0x60] sm:$0xf]
    %v553 = vld [vmem:[%s539 + $0x68] sm:$0xf]
    %v554 = vld [vmem:[%s539 + $0x70] sm:$0xf]
    %v555 = vld [vmem:[%s539 + $0x78] sm:$0xf]
    %s556 = scalar_lea.vmem [#allocation7], 4
    %v557 = vld [vmem:[%s556] sm:$0x1]
    %v559 = vlaneseq
    %v560 = vshrl.u32 %v559, 7
    %v561 = vsub.s32 0, %v560
    %v562 = vrot.slane %v557, %v561
    %v580 = vunpack.c.l.b16 %v540
    %v581 = vunpack.c.l.b16 %v541
    %v582 = vunpack.c.l.b16 %v542
    %v583 = vunpack.c.l.b16 %v543
    %v584 = vunpack.c.l.b16 %v544
    %v585 = vunpack.c.l.b16 %v545
    %v586 = vunpack.c.l.b16 %v546
    %v587 = vunpack.c.l.b16 %v547
    %v588 = vunpack.c.l.b16 %v548
    %v589 = vunpack.c.l.b16 %v549
    %v590 = vunpack.c.l.b16 %v550
    %v591 = vunpack.c.l.b16 %v551
    %v592 = vunpack.c.l.b16 %v552
    %v593 = vunpack.c.l.b16 %v553
    %v594 = vunpack.c.l.b16 %v554
    %v595 = vunpack.c.l.b16 %v555
    %v596 = vpack.c.b16 %v581, %v580
    %v597 = vpack.c.b16 %v583, %v582
    %v598 = vpack.c.b16 %v585, %v584
    %v599 = vpack.c.b16 %v587, %v586
    %v600 = vpack.c.b16 %v589, %v588
    %v601 = vpack.c.b16 %v591, %v590
    %v602 = vpack.c.b16 %v593, %v592
    %v603 = vpack.c.b16 %v595, %v594
    %612 = vmatprep.subr.bf16.mxu0 0
    %613 = vmatpush1.bf16.msra.mxu0 %v596
    %614 = vmatprep.subr.bf16.mxu0 0
    %615 = vmatpush1.bf16.msra.mxu0 %v597
    %616 = vmatprep.subr.bf16.mxu0 0
    %617 = vmatpush1.bf16.msra.mxu0 %v598
    %618 = vmatprep.subr.bf16.mxu0 0
    %619 = vmatpush1.bf16.msra.mxu0 %v599
    %620 = vmatprep.subr.bf16.mxu0 0
    %621 = vmatpush1.bf16.msra.mxu0 %v600
    %622 = vmatprep.subr.bf16.mxu0 0
    %623 = vmatpush1.bf16.msra.mxu0 %v601
    %624 = vmatprep.subr.bf16.mxu0 0
    %625 = vmatpush1.bf16.msra.mxu0 %v602
    %626 = vmatprep.subr.bf16.mxu0 0
    %627 = vmatpush1.bf16.msra.mxu0 %v603
    %628 = vmatprep.subr.bf16.mxu0 0
    %629 = vmatpush1.bf16.msra.mxu0 0
    %630 = vmatprep.subr.bf16.mxu0 0
    %631 = vmatpush1.bf16.msra.mxu0 0
    %632 = vmatprep.subr.bf16.mxu0 0
    %633 = vmatpush1.bf16.msra.mxu0 0
    %634 = vmatprep.subr.bf16.mxu0 0
    %635 = vmatpush1.bf16.msra.mxu0 0
    %636 = vmatprep.subr.bf16.mxu0 0
    %637 = vmatpush1.bf16.msra.mxu0 0
    %638 = vmatprep.subr.bf16.mxu0 0
    %639 = vmatpush1.bf16.msra.mxu0 0
    %640 = vmatprep.subr.bf16.mxu0 0
    %641 = vmatpush1.bf16.msra.mxu0 0
    %642 = vmatprep.subr.bf16.mxu0 0
    %643 = vmatpush1.bf16.msra.mxu0 0
    %644 = vmatprep.mubr.bf16.mxu0 0
    %645 = vmatmul.mubr.bf16.gmra.mrb[0].mxu0 %v531
    %v646 = vpop.f32.mrb[0].mxu0
    %v647 = vadd.f32 %v562, %v646
    %v648 = vpop.f32.mrb[0].mxu0
    %v649 = vpop.f32.mrb[0].mxu0
    %v650 = vadd.f32 %v562, %v649
    %v651 = vpop.f32.mrb[0].mxu0
    %652 = vmatprep.mubr.bf16.mxu0 0
    %653 = vmatmul.mubr.bf16.gmra.mrb[0].mxu0 %v532
    %v654 = vpop.f32.mrb[0].mxu0
    %v655 = vadd.f32 %v562, %v654
    %v656 = vpop.f32.mrb[0].mxu0
    %v657 = vpop.f32.mrb[0].mxu0
    %v658 = vadd.f32 %v562, %v657
    %v659 = vpop.f32.mrb[0].mxu0
    %660 = vmatprep.mubr.bf16.mxu0 0
    %661 = vmatmul.mubr.bf16.gmra.mrb[0].mxu0 %v533
    %v662 = vpop.f32.mrb[0].mxu0
    %v663 = vadd.f32 %v562, %v662
    %v664 = vpop.f32.mrb[0].mxu0
    %v665 = vpop.f32.mrb[0].mxu0
    %v666 = vadd.f32 %v562, %v665
    %v667 = vpop.f32.mrb[0].mxu0
    %668 = vmatprep.mubr.bf16.mxu0 0
    %669 = vmatmul.mubr.bf16.gmra.mrb[0].mxu0 %v534
    %v670 = vpop.f32.mrb[0].mxu0
    %v671 = vadd.f32 %v562, %v670
    %v672 = vpop.f32.mrb[0].mxu0
    %v673 = vpop.f32.mrb[0].mxu0
    %v674 = vadd.f32 %v562, %v673
    %v675 = vpop.f32.mrb[0].mxu0
    %676 = vmatprep.mubr.bf16.mxu0 0
    %677 = vmatmul.mubr.bf16.gmra.mrb[0].mxu0 %v535
    %v678 = vpop.f32.mrb[0].mxu0
    %v679 = vadd.f32 %v562, %v678
    %v680 = vpop.f32.mrb[0].mxu0
    %v681 = vpop.f32.mrb[0].mxu0
    %v682 = vadd.f32 %v562, %v681
    %v683 = vpop.f32.mrb[0].mxu0
    %684 = vmatprep.mubr.bf16.mxu0 0
    %685 = vmatmul.mubr.bf16.gmra.mrb[0].mxu0 %v536
    %v686 = vpop.f32.mrb[0].mxu0
    %v687 = vadd.f32 %v562, %v686
    %v688 = vpop.f32.mrb[0].mxu0
    %v689 = vpop.f32.mrb[0].mxu0
    %v690 = vadd.f32 %v562, %v689
    %v691 = vpop.f32.mrb[0].mxu0
    %692 = vmatprep.mubr.bf16.mxu0 0
    %693 = vmatmul.mubr.bf16.gmra.mrb[0].mxu0 %v537
    %v694 = vpop.f32.mrb[0].mxu0
    %v695 = vadd.f32 %v562, %v694
    %v696 = vpop.f32.mrb[0].mxu0
    %v697 = vpop.f32.mrb[0].mxu0
    %v698 = vadd.f32 %v562, %v697
    %v699 = vpop.f32.mrb[0].mxu0
    %700 = vmatprep.mubr.bf16.mxu0 0
    %701 = vmatmul.mubr.bf16.gmra.mrb[0].mxu0 %v538
    %v702 = vpop.f32.mrb[0].mxu0
    %v703 = vadd.f32 %v562, %v702
    %v704 = vpop.f32.mrb[0].mxu0
    %v705 = vpop.f32.mrb[0].mxu0
    %v706 = vadd.f32 %v562, %v705
    %v707 = vpop.f32.mrb[0].mxu0
    %708 = vdwg.mxu0
    %v709 = vmul.f32 %v647, 0.1
    %v710 = vmul.f32 %v650, 0.1
    %v711 = vmul.f32 %v655, 0.1
    %v712 = vmul.f32 %v658, 0.1
    %v713 = vmul.f32 %v663, 0.1
    %v714 = vmul.f32 %v666, 0.1
    %v715 = vmul.f32 %v671, 0.1
    %v716 = vmul.f32 %v674, 0.1
    %v717 = vmul.f32 %v679, 0.1
    %v718 = vmul.f32 %v682, 0.1
    %v719 = vmul.f32 %v687, 0.1
    %v720 = vmul.f32 %v690, 0.1
    %v721 = vmul.f32 %v695, 0.1
    %v722 = vmul.f32 %v698, 0.1
    %v723 = vmul.f32 %v703, 0.1
    %v724 = vmul.f32 %v706, 0.1
    %v725 = vmax.f32 %v647, %v709
    %v726 = vmax.f32 %v650, %v710
    %v727 = vmax.f32 %v655, %v711
    %v728 = vmax.f32 %v658, %v712
    %v729 = vmax.f32 %v663, %v713
    %v730 = vmax.f32 %v666, %v714
    %v731 = vmax.f32 %v671, %v715
    %v732 = vmax.f32 %v674, %v716
    %v733 = vmax.f32 %v679, %v717
    %v734 = vmax.f32 %v682, %v718
    %v735 = vmax.f32 %v687, %v719
    %v736 = vmax.f32 %v690, %v720
    %v737 = vmax.f32 %v695, %v721
    %v738 = vmax.f32 %v698, %v722
    %v739 = vmax.f32 %v703, %v723
    %v740 = vmax.f32 %v706, %v724
    %v741 = vpack.c.bf16 %v726, %v725
    %v742 = vpack.c.bf16 %v728, %v727
    %v743 = vpack.c.bf16 %v730, %v729
    %v744 = vpack.c.bf16 %v732, %v731
    %v745 = vpack.c.bf16 %v734, %v733
    %v746 = vpack.c.bf16 %v736, %v735
    %v747 = vpack.c.bf16 %v738, %v737
    %v748 = vpack.c.bf16 %v740, %v739
    %s749 = scalar_lea.vmem [#allocation5], 768
    %v750 = vld [vmem:[%s749] sm:$0xf]
    %v751 = vld [vmem:[%s749 + $0x8] sm:$0xf]
    %v752 = vld [vmem:[%s749 + $0x10] sm:$0xf]
    %v753 = vld [vmem:[%s749 + $0x18] sm:$0xf]
    %v754 = vld [vmem:[%s749 + $0x20] sm:$0xf]
    %v755 = vld [vmem:[%s749 + $0x28] sm:$0xf]
    %v756 = vld [vmem:[%s749 + $0x30] sm:$0xf]
    %v757 = vld [vmem:[%s749 + $0x38] sm:$0xf]
    %v758 = vld [vmem:[%s749 + $0x40] sm:$0xf]
    %v759 = vld [vmem:[%s749 + $0x48] sm:$0xf]
    %v760 = vld [vmem:[%s749 + $0x50] sm:$0xf]
    %v761 = vld [vmem:[%s749 + $0x58] sm:$0xf]
    %v762 = vld [vmem:[%s749 + $0x60] sm:$0xf]
    %v763 = vld [vmem:[%s749 + $0x68] sm:$0xf]
    %v764 = vld [vmem:[%s749 + $0x70] sm:$0xf]
    %v765 = vld [vmem:[%s749 + $0x78] sm:$0xf]
    %s766 = scalar_lea.vmem [#allocation7], 6
    %v767 = vld [vmem:[%s766] sm:$0x1]
    %v769 = vlaneseq
    %v770 = vshrl.u32 %v769, 7
    %v771 = vsub.s32 0, %v770
    %v772 = vrot.slane %v767, %v771
    %v790 = vunpack.c.l.b16 %v750
    %v791 = vunpack.c.l.b16 %v751
    %v792 = vunpack.c.l.b16 %v752
    %v793 = vunpack.c.l.b16 %v753
    %v794 = vunpack.c.l.b16 %v754
    %v795 = vunpack.c.l.b16 %v755
    %v796 = vunpack.c.l.b16 %v756
    %v797 = vunpack.c.l.b16 %v757
    %v798 = vunpack.c.l.b16 %v758
    %v799 = vunpack.c.l.b16 %v759
    %v800 = vunpack.c.l.b16 %v760
    %v801 = vunpack.c.l.b16 %v761
    %v802 = vunpack.c.l.b16 %v762
    %v803 = vunpack.c.l.b16 %v763
    %v804 = vunpack.c.l.b16 %v764
    %v805 = vunpack.c.l.b16 %v765
    %v806 = vpack.c.b16 %v791, %v790
    %v807 = vpack.c.b16 %v793, %v792
    %v808 = vpack.c.b16 %v795, %v794
    %v809 = vpack.c.b16 %v797, %v796
    %v810 = vpack.c.b16 %v799, %v798
    %v811 = vpack.c.b16 %v801, %v800
    %v812 = vpack.c.b16 %v803, %v802
    %v813 = vpack.c.b16 %v805, %v804
    %822 = vmatprep.subr.bf16.mxu0 0
    %823 = vmatpush1.bf16.msra.mxu0 %v806
    %824 = vmatprep.subr.bf16.mxu0 0
    %825 = vmatpush1.bf16.msra.mxu0 %v807
    %826 = vmatprep.subr.bf16.mxu0 0
    %827 = vmatpush1.bf16.msra.mxu0 %v808
    %828 = vmatprep.subr.bf16.mxu0 0
    %829 = vmatpush1.bf16.msra.mxu0 %v809
    %830 = vmatprep.subr.bf16.mxu0 0
    %831 = vmatpush1.bf16.msra.mxu0 %v810
    %832 = vmatprep.subr.bf16.mxu0 0
    %833 = vmatpush1.bf16.msra.mxu0 %v811
    %834 = vmatprep.subr.bf16.mxu0 0
    %835 = vmatpush1.bf16.msra.mxu0 %v812
    %836 = vmatprep.subr.bf16.mxu0 0
    %837 = vmatpush1.bf16.msra.mxu0 %v813
    %838 = vmatprep.subr.bf16.mxu0 0
    %839 = vmatpush1.bf16.msra.mxu0 0
    %840 = vmatprep.subr.bf16.mxu0 0
    %841 = vmatpush1.bf16.msra.mxu0 0
    %842 = vmatprep.subr.bf16.mxu0 0
    %843 = vmatpush1.bf16.msra.mxu0 0
    %844 = vmatprep.subr.bf16.mxu0 0
    %845 = vmatpush1.bf16.msra.mxu0 0
    %846 = vmatprep.subr.bf16.mxu0 0
    %847 = vmatpush1.bf16.msra.mxu0 0
    %848 = vmatprep.subr.bf16.mxu0 0
    %849 = vmatpush1.bf16.msra.mxu0 0
    %850 = vmatprep.subr.bf16.mxu0 0
    %851 = vmatpush1.bf16.msra.mxu0 0
    %852 = vmatprep.subr.bf16.mxu0 0
    %853 = vmatpush1.bf16.msra.mxu0 0
    %854 = vmatprep.mubr.bf16.mxu0 0
    %855 = vmatmul.mubr.bf16.gmra.mrb[0].mxu0 %v741
    %v856 = vpop.f32.mrb[0].mxu0
    %v857 = vadd.f32 %v772, %v856
    %v858 = vpop.f32.mrb[0].mxu0
    %v859 = vpop.f32.mrb[0].mxu0
    %v860 = vadd.f32 %v772, %v859
    %v861 = vpop.f32.mrb[0].mxu0
    %862 = vmatprep.mubr.bf16.mxu0 0
    %863 = vmatmul.mubr.bf16.gmra.mrb[0].mxu0 %v742
    %v864 = vpop.f32.mrb[0].mxu0
    %v865 = vadd.f32 %v772, %v864
    %v866 = vpop.f32.mrb[0].mxu0
    %v867 = vpop.f32.mrb[0].mxu0
    %v868 = vadd.f32 %v772, %v867
    %v869 = vpop.f32.mrb[0].mxu0
    %870 = vmatprep.mubr.bf16.mxu0 0
    %871 = vmatmul.mubr.bf16.gmra.mrb[0].mxu0 %v743
    %v872 = vpop.f32.mrb[0].mxu0
    %v873 = vadd.f32 %v772, %v872
    %v874 = vpop.f32.mrb[0].mxu0
    %v875 = vpop.f32.mrb[0].mxu0
    %v876 = vadd.f32 %v772, %v875
    %v877 = vpop.f32.mrb[0].mxu0
    %878 = vmatprep.mubr.bf16.mxu0 0
    %879 = vmatmul.mubr.bf16.gmra.mrb[0].mxu0 %v744
    %v880 = vpop.f32.mrb[0].mxu0
    %v881 = vadd.f32 %v772, %v880
    %v882 = vpop.f32.mrb[0].mxu0
    %v883 = vpop.f32.mrb[0].mxu0
    %v884 = vadd.f32 %v772, %v883
    %v885 = vpop.f32.mrb[0].mxu0
    %886 = vmatprep.mubr.bf16.mxu0 0
    %887 = vmatmul.mubr.bf16.gmra.mrb[0].mxu0 %v745
    %v888 = vpop.f32.mrb[0].mxu0
    %v889 = vadd.f32 %v772, %v888
    %v890 = vpop.f32.mrb[0].mxu0
    %v891 = vpop.f32.mrb[0].mxu0
    %v892 = vadd.f32 %v772, %v891
    %v893 = vpop.f32.mrb[0].mxu0
    %894 = vmatprep.mubr.bf16.mxu0 0
    %895 = vmatmul.mubr.bf16.gmra.mrb[0].mxu0 %v746
    %v896 = vpop.f32.mrb[0].mxu0
    %v897 = vadd.f32 %v772, %v896
    %v898 = vpop.f32.mrb[0].mxu0
    %v899 = vpop.f32.mrb[0].mxu0
    %v900 = vadd.f32 %v772, %v899
    %v901 = vpop.f32.mrb[0].mxu0
    %902 = vmatprep.mubr.bf16.mxu0 0
    %903 = vmatmul.mubr.bf16.gmra.mrb[0].mxu0 %v747
    %v904 = vpop.f32.mrb[0].mxu0
    %v905 = vadd.f32 %v772, %v904
    %v906 = vpop.f32.mrb[0].mxu0
    %v907 = vpop.f32.mrb[0].mxu0
    %v908 = vadd.f32 %v772, %v907
    %v909 = vpop.f32.mrb[0].mxu0
    %910 = vmatprep.mubr.bf16.mxu0 0
    %911 = vmatmul.mubr.bf16.gmra.mrb[0].mxu0 %v748
    %v912 = vpop.f32.mrb[0].mxu0
    %v913 = vadd.f32 %v772, %v912
    %v914 = vpop.f32.mrb[0].mxu0
    %v915 = vpop.f32.mrb[0].mxu0
    %v916 = vadd.f32 %v772, %v915
    %v917 = vpop.f32.mrb[0].mxu0
    %918 = vdwg.mxu0
    %v919 = vmul.f32 %v857, 0.1
    %v920 = vmul.f32 %v860, 0.1
    %v921 = vmul.f32 %v865, 0.1
    %v922 = vmul.f32 %v868, 0.1
    %v923 = vmul.f32 %v873, 0.1
    %v924 = vmul.f32 %v876, 0.1
    %v925 = vmul.f32 %v881, 0.1
    %v926 = vmul.f32 %v884, 0.1
    %v927 = vmul.f32 %v889, 0.1
    %v928 = vmul.f32 %v892, 0.1
    %v929 = vmul.f32 %v897, 0.1
    %v930 = vmul.f32 %v900, 0.1
    %v931 = vmul.f32 %v905, 0.1
    %v932 = vmul.f32 %v908, 0.1
    %v933 = vmul.f32 %v913, 0.1
    %v934 = vmul.f32 %v916, 0.1
    %v935 = vmax.f32 %v857, %v919
    %v936 = vmax.f32 %v860, %v920
    %v937 = vmax.f32 %v865, %v921
    %v938 = vmax.f32 %v868, %v922
    %v939 = vmax.f32 %v873, %v923
    %v940 = vmax.f32 %v876, %v924
    %v941 = vmax.f32 %v881, %v925
    %v942 = vmax.f32 %v884, %v926
    %v943 = vmax.f32 %v889, %v927
    %v944 = vmax.f32 %v892, %v928
    %v945 = vmax.f32 %v897, %v929
    %v946 = vmax.f32 %v900, %v930
    %v947 = vmax.f32 %v905, %v931
    %v948 = vmax.f32 %v908, %v932
    %v949 = vmax.f32 %v913, %v933
    %v950 = vmax.f32 %v916, %v934
    %v951 = vpack.c.bf16 %v936, %v935
    %v952 = vpack.c.bf16 %v938, %v937
    %v953 = vpack.c.bf16 %v940, %v939
    %v954 = vpack.c.bf16 %v942, %v941
    %v955 = vpack.c.bf16 %v944, %v943
    %v956 = vpack.c.bf16 %v946, %v945
    %v957 = vpack.c.bf16 %v948, %v947
    %v958 = vpack.c.bf16 %v950, %v949
    %s959 = scalar_lea.vmem [#allocation5], 1024
    %v960 = vld [vmem:[%s959] sm:$0xf]
    %v961 = vld [vmem:[%s959 + $0x8] sm:$0xf]
    %v962 = vld [vmem:[%s959 + $0x10] sm:$0xf]
    %v963 = vld [vmem:[%s959 + $0x18] sm:$0xf]
    %v964 = vld [vmem:[%s959 + $0x20] sm:$0xf]
    %v965 = vld [vmem:[%s959 + $0x28] sm:$0xf]
    %v966 = vld [vmem:[%s959 + $0x30] sm:$0xf]
    %v967 = vld [vmem:[%s959 + $0x38] sm:$0xf]
    %v968 = vld [vmem:[%s959 + $0x40] sm:$0xf]
    %v969 = vld [vmem:[%s959 + $0x48] sm:$0xf]
    %v970 = vld [vmem:[%s959 + $0x50] sm:$0xf]
    %v971 = vld [vmem:[%s959 + $0x58] sm:$0xf]
    %v972 = vld [vmem:[%s959 + $0x60] sm:$0xf]
    %v973 = vld [vmem:[%s959 + $0x68] sm:$0xf]
    %v974 = vld [vmem:[%s959 + $0x70] sm:$0xf]
    %v975 = vld [vmem:[%s959 + $0x78] sm:$0xf]
    %s976 = scalar_lea.vmem [#allocation7], 8
    %v977 = vld [vmem:[%s976] sm:$0x1]
    %v979 = vlaneseq
    %v980 = vshrl.u32 %v979, 7
    %v981 = vsub.s32 0, %v980
    %v982 = vrot.slane %v977, %v981
    %v1000 = vunpack.c.l.b16 %v960
    %v1001 = vunpack.c.l.b16 %v961
    %v1002 = vunpack.c.l.b16 %v962
    %v1003 = vunpack.c.l.b16 %v963
    %v1004 = vunpack.c.l.b16 %v964
    %v1005 = vunpack.c.l.b16 %v965
    %v1006 = vunpack.c.l.b16 %v966
    %v1007 = vunpack.c.l.b16 %v967
    %v1008 = vunpack.c.l.b16 %v968
    %v1009 = vunpack.c.l.b16 %v969
    %v1010 = vunpack.c.l.b16 %v970
    %v1011 = vunpack.c.l.b16 %v971
    %v1012 = vunpack.c.l.b16 %v972
    %v1013 = vunpack.c.l.b16 %v973
    %v1014 = vunpack.c.l.b16 %v974
    %v1015 = vunpack.c.l.b16 %v975
    %v1016 = vpack.c.b16 %v1001, %v1000
    %v1017 = vpack.c.b16 %v1003, %v1002
    %v1018 = vpack.c.b16 %v1005, %v1004
    %v1019 = vpack.c.b16 %v1007, %v1006
    %v1020 = vpack.c.b16 %v1009, %v1008
    %v1021 = vpack.c.b16 %v1011, %v1010
    %v1022 = vpack.c.b16 %v1013, %v1012
    %v1023 = vpack.c.b16 %v1015, %v1014
    %1032 = vmatprep.subr.bf16.mxu0 0
    %1033 = vmatpush1.bf16.msra.mxu0 %v1016
    %1034 = vmatprep.subr.bf16.mxu0 0
    %1035 = vmatpush1.bf16.msra.mxu0 %v1017
    %1036 = vmatprep.subr.bf16.mxu0 0
    %1037 = vmatpush1.bf16.msra.mxu0 %v1018
    %1038 = vmatprep.subr.bf16.mxu0 0
    %1039 = vmatpush1.bf16.msra.mxu0 %v1019
    %1040 = vmatprep.subr.bf16.mxu0 0
    %1041 = vmatpush1.bf16.msra.mxu0 %v1020
    %1042 = vmatprep.subr.bf16.mxu0 0
    %1043 = vmatpush1.bf16.msra.mxu0 %v1021
    %1044 = vmatprep.subr.bf16.mxu0 0
    %1045 = vmatpush1.bf16.msra.mxu0 %v1022
    %1046 = vmatprep.subr.bf16.mxu0 0
    %1047 = vmatpush1.bf16.msra.mxu0 %v1023
    %1048 = vmatprep.subr.bf16.mxu0 0
    %1049 = vmatpush1.bf16.msra.mxu0 0
    %1050 = vmatprep.subr.bf16.mxu0 0
    %1051 = vmatpush1.bf16.msra.mxu0 0
    %1052 = vmatprep.subr.bf16.mxu0 0
    %1053 = vmatpush1.bf16.msra.mxu0 0
    %1054 = vmatprep.subr.bf16.mxu0 0
    %1055 = vmatpush1.bf16.msra.mxu0 0
    %1056 = vmatprep.subr.bf16.mxu0 0
    %1057 = vmatpush1.bf16.msra.mxu0 0
    %1058 = vmatprep.subr.bf16.mxu0 0
    %1059 = vmatpush1.bf16.msra.mxu0 0
    %1060 = vmatprep.subr.bf16.mxu0 0
    %1061 = vmatpush1.bf16.msra.mxu0 0
    %1062 = vmatprep.subr.bf16.mxu0 0
    %1063 = vmatpush1.bf16.msra.mxu0 0
    %1064 = vmatprep.mubr.bf16.mxu0 0
    %1065 = vmatmul.mubr.bf16.gmra.mrb[0].mxu0 %v951
    %v1066 = vpop.f32.mrb[0].mxu0
    %v1067 = vadd.f32 %v982, %v1066
    %v1068 = vpop.f32.mrb[0].mxu0
    %v1069 = vpop.f32.mrb[0].mxu0
    %v1070 = vadd.f32 %v982, %v1069
    %v1071 = vpop.f32.mrb[0].mxu0
    %1072 = vmatprep.mubr.bf16.mxu0 0
    %1073 = vmatmul.mubr.bf16.gmra.mrb[0].mxu0 %v952
    %v1074 = vpop.f32.mrb[0].mxu0
    %v1075 = vadd.f32 %v982, %v1074
    %v1076 = vpop.f32.mrb[0].mxu0
    %v1077 = vpop.f32.mrb[0].mxu0
    %v1078 = vadd.f32 %v982, %v1077
    %v1079 = vpop.f32.mrb[0].mxu0
    %1080 = vmatprep.mubr.bf16.mxu0 0
    %1081 = vmatmul.mubr.bf16.gmra.mrb[0].mxu0 %v953
    %v1082 = vpop.f32.mrb[0].mxu0
    %v1083 = vadd.f32 %v982, %v1082
    %v1084 = vpop.f32.mrb[0].mxu0
    %v1085 = vpop.f32.mrb[0].mxu0
    %v1086 = vadd.f32 %v982, %v1085
    %v1087 = vpop.f32.mrb[0].mxu0
    %1088 = vmatprep.mubr.bf16.mxu0 0
    %1089 = vmatmul.mubr.bf16.gmra.mrb[0].mxu0 %v954
    %v1090 = vpop.f32.mrb[0].mxu0
    %v1091 = vadd.f32 %v982, %v1090
    %v1092 = vpop.f32.mrb[0].mxu0
    %v1093 = vpop.f32.mrb[0].mxu0
    %v1094 = vadd.f32 %v982, %v1093
    %v1095 = vpop.f32.mrb[0].mxu0
    %1096 = vmatprep.mubr.bf16.mxu0 0
    %1097 = vmatmul.mubr.bf16.gmra.mrb[0].mxu0 %v955
    %v1098 = vpop.f32.mrb[0].mxu0
    %v1099 = vadd.f32 %v982, %v1098
    %v1100 = vpop.f32.mrb[0].mxu0
    %v1101 = vpop.f32.mrb[0].mxu0
    %v1102 = vadd.f32 %v982, %v1101
    %v1103 = vpop.f32.mrb[0].mxu0
    %1104 = vmatprep.mubr.bf16.mxu0 0
    %1105 = vmatmul.mubr.bf16.gmra.mrb[0].mxu0 %v956
    %v1106 = vpop.f32.mrb[0].mxu0
    %v1107 = vadd.f32 %v982, %v1106
    %v1108 = vpop.f32.mrb[0].mxu0
    %v1109 = vpop.f32.mrb[0].mxu0
    %v1110 = vadd.f32 %v982, %v1109
    %v1111 = vpop.f32.mrb[0].mxu0
    %1112 = vmatprep.mubr.bf16.mxu0 0
    %1113 = vmatmul.mubr.bf16.gmra.mrb[0].mxu0 %v957
    %v1114 = vpop.f32.mrb[0].mxu0
    %v1115 = vadd.f32 %v982, %v1114
    %v1116 = vpop.f32.mrb[0].mxu0
    %v1117 = vpop.f32.mrb[0].mxu0
    %v1118 = vadd.f32 %v982, %v1117
    %v1119 = vpop.f32.mrb[0].mxu0
    %1120 = vmatprep.mubr.bf16.mxu0 0
    %1121 = vmatmul.mubr.bf16.gmra.mrb[0].mxu0 %v958
    %v1122 = vpop.f32.mrb[0].mxu0
    %v1123 = vadd.f32 %v982, %v1122
    %v1124 = vpop.f32.mrb[0].mxu0
    %v1125 = vpop.f32.mrb[0].mxu0
    %v1126 = vadd.f32 %v982, %v1125
    %v1127 = vpop.f32.mrb[0].mxu0
    %1128 = vdwg.mxu0
    %v1129 = vmul.f32 %v1067, 0.1
    %v1130 = vmul.f32 %v1070, 0.1
    %v1131 = vmul.f32 %v1075, 0.1
    %v1132 = vmul.f32 %v1078, 0.1
    %v1133 = vmul.f32 %v1083, 0.1
    %v1134 = vmul.f32 %v1086, 0.1
    %v1135 = vmul.f32 %v1091, 0.1
    %v1136 = vmul.f32 %v1094, 0.1
    %v1137 = vmul.f32 %v1099, 0.1
    %v1138 = vmul.f32 %v1102, 0.1
    %v1139 = vmul.f32 %v1107, 0.1
    %v1140 = vmul.f32 %v1110, 0.1
    %v1141 = vmul.f32 %v1115, 0.1
    %v1142 = vmul.f32 %v1118, 0.1
    %v1143 = vmul.f32 %v1123, 0.1
    %v1144 = vmul.f32 %v1126, 0.1
    %v1145 = vmax.f32 %v1067, %v1129
    %v1146 = vmax.f32 %v1070, %v1130
    %v1147 = vmax.f32 %v1075, %v1131
    %v1148 = vmax.f32 %v1078, %v1132
    %v1149 = vmax.f32 %v1083, %v1133
    %v1150 = vmax.f32 %v1086, %v1134
    %v1151 = vmax.f32 %v1091, %v1135
    %v1152 = vmax.f32 %v1094, %v1136
    %v1153 = vmax.f32 %v1099, %v1137
    %v1154 = vmax.f32 %v1102, %v1138
    %v1155 = vmax.f32 %v1107, %v1139
    %v1156 = vmax.f32 %v1110, %v1140
    %v1157 = vmax.f32 %v1115, %v1141
    %v1158 = vmax.f32 %v1118, %v1142
    %v1159 = vmax.f32 %v1123, %v1143
    %v1160 = vmax.f32 %v1126, %v1144
    %v1161 = vpack.c.bf16 %v1146, %v1145
    %v1162 = vpack.c.bf16 %v1148, %v1147
    %v1163 = vpack.c.bf16 %v1150, %v1149
    %v1164 = vpack.c.bf16 %v1152, %v1151
    %v1165 = vpack.c.bf16 %v1154, %v1153
    %v1166 = vpack.c.bf16 %v1156, %v1155
    %v1167 = vpack.c.bf16 %v1158, %v1157
    %v1168 = vpack.c.bf16 %v1160, %v1159
    %s1169 = scalar_lea.vmem [#allocation5], 1280
    %v1170 = vld [vmem:[%s1169] sm:$0xff]
    %v1171 = vld [vmem:[%s1169 + $0x8] sm:$0xff]
    %v1172 = vld [vmem:[%s1169 + $0x10] sm:$0xff]
    %v1173 = vld [vmem:[%s1169 + $0x18] sm:$0xff]
    %v1174 = vld [vmem:[%s1169 + $0x20] sm:$0xff]
    %v1175 = vld [vmem:[%s1169 + $0x28] sm:$0xff]
    %v1176 = vld [vmem:[%s1169 + $0x30] sm:$0xff]
    %v1177 = vld [vmem:[%s1169 + $0x38] sm:$0xff]
    %v1178 = vld [vmem:[%s1169 + $0x40] sm:$0xff]
    %v1179 = vld [vmem:[%s1169 + $0x48] sm:$0xff]
    %v1180 = vld [vmem:[%s1169 + $0x50] sm:$0xff]
    %v1181 = vld [vmem:[%s1169 + $0x58] sm:$0xff]
    %v1182 = vld [vmem:[%s1169 + $0x60] sm:$0xff]
    %v1183 = vld [vmem:[%s1169 + $0x68] sm:$0xff]
    %v1184 = vld [vmem:[%s1169 + $0x70] sm:$0xff]
    %v1185 = vld [vmem:[%s1169 + $0x78] sm:$0xff]
    %s1186 = scalar_lea.vmem [#allocation7], 10
    %v1187 = vld [vmem:[%s1186] sm:$0x3]
    %v1189 = vlaneseq
    %v1190 = vshrl.u32 %v1189, 7
    %v1191 = vsub.s32 0, %v1190
    %v1192 = vrot.slane %v1187, %v1191
    %v1193 = vlaneseq
    %v1194 = vshrl.u32 %v1193, 7
    %v1195 = vsub.s32 1, %v1194
    %v1196 = vrot.slane %v1187, %v1195
    %v1215 = vunpack.c.l.b16 %v1170
    %v1216 = vunpack.c.h.b16 %v1170
    %v1217 = vunpack.c.l.b16 %v1171
    %v1218 = vunpack.c.h.b16 %v1171
    %v1219 = vunpack.c.l.b16 %v1172
    %v1220 = vunpack.c.h.b16 %v1172
    %v1221 = vunpack.c.l.b16 %v1173
    %v1222 = vunpack.c.h.b16 %v1173
    %v1223 = vunpack.c.l.b16 %v1174
    %v1224 = vunpack.c.h.b16 %v1174
    %v1225 = vunpack.c.l.b16 %v1175
    %v1226 = vunpack.c.h.b16 %v1175
    %v1227 = vunpack.c.l.b16 %v1176
    %v1228 = vunpack.c.h.b16 %v1176
    %v1229 = vunpack.c.l.b16 %v1177
    %v1230 = vunpack.c.h.b16 %v1177
    %v1231 = vunpack.c.l.b16 %v1178
    %v1232 = vunpack.c.h.b16 %v1178
    %v1233 = vunpack.c.l.b16 %v1179
    %v1234 = vunpack.c.h.b16 %v1179
    %v1235 = vunpack.c.l.b16 %v1180
    %v1236 = vunpack.c.h.b16 %v1180
    %v1237 = vunpack.c.l.b16 %v1181
    %v1238 = vunpack.c.h.b16 %v1181
    %v1239 = vunpack.c.l.b16 %v1182
    %v1240 = vunpack.c.h.b16 %v1182
    %v1241 = vunpack.c.l.b16 %v1183
    %v1242 = vunpack.c.h.b16 %v1183
    %v1243 = vunpack.c.l.b16 %v1184
    %v1244 = vunpack.c.h.b16 %v1184
    %v1245 = vunpack.c.l.b16 %v1185
    %v1246 = vunpack.c.h.b16 %v1185
    %v1247 = vpack.c.b16 %v1217, %v1215
    %v1248 = vpack.c.b16 %v1218, %v1216
    %v1249 = vpack.c.b16 %v1221, %v1219
    %v1250 = vpack.c.b16 %v1222, %v1220
    %v1251 = vpack.c.b16 %v1225, %v1223
    %v1252 = vpack.c.b16 %v1226, %v1224
    %v1253 = vpack.c.b16 %v1229, %v1227
    %v1254 = vpack.c.b16 %v1230, %v1228
    %v1255 = vpack.c.b16 %v1233, %v1231
    %v1256 = vpack.c.b16 %v1234, %v1232
    %v1257 = vpack.c.b16 %v1237, %v1235
    %v1258 = vpack.c.b16 %v1238, %v1236
    %v1259 = vpack.c.b16 %v1241, %v1239
    %v1260 = vpack.c.b16 %v1242, %v1240
    %v1261 = vpack.c.b16 %v1245, %v1243
    %v1262 = vpack.c.b16 %v1246, %v1244
    %1279 = vmatprep.subr.bf16.mxu0 %v1248
    %1280 = vmatpush1.bf16.msra.mxu0 %v1247
    %1281 = vmatprep.subr.bf16.mxu0 %v1250
    %1282 = vmatpush1.bf16.msra.mxu0 %v1249
    %1283 = vmatprep.subr.bf16.mxu0 %v1252
    %1284 = vmatpush1.bf16.msra.mxu0 %v1251
    %1285 = vmatprep.subr.bf16.mxu0 %v1254
    %1286 = vmatpush1.bf16.msra.mxu0 %v1253
    %1287 = vmatprep.subr.bf16.mxu0 %v1256
    %1288 = vmatpush1.bf16.msra.mxu0 %v1255
    %1289 = vmatprep.subr.bf16.mxu0 %v1258
    %1290 = vmatpush1.bf16.msra.mxu0 %v1257
    %1291 = vmatprep.subr.bf16.mxu0 %v1260
    %1292 = vmatpush1.bf16.msra.mxu0 %v1259
    %1293 = vmatprep.subr.bf16.mxu0 %v1262
    %1294 = vmatpush1.bf16.msra.mxu0 %v1261
    %1295 = vmatprep.subr.bf16.mxu0 0
    %1296 = vmatpush1.bf16.msra.mxu0 0
    %1297 = vmatprep.subr.bf16.mxu0 0
    %1298 = vmatpush1.bf16.msra.mxu0 0
    %1299 = vmatprep.subr.bf16.mxu0 0
    %1300 = vmatpush1.bf16.msra.mxu0 0
    %1301 = vmatprep.subr.bf16.mxu0 0
    %1302 = vmatpush1.bf16.msra.mxu0 0
    %1303 = vmatprep.subr.bf16.mxu0 0
    %1304 = vmatpush1.bf16.msra.mxu0 0
    %1305 = vmatprep.subr.bf16.mxu0 0
    %1306 = vmatpush1.bf16.msra.mxu0 0
    %1307 = vmatprep.subr.bf16.mxu0 0
    %1308 = vmatpush1.bf16.msra.mxu0 0
    %1309 = vmatprep.subr.bf16.mxu0 0
    %1310 = vmatpush1.bf16.msra.mxu0 0
    %1311 = vmatprep.mubr.bf16.mxu0 0
    %1312 = vmatmul.mubr.bf16.gmra.mrb[0].mxu0 %v1161
    %v1313 = vpop.f32.mrb[0].mxu0
    %v1314 = vadd.f32 %v1192, %v1313
    %v1315 = vpop.f32.mrb[0].mxu0
    %v1316 = vadd.f32 %v1196, %v1315
    %v1317 = vpop.f32.mrb[0].mxu0
    %v1318 = vadd.f32 %v1192, %v1317
    %v1319 = vpop.f32.mrb[0].mxu0
    %v1320 = vadd.f32 %v1196, %v1319
    %1321 = vmatprep.mubr.bf16.mxu0 0
    %1322 = vmatmul.mubr.bf16.gmra.mrb[0].mxu0 %v1162
    %v1323 = vpop.f32.mrb[0].mxu0
    %v1324 = vadd.f32 %v1192, %v1323
    %v1325 = vpop.f32.mrb[0].mxu0
    %v1326 = vadd.f32 %v1196, %v1325
    %v1327 = vpop.f32.mrb[0].mxu0
    %v1328 = vadd.f32 %v1192, %v1327
    %v1329 = vpop.f32.mrb[0].mxu0
    %v1330 = vadd.f32 %v1196, %v1329
    %1331 = vmatprep.mubr.bf16.mxu0 0
    %1332 = vmatmul.mubr.bf16.gmra.mrb[0].mxu0 %v1163
    %v1333 = vpop.f32.mrb[0].mxu0
    %v1334 = vadd.f32 %v1192, %v1333
    %v1335 = vpop.f32.mrb[0].mxu0
    %v1336 = vadd.f32 %v1196, %v1335
    %v1337 = vpop.f32.mrb[0].mxu0
    %v1338 = vadd.f32 %v1192, %v1337
    %v1339 = vpop.f32.mrb[0].mxu0
    %v1340 = vadd.f32 %v1196, %v1339
    %1341 = vmatprep.mubr.bf16.mxu0 0
    %1342 = vmatmul.mubr.bf16.gmra.mrb[0].mxu0 %v1164
    %v1343 = vpop.f32.mrb[0].mxu0
    %v1344 = vadd.f32 %v1192, %v1343
    %v1345 = vpop.f32.mrb[0].mxu0
    %v1346 = vadd.f32 %v1196, %v1345
    %v1347 = vpop.f32.mrb[0].mxu0
    %v1348 = vadd.f32 %v1192, %v1347
    %v1349 = vpop.f32.mrb[0].mxu0
    %v1350 = vadd.f32 %v1196, %v1349
    %1351 = vmatprep.mubr.bf16.mxu0 0
    %1352 = vmatmul.mubr.bf16.gmra.mrb[0].mxu0 %v1165
    %v1353 = vpop.f32.mrb[0].mxu0
    %v1354 = vadd.f32 %v1192, %v1353
    %v1355 = vpop.f32.mrb[0].mxu0
    %v1356 = vadd.f32 %v1196, %v1355
    %v1357 = vpop.f32.mrb[0].mxu0
    %v1358 = vadd.f32 %v1192, %v1357
    %v1359 = vpop.f32.mrb[0].mxu0
    %v1360 = vadd.f32 %v1196, %v1359
    %1361 = vmatprep.mubr.bf16.mxu0 0
    %1362 = vmatmul.mubr.bf16.gmra.mrb[0].mxu0 %v1166
    %v1363 = vpop.f32.mrb[0].mxu0
    %v1364 = vadd.f32 %v1192, %v1363
    %v1365 = vpop.f32.mrb[0].mxu0
    %v1366 = vadd.f32 %v1196, %v1365
    %v1367 = vpop.f32.mrb[0].mxu0
    %v1368 = vadd.f32 %v1192, %v1367
    %v1369 = vpop.f32.mrb[0].mxu0
    %v1370 = vadd.f32 %v1196, %v1369
    %1371 = vmatprep.mubr.bf16.mxu0 0
    %1372 = vmatmul.mubr.bf16.gmra.mrb[0].mxu0 %v1167
    %v1373 = vpop.f32.mrb[0].mxu0
    %v1374 = vadd.f32 %v1192, %v1373
    %v1375 = vpop.f32.mrb[0].mxu0
    %v1376 = vadd.f32 %v1196, %v1375
    %v1377 = vpop.f32.mrb[0].mxu0
    %v1378 = vadd.f32 %v1192, %v1377
    %v1379 = vpop.f32.mrb[0].mxu0
    %v1380 = vadd.f32 %v1196, %v1379
    %1381 = vmatprep.mubr.bf16.mxu0 0
    %1382 = vmatmul.mubr.bf16.gmra.mrb[0].mxu0 %v1168
    %v1383 = vpop.f32.mrb[0].mxu0
    %v1384 = vadd.f32 %v1192, %v1383
    %v1385 = vpop.f32.mrb[0].mxu0
    %v1386 = vadd.f32 %v1196, %v1385
    %v1387 = vpop.f32.mrb[0].mxu0
    %v1388 = vadd.f32 %v1192, %v1387
    %v1389 = vpop.f32.mrb[0].mxu0
    %v1390 = vadd.f32 %v1196, %v1389
    %1391 = vdwg.mxu0
    %v1392 = vmul.f32 %v1314, 0.1
    %v1393 = vmul.f32 %v1316, 0.1
    %v1394 = vmul.f32 %v1318, 0.1
    %v1395 = vmul.f32 %v1320, 0.1
    %v1396 = vmul.f32 %v1324, 0.1
    %v1397 = vmul.f32 %v1326, 0.1
    %v1398 = vmul.f32 %v1328, 0.1
    %v1399 = vmul.f32 %v1330, 0.1
    %v1400 = vmul.f32 %v1334, 0.1
    %v1401 = vmul.f32 %v1336, 0.1
    %v1402 = vmul.f32 %v1338, 0.1
    %v1403 = vmul.f32 %v1340, 0.1
    %v1404 = vmul.f32 %v1344, 0.1
    %v1405 = vmul.f32 %v1346, 0.1
    %v1406 = vmul.f32 %v1348, 0.1
    %v1407 = vmul.f32 %v1350, 0.1
    %v1408 = vmul.f32 %v1354, 0.1
    %v1409 = vmul.f32 %v1356, 0.1
    %v1410 = vmul.f32 %v1358, 0.1
    %v1411 = vmul.f32 %v1360, 0.1
    %v1412 = vmul.f32 %v1364, 0.1
    %v1413 = vmul.f32 %v1366, 0.1
    %v1414 = vmul.f32 %v1368, 0.1
    %v1415 = vmul.f32 %v1370, 0.1
    %v1416 = vmul.f32 %v1374, 0.1
    %v1417 = vmul.f32 %v1376, 0.1
    %v1418 = vmul.f32 %v1378, 0.1
    %v1419 = vmul.f32 %v1380, 0.1
    %v1420 = vmul.f32 %v1384, 0.1
    %v1421 = vmul.f32 %v1386, 0.1
    %v1422 = vmul.f32 %v1388, 0.1
    %v1423 = vmul.f32 %v1390, 0.1
    %v1424 = vmax.f32 %v1314, %v1392
    %v1425 = vmax.f32 %v1316, %v1393
    %v1426 = vmax.f32 %v1318, %v1394
    %v1427 = vmax.f32 %v1320, %v1395
    %v1428 = vmax.f32 %v1324, %v1396
    %v1429 = vmax.f32 %v1326, %v1397
    %v1430 = vmax.f32 %v1328, %v1398
    %v1431 = vmax.f32 %v1330, %v1399
    %v1432 = vmax.f32 %v1334, %v1400
    %v1433 = vmax.f32 %v1336, %v1401
    %v1434 = vmax.f32 %v1338, %v1402
    %v1435 = vmax.f32 %v1340, %v1403
    %v1436 = vmax.f32 %v1344, %v1404
    %v1437 = vmax.f32 %v1346, %v1405
    %v1438 = vmax.f32 %v1348, %v1406
    %v1439 = vmax.f32 %v1350, %v1407
    %v1440 = vmax.f32 %v1354, %v1408
    %v1441 = vmax.f32 %v1356, %v1409
    %v1442 = vmax.f32 %v1358, %v1410
    %v1443 = vmax.f32 %v1360, %v1411
    %v1444 = vmax.f32 %v1364, %v1412
    %v1445 = vmax.f32 %v1366, %v1413
    %v1446 = vmax.f32 %v1368, %v1414
    %v1447 = vmax.f32 %v1370, %v1415
    %v1448 = vmax.f32 %v1374, %v1416
    %v1449 = vmax.f32 %v1376, %v1417
    %v1450 = vmax.f32 %v1378, %v1418
    %v1451 = vmax.f32 %v1380, %v1419
    %v1452 = vmax.f32 %v1384, %v1420
    %v1453 = vmax.f32 %v1386, %v1421
    %v1454 = vmax.f32 %v1388, %v1422
    %v1455 = vmax.f32 %v1390, %v1423
    %v1456 = vpack.c.bf16 %v1426, %v1424
    %v1457 = vpack.c.bf16 %v1427, %v1425
    %v1458 = vpack.c.bf16 %v1430, %v1428
    %v1459 = vpack.c.bf16 %v1431, %v1429
    %v1460 = vpack.c.bf16 %v1434, %v1432
    %v1461 = vpack.c.bf16 %v1435, %v1433
    %v1462 = vpack.c.bf16 %v1438, %v1436
    %v1463 = vpack.c.bf16 %v1439, %v1437
    %v1464 = vpack.c.bf16 %v1442, %v1440
    %v1465 = vpack.c.bf16 %v1443, %v1441
    %v1466 = vpack.c.bf16 %v1446, %v1444
    %v1467 = vpack.c.bf16 %v1447, %v1445
    %v1468 = vpack.c.bf16 %v1450, %v1448
    %v1469 = vpack.c.bf16 %v1451, %v1449
    %v1470 = vpack.c.bf16 %v1454, %v1452
    %v1471 = vpack.c.bf16 %v1455, %v1453
    %s1472 = scalar_lea.vmem [#allocation5], 1536
    %v1473 = vld [vmem:[%s1472] sm:$0xf]
    %v1474 = vld [vmem:[%s1472 + $0x8] sm:$0xf]
    %v1475 = vld [vmem:[%s1472 + $0x10] sm:$0xf]
    %v1476 = vld [vmem:[%s1472 + $0x18] sm:$0xf]
    %v1477 = vld [vmem:[%s1472 + $0x20] sm:$0xf]
    %v1478 = vld [vmem:[%s1472 + $0x28] sm:$0xf]
    %v1479 = vld [vmem:[%s1472 + $0x30] sm:$0xf]
    %v1480 = vld [vmem:[%s1472 + $0x38] sm:$0xf]
    %v1481 = vld [vmem:[%s1472 + $0x40] sm:$0xf]
    %v1482 = vld [vmem:[%s1472 + $0x48] sm:$0xf]
    %v1483 = vld [vmem:[%s1472 + $0x50] sm:$0xf]
    %v1484 = vld [vmem:[%s1472 + $0x58] sm:$0xf]
    %v1485 = vld [vmem:[%s1472 + $0x60] sm:$0xf]
    %v1486 = vld [vmem:[%s1472 + $0x68] sm:$0xf]
    %v1487 = vld [vmem:[%s1472 + $0x70] sm:$0xf]
    %v1488 = vld [vmem:[%s1472 + $0x78] sm:$0xf]
    %v1489 = vld [vmem:[%s1472 + $0x80] sm:$0xf]
    %v1490 = vld [vmem:[%s1472 + $0x88] sm:$0xf]
    %v1491 = vld [vmem:[%s1472 + $0x90] sm:$0xf]
    %v1492 = vld [vmem:[%s1472 + $0x98] sm:$0xf]
    %v1493 = vld [vmem:[%s1472 + $0xa0] sm:$0xf]
    %v1494 = vld [vmem:[%s1472 + $0xa8] sm:$0xf]
    %v1495 = vld [vmem:[%s1472 + $0xb0] sm:$0xf]
    %v1496 = vld [vmem:[%s1472 + $0xb8] sm:$0xf]
    %v1497 = vld [vmem:[%s1472 + $0xc0] sm:$0xf]
    %v1498 = vld [vmem:[%s1472 + $0xc8] sm:$0xf]
    %v1499 = vld [vmem:[%s1472 + $0xd0] sm:$0xf]
    %v1500 = vld [vmem:[%s1472 + $0xd8] sm:$0xf]
    %v1501 = vld [vmem:[%s1472 + $0xe0] sm:$0xf]
    %v1502 = vld [vmem:[%s1472 + $0xe8] sm:$0xf]
    %v1503 = vld [vmem:[%s1472 + $0xf0] sm:$0xf]
    %v1504 = vld [vmem:[%s1472 + $0xf8] sm:$0xf]
    %s1505 = scalar_lea.vmem [#allocation7], 12
    %v1506 = vld [vmem:[%s1505] sm:$0x1]
    %v1508 = vlaneseq
    %v1509 = vshrl.u32 %v1508, 7
    %v1510 = vsub.s32 0, %v1509
    %v1511 = vrot.slane %v1506, %v1510
    %v1545 = vunpack.c.l.b16 %v1473
    %v1546 = vunpack.c.l.b16 %v1474
    %v1547 = vunpack.c.l.b16 %v1475
    %v1548 = vunpack.c.l.b16 %v1476
    %v1549 = vunpack.c.l.b16 %v1477
    %v1550 = vunpack.c.l.b16 %v1478
    %v1551 = vunpack.c.l.b16 %v1479
    %v1552 = vunpack.c.l.b16 %v1480
    %v1553 = vunpack.c.l.b16 %v1481
    %v1554 = vunpack.c.l.b16 %v1482
    %v1555 = vunpack.c.l.b16 %v1483
    %v1556 = vunpack.c.l.b16 %v1484
    %v1557 = vunpack.c.l.b16 %v1485
    %v1558 = vunpack.c.l.b16 %v1486
    %v1559 = vunpack.c.l.b16 %v1487
    %v1560 = vunpack.c.l.b16 %v1488
    %v1561 = vunpack.c.l.b16 %v1489
    %v1562 = vunpack.c.l.b16 %v1490
    %v1563 = vunpack.c.l.b16 %v1491
    %v1564 = vunpack.c.l.b16 %v1492
    %v1565 = vunpack.c.l.b16 %v1493
    %v1566 = vunpack.c.l.b16 %v1494
    %v1567 = vunpack.c.l.b16 %v1495
    %v1568 = vunpack.c.l.b16 %v1496
    %v1569 = vunpack.c.l.b16 %v1497
    %v1570 = vunpack.c.l.b16 %v1498
    %v1571 = vunpack.c.l.b16 %v1499
    %v1572 = vunpack.c.l.b16 %v1500
    %v1573 = vunpack.c.l.b16 %v1501
    %v1574 = vunpack.c.l.b16 %v1502
    %v1575 = vunpack.c.l.b16 %v1503
    %v1576 = vunpack.c.l.b16 %v1504
    %v1577 = vpack.c.b16 %v1546, %v1545
    %v1578 = vpack.c.b16 %v1548, %v1547
    %v1579 = vpack.c.b16 %v1550, %v1549
    %v1580 = vpack.c.b16 %v1552, %v1551
    %v1581 = vpack.c.b16 %v1554, %v1553
    %v1582 = vpack.c.b16 %v1556, %v1555
    %v1583 = vpack.c.b16 %v1558, %v1557
    %v1584 = vpack.c.b16 %v1560, %v1559
    %v1585 = vpack.c.b16 %v1562, %v1561
    %v1586 = vpack.c.b16 %v1564, %v1563
    %v1587 = vpack.c.b16 %v1566, %v1565
    %v1588 = vpack.c.b16 %v1568, %v1567
    %v1589 = vpack.c.b16 %v1570, %v1569
    %v1590 = vpack.c.b16 %v1572, %v1571
    %v1591 = vpack.c.b16 %v1574, %v1573
    %v1592 = vpack.c.b16 %v1576, %v1575
    %1609 = vmatprep.subr.bf16.mxu0 0
    %1610 = vmatpush1.bf16.msra.mxu0 %v1577
    %1611 = vmatprep.subr.bf16.mxu0 0
    %1612 = vmatpush1.bf16.msra.mxu0 %v1578
    %1613 = vmatprep.subr.bf16.mxu0 0
    %1614 = vmatpush1.bf16.msra.mxu0 %v1579
    %1615 = vmatprep.subr.bf16.mxu0 0
    %1616 = vmatpush1.bf16.msra.mxu0 %v1580
    %1617 = vmatprep.subr.bf16.mxu0 0
    %1618 = vmatpush1.bf16.msra.mxu0 %v1581
    %1619 = vmatprep.subr.bf16.mxu0 0
    %1620 = vmatpush1.bf16.msra.mxu0 %v1582
    %1621 = vmatprep.subr.bf16.mxu0 0
    %1622 = vmatpush1.bf16.msra.mxu0 %v1583
    %1623 = vmatprep.subr.bf16.mxu0 0
    %1624 = vmatpush1.bf16.msra.mxu0 %v1584
    %1625 = vmatprep.subr.bf16.mxu0 0
    %1626 = vmatpush1.bf16.msra.mxu0 %v1585
    %1627 = vmatprep.subr.bf16.mxu0 0
    %1628 = vmatpush1.bf16.msra.mxu0 %v1586
    %1629 = vmatprep.subr.bf16.mxu0 0
    %1630 = vmatpush1.bf16.msra.mxu0 %v1587
    %1631 = vmatprep.subr.bf16.mxu0 0
    %1632 = vmatpush1.bf16.msra.mxu0 %v1588
    %1633 = vmatprep.subr.bf16.mxu0 0
    %1634 = vmatpush1.bf16.msra.mxu0 %v1589
    %1635 = vmatprep.subr.bf16.mxu0 0
    %1636 = vmatpush1.bf16.msra.mxu0 %v1590
    %1637 = vmatprep.subr.bf16.mxu0 0
    %1638 = vmatpush1.bf16.msra.mxu0 %v1591
    %1639 = vmatprep.subr.bf16.mxu0 0
    %1640 = vmatpush1.bf16.msra.mxu0 %v1592
    %1641 = vmatprep.mubr.bf16.mxu0 %v1457
    %1642 = vmatmul.mubr.bf16.gmra.mrb[0].mxu0 %v1456
    %v1643 = vpop.f32.mrb[0].mxu0
    %v1644 = vadd.f32 %v1511, %v1643
    %v1645 = vpop.f32.mrb[0].mxu0
    %v1646 = vpop.f32.mrb[0].mxu0
    %v1647 = vadd.f32 %v1511, %v1646
    %v1648 = vpop.f32.mrb[0].mxu0
    %1649 = vmatprep.mubr.bf16.mxu0 %v1459
    %1650 = vmatmul.mubr.bf16.gmra.mrb[0].mxu0 %v1458
    %v1651 = vpop.f32.mrb[0].mxu0
    %v1652 = vadd.f32 %v1511, %v1651
    %v1653 = vpop.f32.mrb[0].mxu0
    %v1654 = vpop.f32.mrb[0].mxu0
    %v1655 = vadd.f32 %v1511, %v1654
    %v1656 = vpop.f32.mrb[0].mxu0
    %1657 = vmatprep.mubr.bf16.mxu0 %v1461
    %1658 = vmatmul.mubr.bf16.gmra.mrb[0].mxu0 %v1460
    %v1659 = vpop.f32.mrb[0].mxu0
    %v1660 = vadd.f32 %v1511, %v1659
    %v1661 = vpop.f32.mrb[0].mxu0
    %v1662 = vpop.f32.mrb[0].mxu0
    %v1663 = vadd.f32 %v1511, %v1662
    %v1664 = vpop.f32.mrb[0].mxu0
    %1665 = vmatprep.mubr.bf16.mxu0 %v1463
    %1666 = vmatmul.mubr.bf16.gmra.mrb[0].mxu0 %v1462
    %v1667 = vpop.f32.mrb[0].mxu0
    %v1668 = vadd.f32 %v1511, %v1667
    %v1669 = vpop.f32.mrb[0].mxu0
    %v1670 = vpop.f32.mrb[0].mxu0
    %v1671 = vadd.f32 %v1511, %v1670
    %v1672 = vpop.f32.mrb[0].mxu0
    %1673 = vmatprep.mubr.bf16.mxu0 %v1465
    %1674 = vmatmul.mubr.bf16.gmra.mrb[0].mxu0 %v1464
    %v1675 = vpop.f32.mrb[0].mxu0
    %v1676 = vadd.f32 %v1511, %v1675
    %v1677 = vpop.f32.mrb[0].mxu0
    %v1678 = vpop.f32.mrb[0].mxu0
    %v1679 = vadd.f32 %v1511, %v1678
    %v1680 = vpop.f32.mrb[0].mxu0
    %1681 = vmatprep.mubr.bf16.mxu0 %v1467
    %1682 = vmatmul.mubr.bf16.gmra.mrb[0].mxu0 %v1466
    %v1683 = vpop.f32.mrb[0].mxu0
    %v1684 = vadd.f32 %v1511, %v1683
    %v1685 = vpop.f32.mrb[0].mxu0
    %v1686 = vpop.f32.mrb[0].mxu0
    %v1687 = vadd.f32 %v1511, %v1686
    %v1688 = vpop.f32.mrb[0].mxu0
    %1689 = vmatprep.mubr.bf16.mxu0 %v1469
    %1690 = vmatmul.mubr.bf16.gmra.mrb[0].mxu0 %v1468
    %v1691 = vpop.f32.mrb[0].mxu0
    %v1692 = vadd.f32 %v1511, %v1691
    %v1693 = vpop.f32.mrb[0].mxu0
    %v1694 = vpop.f32.mrb[0].mxu0
    %v1695 = vadd.f32 %v1511, %v1694
    %v1696 = vpop.f32.mrb[0].mxu0
    %1697 = vmatprep.mubr.bf16.mxu0 %v1471
    %1698 = vmatmul.mubr.bf16.gmra.mrb[0].mxu0 %v1470
    %v1699 = vpop.f32.mrb[0].mxu0
    %v1700 = vadd.f32 %v1511, %v1699
    %v1701 = vpop.f32.mrb[0].mxu0
    %v1702 = vpop.f32.mrb[0].mxu0
    %v1703 = vadd.f32 %v1511, %v1702
    %v1704 = vpop.f32.mrb[0].mxu0
    %1705 = vdwg.mxu0
    %v1706 = vmul.f32 %v1644, 0.1
    %v1707 = vmul.f32 %v1647, 0.1
    %v1708 = vmul.f32 %v1652, 0.1
    %v1709 = vmul.f32 %v1655, 0.1
    %v1710 = vmul.f32 %v1660, 0.1
    %v1711 = vmul.f32 %v1663, 0.1
    %v1712 = vmul.f32 %v1668, 0.1
    %v1713 = vmul.f32 %v1671, 0.1
    %v1714 = vmul.f32 %v1676, 0.1
    %v1715 = vmul.f32 %v1679, 0.1
    %v1716 = vmul.f32 %v1684, 0.1
    %v1717 = vmul.f32 %v1687, 0.1
    %v1718 = vmul.f32 %v1692, 0.1
    %v1719 = vmul.f32 %v1695, 0.1
    %v1720 = vmul.f32 %v1700, 0.1
    %v1721 = vmul.f32 %v1703, 0.1
    %v1722 = vmax.f32 %v1644, %v1706
    %v1723 = vmax.f32 %v1647, %v1707
    %v1724 = vmax.f32 %v1652, %v1708
    %v1725 = vmax.f32 %v1655, %v1709
    %v1726 = vmax.f32 %v1660, %v1710
    %v1727 = vmax.f32 %v1663, %v1711
    %v1728 = vmax.f32 %v1668, %v1712
    %v1729 = vmax.f32 %v1671, %v1713
    %v1730 = vmax.f32 %v1676, %v1714
    %v1731 = vmax.f32 %v1679, %v1715
    %v1732 = vmax.f32 %v1684, %v1716
    %v1733 = vmax.f32 %v1687, %v1717
    %v1734 = vmax.f32 %v1692, %v1718
    %v1735 = vmax.f32 %v1695, %v1719
    %v1736 = vmax.f32 %v1700, %v1720
    %v1737 = vmax.f32 %v1703, %v1721
    %v1738 = vpack.c.bf16 %v1723, %v1722
    %v1739 = vpack.c.bf16 %v1725, %v1724
    %v1740 = vpack.c.bf16 %v1727, %v1726
    %v1741 = vpack.c.bf16 %v1729, %v1728
    %v1742 = vpack.c.bf16 %v1731, %v1730
    %v1743 = vpack.c.bf16 %v1733, %v1732
    %v1744 = vpack.c.bf16 %v1735, %v1734
    %v1745 = vpack.c.bf16 %v1737, %v1736
    %s1746 = scalar_lea.vmem [#allocation5], 1792
    %v1747 = vld [vmem:[%s1746] sm:$0xf]
    %v1748 = vld [vmem:[%s1746 + $0x8] sm:$0xf]
    %v1749 = vld [vmem:[%s1746 + $0x10] sm:$0xf]
    %v1750 = vld [vmem:[%s1746 + $0x18] sm:$0xf]
    %v1751 = vld [vmem:[%s1746 + $0x20] sm:$0xf]
    %v1752 = vld [vmem:[%s1746 + $0x28] sm:$0xf]
    %v1753 = vld [vmem:[%s1746 + $0x30] sm:$0xf]
    %v1754 = vld [vmem:[%s1746 + $0x38] sm:$0xf]
    %v1755 = vld [vmem:[%s1746 + $0x40] sm:$0xf]
    %v1756 = vld [vmem:[%s1746 + $0x48] sm:$0xf]
    %v1757 = vld [vmem:[%s1746 + $0x50] sm:$0xf]
    %v1758 = vld [vmem:[%s1746 + $0x58] sm:$0xf]
    %v1759 = vld [vmem:[%s1746 + $0x60] sm:$0xf]
    %v1760 = vld [vmem:[%s1746 + $0x68] sm:$0xf]
    %v1761 = vld [vmem:[%s1746 + $0x70] sm:$0xf]
    %v1762 = vld [vmem:[%s1746 + $0x78] sm:$0xf]
    %s1763 = scalar_lea.vmem [#allocation7], 14
    %v1764 = vld [vmem:[%s1763] sm:$0x1]
    %v1766 = vlaneseq
    %v1767 = vshrl.u32 %v1766, 7
    %v1768 = vsub.s32 0, %v1767
    %v1769 = vrot.slane %v1764, %v1768
    %v1787 = vunpack.c.l.b16 %v1747
    %v1788 = vunpack.c.l.b16 %v1748
    %v1789 = vunpack.c.l.b16 %v1749
    %v1790 = vunpack.c.l.b16 %v1750
    %v1791 = vunpack.c.l.b16 %v1751
    %v1792 = vunpack.c.l.b16 %v1752
    %v1793 = vunpack.c.l.b16 %v1753
    %v1794 = vunpack.c.l.b16 %v1754
    %v1795 = vunpack.c.l.b16 %v1755
    %v1796 = vunpack.c.l.b16 %v1756
    %v1797 = vunpack.c.l.b16 %v1757
    %v1798 = vunpack.c.l.b16 %v1758
    %v1799 = vunpack.c.l.b16 %v1759
    %v1800 = vunpack.c.l.b16 %v1760
    %v1801 = vunpack.c.l.b16 %v1761
    %v1802 = vunpack.c.l.b16 %v1762
    %v1803 = vpack.c.b16 %v1788, %v1787
    %v1804 = vpack.c.b16 %v1790, %v1789
    %v1805 = vpack.c.b16 %v1792, %v1791
    %v1806 = vpack.c.b16 %v1794, %v1793
    %v1807 = vpack.c.b16 %v1796, %v1795
    %v1808 = vpack.c.b16 %v1798, %v1797
    %v1809 = vpack.c.b16 %v1800, %v1799
    %v1810 = vpack.c.b16 %v1802, %v1801
    %1819 = vmatprep.subr.bf16.mxu0 0
    %1820 = vmatpush1.bf16.msra.mxu0 %v1803
    %1821 = vmatprep.subr.bf16.mxu0 0
    %1822 = vmatpush1.bf16.msra.mxu0 %v1804
    %1823 = vmatprep.subr.bf16.mxu0 0
    %1824 = vmatpush1.bf16.msra.mxu0 %v1805
    %1825 = vmatprep.subr.bf16.mxu0 0
    %1826 = vmatpush1.bf16.msra.mxu0 %v1806
    %1827 = vmatprep.subr.bf16.mxu0 0
    %1828 = vmatpush1.bf16.msra.mxu0 %v1807
    %1829 = vmatprep.subr.bf16.mxu0 0
    %1830 = vmatpush1.bf16.msra.mxu0 %v1808
    %1831 = vmatprep.subr.bf16.mxu0 0
    %1832 = vmatpush1.bf16.msra.mxu0 %v1809
    %1833 = vmatprep.subr.bf16.mxu0 0
    %1834 = vmatpush1.bf16.msra.mxu0 %v1810
    %1835 = vmatprep.subr.bf16.mxu0 0
    %1836 = vmatpush1.bf16.msra.mxu0 0
    %1837 = vmatprep.subr.bf16.mxu0 0
    %1838 = vmatpush1.bf16.msra.mxu0 0
    %1839 = vmatprep.subr.bf16.mxu0 0
    %1840 = vmatpush1.bf16.msra.mxu0 0
    %1841 = vmatprep.subr.bf16.mxu0 0
    %1842 = vmatpush1.bf16.msra.mxu0 0
    %1843 = vmatprep.subr.bf16.mxu0 0
    %1844 = vmatpush1.bf16.msra.mxu0 0
    %1845 = vmatprep.subr.bf16.mxu0 0
    %1846 = vmatpush1.bf16.msra.mxu0 0
    %1847 = vmatprep.subr.bf16.mxu0 0
    %1848 = vmatpush1.bf16.msra.mxu0 0
    %1849 = vmatprep.subr.bf16.mxu0 0
    %1850 = vmatpush1.bf16.msra.mxu0 0
    %1851 = vmatprep.mubr.bf16.mxu0 0
    %1852 = vmatmul.mubr.bf16.gmra.mrb[0].mxu0 %v1738
    %v1853 = vpop.f32.mrb[0].mxu0
    %v1854 = vadd.f32 %v1769, %v1853
    %v1855 = vpop.f32.mrb[0].mxu0
    %v1856 = vpop.f32.mrb[0].mxu0
    %v1857 = vadd.f32 %v1769, %v1856
    %v1858 = vpop.f32.mrb[0].mxu0
    %1859 = vmatprep.mubr.bf16.mxu0 0
    %1860 = vmatmul.mubr.bf16.gmra.mrb[0].mxu0 %v1739
    %v1861 = vpop.f32.mrb[0].mxu0
    %v1862 = vadd.f32 %v1769, %v1861
    %v1863 = vpop.f32.mrb[0].mxu0
    %v1864 = vpop.f32.mrb[0].mxu0
    %v1865 = vadd.f32 %v1769, %v1864
    %v1866 = vpop.f32.mrb[0].mxu0
    %1867 = vmatprep.mubr.bf16.mxu0 0
    %1868 = vmatmul.mubr.bf16.gmra.mrb[0].mxu0 %v1740
    %v1869 = vpop.f32.mrb[0].mxu0
    %v1870 = vadd.f32 %v1769, %v1869
    %v1871 = vpop.f32.mrb[0].mxu0
    %v1872 = vpop.f32.mrb[0].mxu0
    %v1873 = vadd.f32 %v1769, %v1872
    %v1874 = vpop.f32.mrb[0].mxu0
    %1875 = vmatprep.mubr.bf16.mxu0 0
    %1876 = vmatmul.mubr.bf16.gmra.mrb[0].mxu0 %v1741
    %v1877 = vpop.f32.mrb[0].mxu0
    %v1878 = vadd.f32 %v1769, %v1877
    %v1879 = vpop.f32.mrb[0].mxu0
    %v1880 = vpop.f32.mrb[0].mxu0
    %v1881 = vadd.f32 %v1769, %v1880
    %v1882 = vpop.f32.mrb[0].mxu0
    %1883 = vmatprep.mubr.bf16.mxu0 0
    %1884 = vmatmul.mubr.bf16.gmra.mrb[0].mxu0 %v1742
    %v1885 = vpop.f32.mrb[0].mxu0
    %v1886 = vadd.f32 %v1769, %v1885
    %v1887 = vpop.f32.mrb[0].mxu0
    %v1888 = vpop.f32.mrb[0].mxu0
    %v1889 = vadd.f32 %v1769, %v1888
    %v1890 = vpop.f32.mrb[0].mxu0
    %1891 = vmatprep.mubr.bf16.mxu0 0
    %1892 = vmatmul.mubr.bf16.gmra.mrb[0].mxu0 %v1743
    %v1893 = vpop.f32.mrb[0].mxu0
    %v1894 = vadd.f32 %v1769, %v1893
    %v1895 = vpop.f32.mrb[0].mxu0
    %v1896 = vpop.f32.mrb[0].mxu0
    %v1897 = vadd.f32 %v1769, %v1896
    %v1898 = vpop.f32.mrb[0].mxu0
    %1899 = vmatprep.mubr.bf16.mxu0 0
    %1900 = vmatmul.mubr.bf16.gmra.mrb[0].mxu0 %v1744
    %v1901 = vpop.f32.mrb[0].mxu0
    %v1902 = vadd.f32 %v1769, %v1901
    %v1903 = vpop.f32.mrb[0].mxu0
    %v1904 = vpop.f32.mrb[0].mxu0
    %v1905 = vadd.f32 %v1769, %v1904
    %v1906 = vpop.f32.mrb[0].mxu0
    %1907 = vmatprep.mubr.bf16.mxu0 0
    %1908 = vmatmul.mubr.bf16.gmra.mrb[0].mxu0 %v1745
    %v1909 = vpop.f32.mrb[0].mxu0
    %v1910 = vadd.f32 %v1769, %v1909
    %v1911 = vpop.f32.mrb[0].mxu0
    %v1912 = vpop.f32.mrb[0].mxu0
    %v1913 = vadd.f32 %v1769, %v1912
    %v1914 = vpop.f32.mrb[0].mxu0
    %1915 = vdwg.mxu0
    %v1916 = vmul.f32 %v1854, 0.1
    %v1917 = vmul.f32 %v1857, 0.1
    %v1918 = vmul.f32 %v1862, 0.1
    %v1919 = vmul.f32 %v1865, 0.1
    %v1920 = vmul.f32 %v1870, 0.1
    %v1921 = vmul.f32 %v1873, 0.1
    %v1922 = vmul.f32 %v1878, 0.1
    %v1923 = vmul.f32 %v1881, 0.1
    %v1924 = vmul.f32 %v1886, 0.1
    %v1925 = vmul.f32 %v1889, 0.1
    %v1926 = vmul.f32 %v1894, 0.1
    %v1927 = vmul.f32 %v1897, 0.1
    %v1928 = vmul.f32 %v1902, 0.1
    %v1929 = vmul.f32 %v1905, 0.1
    %v1930 = vmul.f32 %v1910, 0.1
    %v1931 = vmul.f32 %v1913, 0.1
    %v1932 = vmax.f32 %v1854, %v1916
    %v1933 = vmax.f32 %v1857, %v1917
    %v1934 = vmax.f32 %v1862, %v1918
    %v1935 = vmax.f32 %v1865, %v1919
    %v1936 = vmax.f32 %v1870, %v1920
    %v1937 = vmax.f32 %v1873, %v1921
    %v1938 = vmax.f32 %v1878, %v1922
    %v1939 = vmax.f32 %v1881, %v1923
    %v1940 = vmax.f32 %v1886, %v1924
    %v1941 = vmax.f32 %v1889, %v1925
    %v1942 = vmax.f32 %v1894, %v1926
    %v1943 = vmax.f32 %v1897, %v1927
    %v1944 = vmax.f32 %v1902, %v1928
    %v1945 = vmax.f32 %v1905, %v1929
    %v1946 = vmax.f32 %v1910, %v1930
    %v1947 = vmax.f32 %v1913, %v1931
    %v1948 = vpack.c.bf16 %v1933, %v1932
    %v1949 = vpack.c.bf16 %v1935, %v1934
    %v1950 = vpack.c.bf16 %v1937, %v1936
    %v1951 = vpack.c.bf16 %v1939, %v1938
    %v1952 = vpack.c.bf16 %v1941, %v1940
    %v1953 = vpack.c.bf16 %v1943, %v1942
    %v1954 = vpack.c.bf16 %v1945, %v1944
    %v1955 = vpack.c.bf16 %v1947, %v1946
    %s1956 = scalar_lea.vmem [#allocation5], 2048
    %v1957 = vld [vmem:[%s1956] sm:$0xf]
    %v1958 = vld [vmem:[%s1956 + $0x8] sm:$0xf]
    %v1959 = vld [vmem:[%s1956 + $0x10] sm:$0xf]
    %v1960 = vld [vmem:[%s1956 + $0x18] sm:$0xf]
    %v1961 = vld [vmem:[%s1956 + $0x20] sm:$0xf]
    %v1962 = vld [vmem:[%s1956 + $0x28] sm:$0xf]
    %v1963 = vld [vmem:[%s1956 + $0x30] sm:$0xf]
    %v1964 = vld [vmem:[%s1956 + $0x38] sm:$0xf]
    %v1965 = vld [vmem:[%s1956 + $0x40] sm:$0xf]
    %v1966 = vld [vmem:[%s1956 + $0x48] sm:$0xf]
    %v1967 = vld [vmem:[%s1956 + $0x50] sm:$0xf]
    %v1968 = vld [vmem:[%s1956 + $0x58] sm:$0xf]
    %v1969 = vld [vmem:[%s1956 + $0x60] sm:$0xf]
    %v1970 = vld [vmem:[%s1956 + $0x68] sm:$0xf]
    %v1971 = vld [vmem:[%s1956 + $0x70] sm:$0xf]
    %v1972 = vld [vmem:[%s1956 + $0x78] sm:$0xf]
    %s1973 = scalar_lea.vmem [#allocation7], 16
    %v1974 = vld [vmem:[%s1973] sm:$0x1]
    %v1976 = vlaneseq
    %v1977 = vshrl.u32 %v1976, 7
    %v1978 = vsub.s32 0, %v1977
    %v1979 = vrot.slane %v1974, %v1978
    %v1997 = vunpack.c.l.b16 %v1957
    %v1998 = vunpack.c.l.b16 %v1958
    %v1999 = vunpack.c.l.b16 %v1959
    %v2000 = vunpack.c.l.b16 %v1960
    %v2001 = vunpack.c.l.b16 %v1961
    %v2002 = vunpack.c.l.b16 %v1962
    %v2003 = vunpack.c.l.b16 %v1963
    %v2004 = vunpack.c.l.b16 %v1964
    %v2005 = vunpack.c.l.b16 %v1965
    %v2006 = vunpack.c.l.b16 %v1966
    %v2007 = vunpack.c.l.b16 %v1967
    %v2008 = vunpack.c.l.b16 %v1968
    %v2009 = vunpack.c.l.b16 %v1969
    %v2010 = vunpack.c.l.b16 %v1970
    %v2011 = vunpack.c.l.b16 %v1971
    %v2012 = vunpack.c.l.b16 %v1972
    %v2013 = vpack.c.b16 %v1998, %v1997
    %v2014 = vpack.c.b16 %v2000, %v1999
    %v2015 = vpack.c.b16 %v2002, %v2001
    %v2016 = vpack.c.b16 %v2004, %v2003
    %v2017 = vpack.c.b16 %v2006, %v2005
    %v2018 = vpack.c.b16 %v2008, %v2007
    %v2019 = vpack.c.b16 %v2010, %v2009
    %v2020 = vpack.c.b16 %v2012, %v2011
    %2029 = vmatprep.subr.bf16.mxu0 0
    %2030 = vmatpush1.bf16.msra.mxu0 %v2013
    %2031 = vmatprep.subr.bf16.mxu0 0
    %2032 = vmatpush1.bf16.msra.mxu0 %v2014
    %2033 = vmatprep.subr.bf16.mxu0 0
    %2034 = vmatpush1.bf16.msra.mxu0 %v2015
    %2035 = vmatprep.subr.bf16.mxu0 0
    %2036 = vmatpush1.bf16.msra.mxu0 %v2016
    %2037 = vmatprep.subr.bf16.mxu0 0
    %2038 = vmatpush1.bf16.msra.mxu0 %v2017
    %2039 = vmatprep.subr.bf16.mxu0 0
    %2040 = vmatpush1.bf16.msra.mxu0 %v2018
    %2041 = vmatprep.subr.bf16.mxu0 0
    %2042 = vmatpush1.bf16.msra.mxu0 %v2019
    %2043 = vmatprep.subr.bf16.mxu0 0
    %2044 = vmatpush1.bf16.msra.mxu0 %v2020
    %2045 = vmatprep.subr.bf16.mxu0 0
    %2046 = vmatpush1.bf16.msra.mxu0 0
    %2047 = vmatprep.subr.bf16.mxu0 0
    %2048 = vmatpush1.bf16.msra.mxu0 0
    %2049 = vmatprep.subr.bf16.mxu0 0
    %2050 = vmatpush1.bf16.msra.mxu0 0
    %2051 = vmatprep.subr.bf16.mxu0 0
    %2052 = vmatpush1.bf16.msra.mxu0 0
    %2053 = vmatprep.subr.bf16.mxu0 0
    %2054 = vmatpush1.bf16.msra.mxu0 0
    %2055 = vmatprep.subr.bf16.mxu0 0
    %2056 = vmatpush1.bf16.msra.mxu0 0
    %2057 = vmatprep.subr.bf16.mxu0 0
    %2058 = vmatpush1.bf16.msra.mxu0 0
    %2059 = vmatprep.subr.bf16.mxu0 0
    %2060 = vmatpush1.bf16.msra.mxu0 0
    %2061 = vmatprep.mubr.bf16.mxu0 0
    %2062 = vmatmul.mubr.bf16.gmra.mrb[0].mxu0 %v1948
    %v2063 = vpop.f32.mrb[0].mxu0
    %v2064 = vadd.f32 %v1979, %v2063
    %v2065 = vpop.f32.mrb[0].mxu0
    %v2066 = vpop.f32.mrb[0].mxu0
    %v2067 = vadd.f32 %v1979, %v2066
    %v2068 = vpop.f32.mrb[0].mxu0
    %2069 = vmatprep.mubr.bf16.mxu0 0
    %2070 = vmatmul.mubr.bf16.gmra.mrb[0].mxu0 %v1949
    %v2071 = vpop.f32.mrb[0].mxu0
    %v2072 = vadd.f32 %v1979, %v2071
    %v2073 = vpop.f32.mrb[0].mxu0
    %v2074 = vpop.f32.mrb[0].mxu0
    %v2075 = vadd.f32 %v1979, %v2074
    %v2076 = vpop.f32.mrb[0].mxu0
    %2077 = vmatprep.mubr.bf16.mxu0 0
    %2078 = vmatmul.mubr.bf16.gmra.mrb[0].mxu0 %v1950
    %v2079 = vpop.f32.mrb[0].mxu0
    %v2080 = vadd.f32 %v1979, %v2079
    %v2081 = vpop.f32.mrb[0].mxu0
    %v2082 = vpop.f32.mrb[0].mxu0
    %v2083 = vadd.f32 %v1979, %v2082
    %v2084 = vpop.f32.mrb[0].mxu0
    %2085 = vmatprep.mubr.bf16.mxu0 0
    %2086 = vmatmul.mubr.bf16.gmra.mrb[0].mxu0 %v1951
    %v2087 = vpop.f32.mrb[0].mxu0
    %v2088 = vadd.f32 %v1979, %v2087
    %v2089 = vpop.f32.mrb[0].mxu0
    %v2090 = vpop.f32.mrb[0].mxu0
    %v2091 = vadd.f32 %v1979, %v2090
    %v2092 = vpop.f32.mrb[0].mxu0
    %2093 = vmatprep.mubr.bf16.mxu0 0
    %2094 = vmatmul.mubr.bf16.gmra.mrb[0].mxu0 %v1952
    %v2095 = vpop.f32.mrb[0].mxu0
    %v2096 = vadd.f32 %v1979, %v2095
    %v2097 = vpop.f32.mrb[0].mxu0
    %v2098 = vpop.f32.mrb[0].mxu0
    %v2099 = vadd.f32 %v1979, %v2098
    %v2100 = vpop.f32.mrb[0].mxu0
    %2101 = vmatprep.mubr.bf16.mxu0 0
    %2102 = vmatmul.mubr.bf16.gmra.mrb[0].mxu0 %v1953
    %v2103 = vpop.f32.mrb[0].mxu0
    %v2104 = vadd.f32 %v1979, %v2103
    %v2105 = vpop.f32.mrb[0].mxu0
    %v2106 = vpop.f32.mrb[0].mxu0
    %v2107 = vadd.f32 %v1979, %v2106
    %v2108 = vpop.f32.mrb[0].mxu0
    %2109 = vmatprep.mubr.bf16.mxu0 0
    %2110 = vmatmul.mubr.bf16.gmra.mrb[0].mxu0 %v1954
    %v2111 = vpop.f32.mrb[0].mxu0
    %v2112 = vadd.f32 %v1979, %v2111
    %v2113 = vpop.f32.mrb[0].mxu0
    %v2114 = vpop.f32.mrb[0].mxu0
    %v2115 = vadd.f32 %v1979, %v2114
    %v2116 = vpop.f32.mrb[0].mxu0
    %2117 = vmatprep.mubr.bf16.mxu0 0
    %2118 = vmatmul.mubr.bf16.gmra.mrb[0].mxu0 %v1955
    %v2119 = vpop.f32.mrb[0].mxu0
    %v2120 = vadd.f32 %v1979, %v2119
    %v2121 = vpop.f32.mrb[0].mxu0
    %v2122 = vpop.f32.mrb[0].mxu0
    %v2123 = vadd.f32 %v1979, %v2122
    %v2124 = vpop.f32.mrb[0].mxu0
    %2125 = vdwg.mxu0
    %v2126 = vmul.f32 %v2064, 0.1
    %v2127 = vmul.f32 %v2067, 0.1
    %v2128 = vmul.f32 %v2072, 0.1
    %v2129 = vmul.f32 %v2075, 0.1
    %v2130 = vmul.f32 %v2080, 0.1
    %v2131 = vmul.f32 %v2083, 0.1
    %v2132 = vmul.f32 %v2088, 0.1
    %v2133 = vmul.f32 %v2091, 0.1
    %v2134 = vmul.f32 %v2096, 0.1
    %v2135 = vmul.f32 %v2099, 0.1
    %v2136 = vmul.f32 %v2104, 0.1
    %v2137 = vmul.f32 %v2107, 0.1
    %v2138 = vmul.f32 %v2112, 0.1
    %v2139 = vmul.f32 %v2115, 0.1
    %v2140 = vmul.f32 %v2120, 0.1
    %v2141 = vmul.f32 %v2123, 0.1
    %v2142 = vmax.f32 %v2064, %v2126
    %v2143 = vmax.f32 %v2067, %v2127
    %v2144 = vmax.f32 %v2072, %v2128
    %v2145 = vmax.f32 %v2075, %v2129
    %v2146 = vmax.f32 %v2080, %v2130
    %v2147 = vmax.f32 %v2083, %v2131
    %v2148 = vmax.f32 %v2088, %v2132
    %v2149 = vmax.f32 %v2091, %v2133
    %v2150 = vmax.f32 %v2096, %v2134
    %v2151 = vmax.f32 %v2099, %v2135
    %v2152 = vmax.f32 %v2104, %v2136
    %v2153 = vmax.f32 %v2107, %v2137
    %v2154 = vmax.f32 %v2112, %v2138
    %v2155 = vmax.f32 %v2115, %v2139
    %v2156 = vmax.f32 %v2120, %v2140
    %v2157 = vmax.f32 %v2123, %v2141
    %v2158 = vpack.c.bf16 %v2143, %v2142
    %v2159 = vpack.c.bf16 %v2145, %v2144
    %v2160 = vpack.c.bf16 %v2147, %v2146
    %v2161 = vpack.c.bf16 %v2149, %v2148
    %v2162 = vpack.c.bf16 %v2151, %v2150
    %v2163 = vpack.c.bf16 %v2153, %v2152
    %v2164 = vpack.c.bf16 %v2155, %v2154
    %v2165 = vpack.c.bf16 %v2157, %v2156
    %s2166 = scalar_lea.vmem [#allocation5], 2304
    %v2167 = vld [vmem:[%s2166] sm:$0xf]
    %v2168 = vld [vmem:[%s2166 + $0x8] sm:$0xf]
    %v2169 = vld [vmem:[%s2166 + $0x10] sm:$0xf]
    %v2170 = vld [vmem:[%s2166 + $0x18] sm:$0xf]
    %v2171 = vld [vmem:[%s2166 + $0x20] sm:$0xf]
    %v2172 = vld [vmem:[%s2166 + $0x28] sm:$0xf]
    %v2173 = vld [vmem:[%s2166 + $0x30] sm:$0xf]
    %v2174 = vld [vmem:[%s2166 + $0x38] sm:$0xf]
    %v2175 = vld [vmem:[%s2166 + $0x40] sm:$0xf]
    %v2176 = vld [vmem:[%s2166 + $0x48] sm:$0xf]
    %v2177 = vld [vmem:[%s2166 + $0x50] sm:$0xf]
    %v2178 = vld [vmem:[%s2166 + $0x58] sm:$0xf]
    %v2179 = vld [vmem:[%s2166 + $0x60] sm:$0xf]
    %v2180 = vld [vmem:[%s2166 + $0x68] sm:$0xf]
    %v2181 = vld [vmem:[%s2166 + $0x70] sm:$0xf]
    %v2182 = vld [vmem:[%s2166 + $0x78] sm:$0xf]
    %s2183 = scalar_lea.vmem [#allocation7], 18
    %v2184 = vld [vmem:[%s2183] sm:$0x1]
    %v2186 = vlaneseq
    %v2187 = vshrl.u32 %v2186, 7
    %v2188 = vsub.s32 0, %v2187
    %v2189 = vrot.slane %v2184, %v2188
    %v2207 = vunpack.c.l.b16 %v2167
    %v2208 = vunpack.c.l.b16 %v2168
    %v2209 = vunpack.c.l.b16 %v2169
    %v2210 = vunpack.c.l.b16 %v2170
    %v2211 = vunpack.c.l.b16 %v2171
    %v2212 = vunpack.c.l.b16 %v2172
    %v2213 = vunpack.c.l.b16 %v2173
    %v2214 = vunpack.c.l.b16 %v2174
    %v2215 = vunpack.c.l.b16 %v2175
    %v2216 = vunpack.c.l.b16 %v2176
    %v2217 = vunpack.c.l.b16 %v2177
    %v2218 = vunpack.c.l.b16 %v2178
    %v2219 = vunpack.c.l.b16 %v2179
    %v2220 = vunpack.c.l.b16 %v2180
    %v2221 = vunpack.c.l.b16 %v2181
    %v2222 = vunpack.c.l.b16 %v2182
    %v2223 = vpack.c.b16 %v2208, %v2207
    %v2224 = vpack.c.b16 %v2210, %v2209
    %v2225 = vpack.c.b16 %v2212, %v2211
    %v2226 = vpack.c.b16 %v2214, %v2213
    %v2227 = vpack.c.b16 %v2216, %v2215
    %v2228 = vpack.c.b16 %v2218, %v2217
    %v2229 = vpack.c.b16 %v2220, %v2219
    %v2230 = vpack.c.b16 %v2222, %v2221
    %2239 = vmatprep.subr.bf16.mxu0 0
    %2240 = vmatpush1.bf16.msra.mxu0 %v2223
    %2241 = vmatprep.subr.bf16.mxu0 0
    %2242 = vmatpush1.bf16.msra.mxu0 %v2224
    %2243 = vmatprep.subr.bf16.mxu0 0
    %2244 = vmatpush1.bf16.msra.mxu0 %v2225
    %2245 = vmatprep.subr.bf16.mxu0 0
    %2246 = vmatpush1.bf16.msra.mxu0 %v2226
    %2247 = vmatprep.subr.bf16.mxu0 0
    %2248 = vmatpush1.bf16.msra.mxu0 %v2227
    %2249 = vmatprep.subr.bf16.mxu0 0
    %2250 = vmatpush1.bf16.msra.mxu0 %v2228
    %2251 = vmatprep.subr.bf16.mxu0 0
    %2252 = vmatpush1.bf16.msra.mxu0 %v2229
    %2253 = vmatprep.subr.bf16.mxu0 0
    %2254 = vmatpush1.bf16.msra.mxu0 %v2230
    %2255 = vmatprep.subr.bf16.mxu0 0
    %2256 = vmatpush1.bf16.msra.mxu0 0
    %2257 = vmatprep.subr.bf16.mxu0 0
    %2258 = vmatpush1.bf16.msra.mxu0 0
    %2259 = vmatprep.subr.bf16.mxu0 0
    %2260 = vmatpush1.bf16.msra.mxu0 0
    %2261 = vmatprep.subr.bf16.mxu0 0
    %2262 = vmatpush1.bf16.msra.mxu0 0
    %2263 = vmatprep.subr.bf16.mxu0 0
    %2264 = vmatpush1.bf16.msra.mxu0 0
    %2265 = vmatprep.subr.bf16.mxu0 0
    %2266 = vmatpush1.bf16.msra.mxu0 0
    %2267 = vmatprep.subr.bf16.mxu0 0
    %2268 = vmatpush1.bf16.msra.mxu0 0
    %2269 = vmatprep.subr.bf16.mxu0 0
    %2270 = vmatpush1.bf16.msra.mxu0 0
    %2271 = vmatprep.mubr.bf16.mxu0 0
    %2272 = vmatmul.mubr.bf16.gmra.mrb[0].mxu0 %v2158
    %v2273 = vpop.f32.mrb[0].mxu0
    %v2274 = vadd.f32 %v2189, %v2273
    %v2275 = vpop.f32.mrb[0].mxu0
    %v2276 = vpop.f32.mrb[0].mxu0
    %v2277 = vadd.f32 %v2189, %v2276
    %v2278 = vpop.f32.mrb[0].mxu0
    %2279 = vmatprep.mubr.bf16.mxu0 0
    %2280 = vmatmul.mubr.bf16.gmra.mrb[0].mxu0 %v2159
    %v2281 = vpop.f32.mrb[0].mxu0
    %v2282 = vadd.f32 %v2189, %v2281
    %v2283 = vpop.f32.mrb[0].mxu0
    %v2284 = vpop.f32.mrb[0].mxu0
    %v2285 = vadd.f32 %v2189, %v2284
    %v2286 = vpop.f32.mrb[0].mxu0
    %2287 = vmatprep.mubr.bf16.mxu0 0
    %2288 = vmatmul.mubr.bf16.gmra.mrb[0].mxu0 %v2160
    %v2289 = vpop.f32.mrb[0].mxu0
    %v2290 = vadd.f32 %v2189, %v2289
    %v2291 = vpop.f32.mrb[0].mxu0
    %v2292 = vpop.f32.mrb[0].mxu0
    %v2293 = vadd.f32 %v2189, %v2292
    %v2294 = vpop.f32.mrb[0].mxu0
    %2295 = vmatprep.mubr.bf16.mxu0 0
    %2296 = vmatmul.mubr.bf16.gmra.mrb[0].mxu0 %v2161
    %v2297 = vpop.f32.mrb[0].mxu0
    %v2298 = vadd.f32 %v2189, %v2297
    %v2299 = vpop.f32.mrb[0].mxu0
    %v2300 = vpop.f32.mrb[0].mxu0
    %v2301 = vadd.f32 %v2189, %v2300
    %v2302 = vpop.f32.mrb[0].mxu0
    %2303 = vmatprep.mubr.bf16.mxu0 0
    %2304 = vmatmul.mubr.bf16.gmra.mrb[0].mxu0 %v2162
    %v2305 = vpop.f32.mrb[0].mxu0
    %v2306 = vadd.f32 %v2189, %v2305
    %v2307 = vpop.f32.mrb[0].mxu0
    %v2308 = vpop.f32.mrb[0].mxu0
    %v2309 = vadd.f32 %v2189, %v2308
    %v2310 = vpop.f32.mrb[0].mxu0
    %2311 = vmatprep.mubr.bf16.mxu0 0
    %2312 = vmatmul.mubr.bf16.gmra.mrb[0].mxu0 %v2163
    %v2313 = vpop.f32.mrb[0].mxu0
    %v2314 = vadd.f32 %v2189, %v2313
    %v2315 = vpop.f32.mrb[0].mxu0
    %v2316 = vpop.f32.mrb[0].mxu0
    %v2317 = vadd.f32 %v2189, %v2316
    %v2318 = vpop.f32.mrb[0].mxu0
    %2319 = vmatprep.mubr.bf16.mxu0 0
    %2320 = vmatmul.mubr.bf16.gmra.mrb[0].mxu0 %v2164
    %v2321 = vpop.f32.mrb[0].mxu0
    %v2322 = vadd.f32 %v2189, %v2321
    %v2323 = vpop.f32.mrb[0].mxu0
    %v2324 = vpop.f32.mrb[0].mxu0
    %v2325 = vadd.f32 %v2189, %v2324
    %v2326 = vpop.f32.mrb[0].mxu0
    %2327 = vmatprep.mubr.bf16.mxu0 0
    %2328 = vmatmul.mubr.bf16.gmra.mrb[0].mxu0 %v2165
    %v2329 = vpop.f32.mrb[0].mxu0
    %v2330 = vadd.f32 %v2189, %v2329
    %v2331 = vpop.f32.mrb[0].mxu0
    %v2332 = vpop.f32.mrb[0].mxu0
    %v2333 = vadd.f32 %v2189, %v2332
    %v2334 = vpop.f32.mrb[0].mxu0
    %2335 = vdwg.mxu0
    %v2336 = vmul.f32 %v2274, 0.1
    %v2337 = vmul.f32 %v2277, 0.1
    %v2338 = vmul.f32 %v2282, 0.1
    %v2339 = vmul.f32 %v2285, 0.1
    %v2340 = vmul.f32 %v2290, 0.1
    %v2341 = vmul.f32 %v2293, 0.1
    %v2342 = vmul.f32 %v2298, 0.1
    %v2343 = vmul.f32 %v2301, 0.1
    %v2344 = vmul.f32 %v2306, 0.1
    %v2345 = vmul.f32 %v2309, 0.1
    %v2346 = vmul.f32 %v2314, 0.1
    %v2347 = vmul.f32 %v2317, 0.1
    %v2348 = vmul.f32 %v2322, 0.1
    %v2349 = vmul.f32 %v2325, 0.1
    %v2350 = vmul.f32 %v2330, 0.1
    %v2351 = vmul.f32 %v2333, 0.1
    %v2352 = vmax.f32 %v2274, %v2336
    %v2353 = vmax.f32 %v2277, %v2337
    %v2354 = vmax.f32 %v2282, %v2338
    %v2355 = vmax.f32 %v2285, %v2339
    %v2356 = vmax.f32 %v2290, %v2340
    %v2357 = vmax.f32 %v2293, %v2341
    %v2358 = vmax.f32 %v2298, %v2342
    %v2359 = vmax.f32 %v2301, %v2343
    %v2360 = vmax.f32 %v2306, %v2344
    %v2361 = vmax.f32 %v2309, %v2345
    %v2362 = vmax.f32 %v2314, %v2346
    %v2363 = vmax.f32 %v2317, %v2347
    %v2364 = vmax.f32 %v2322, %v2348
    %v2365 = vmax.f32 %v2325, %v2349
    %v2366 = vmax.f32 %v2330, %v2350
    %v2367 = vmax.f32 %v2333, %v2351
    %v2368 = vpack.c.bf16 %v2353, %v2352
    %v2369 = vpack.c.bf16 %v2355, %v2354
    %v2370 = vpack.c.bf16 %v2357, %v2356
    %v2371 = vpack.c.bf16 %v2359, %v2358
    %v2372 = vpack.c.bf16 %v2361, %v2360
    %v2373 = vpack.c.bf16 %v2363, %v2362
    %v2374 = vpack.c.bf16 %v2365, %v2364
    %v2375 = vpack.c.bf16 %v2367, %v2366
    %s2376 = scalar_lea.vmem [#allocation5], 2560
    %v2377 = vld [vmem:[%s2376] sm:$0xf]
    %v2378 = vld [vmem:[%s2376 + $0x8] sm:$0xf]
    %v2379 = vld [vmem:[%s2376 + $0x10] sm:$0xf]
    %v2380 = vld [vmem:[%s2376 + $0x18] sm:$0xf]
    %v2381 = vld [vmem:[%s2376 + $0x20] sm:$0xf]
    %v2382 = vld [vmem:[%s2376 + $0x28] sm:$0xf]
    %v2383 = vld [vmem:[%s2376 + $0x30] sm:$0xf]
    %v2384 = vld [vmem:[%s2376 + $0x38] sm:$0xf]
    %v2385 = vld [vmem:[%s2376 + $0x40] sm:$0xf]
    %v2386 = vld [vmem:[%s2376 + $0x48] sm:$0xf]
    %v2387 = vld [vmem:[%s2376 + $0x50] sm:$0xf]
    %v2388 = vld [vmem:[%s2376 + $0x58] sm:$0xf]
    %v2389 = vld [vmem:[%s2376 + $0x60] sm:$0xf]
    %v2390 = vld [vmem:[%s2376 + $0x68] sm:$0xf]
    %v2391 = vld [vmem:[%s2376 + $0x70] sm:$0xf]
    %v2392 = vld [vmem:[%s2376 + $0x78] sm:$0xf]
    %s2393 = scalar_lea.vmem [#allocation7], 20
    %v2394 = vld [vmem:[%s2393] sm:$0x1]
    %v2396 = vlaneseq
    %v2397 = vshrl.u32 %v2396, 7
    %v2398 = vsub.s32 0, %v2397
    %v2399 = vrot.slane %v2394, %v2398
    %v2417 = vunpack.c.l.b16 %v2377
    %v2418 = vunpack.c.l.b16 %v2378
    %v2419 = vunpack.c.l.b16 %v2379
    %v2420 = vunpack.c.l.b16 %v2380
    %v2421 = vunpack.c.l.b16 %v2381
    %v2422 = vunpack.c.l.b16 %v2382
    %v2423 = vunpack.c.l.b16 %v2383
    %v2424 = vunpack.c.l.b16 %v2384
    %v2425 = vunpack.c.l.b16 %v2385
    %v2426 = vunpack.c.l.b16 %v2386
    %v2427 = vunpack.c.l.b16 %v2387
    %v2428 = vunpack.c.l.b16 %v2388
    %v2429 = vunpack.c.l.b16 %v2389
    %v2430 = vunpack.c.l.b16 %v2390
    %v2431 = vunpack.c.l.b16 %v2391
    %v2432 = vunpack.c.l.b16 %v2392
    %v2433 = vpack.c.b16 %v2418, %v2417
    %v2434 = vpack.c.b16 %v2420, %v2419
    %v2435 = vpack.c.b16 %v2422, %v2421
    %v2436 = vpack.c.b16 %v2424, %v2423
    %v2437 = vpack.c.b16 %v2426, %v2425
    %v2438 = vpack.c.b16 %v2428, %v2427
    %v2439 = vpack.c.b16 %v2430, %v2429
    %v2440 = vpack.c.b16 %v2432, %v2431
    %2449 = vmatprep.subr.bf16.mxu0 0
    %2450 = vmatpush1.bf16.msra.mxu0 %v2433
    %2451 = vmatprep.subr.bf16.mxu0 0
    %2452 = vmatpush1.bf16.msra.mxu0 %v2434
    %2453 = vmatprep.subr.bf16.mxu0 0
    %2454 = vmatpush1.bf16.msra.mxu0 %v2435
    %2455 = vmatprep.subr.bf16.mxu0 0
    %2456 = vmatpush1.bf16.msra.mxu0 %v2436
    %2457 = vmatprep.subr.bf16.mxu0 0
    %2458 = vmatpush1.bf16.msra.mxu0 %v2437
    %2459 = vmatprep.subr.bf16.mxu0 0
    %2460 = vmatpush1.bf16.msra.mxu0 %v2438
    %2461 = vmatprep.subr.bf16.mxu0 0
    %2462 = vmatpush1.bf16.msra.mxu0 %v2439
    %2463 = vmatprep.subr.bf16.mxu0 0
    %2464 = vmatpush1.bf16.msra.mxu0 %v2440
    %2465 = vmatprep.subr.bf16.mxu0 0
    %2466 = vmatpush1.bf16.msra.mxu0 0
    %2467 = vmatprep.subr.bf16.mxu0 0
    %2468 = vmatpush1.bf16.msra.mxu0 0
    %2469 = vmatprep.subr.bf16.mxu0 0
    %2470 = vmatpush1.bf16.msra.mxu0 0
    %2471 = vmatprep.subr.bf16.mxu0 0
    %2472 = vmatpush1.bf16.msra.mxu0 0
    %2473 = vmatprep.subr.bf16.mxu0 0
    %2474 = vmatpush1.bf16.msra.mxu0 0
    %2475 = vmatprep.subr.bf16.mxu0 0
    %2476 = vmatpush1.bf16.msra.mxu0 0
    %2477 = vmatprep.subr.bf16.mxu0 0
    %2478 = vmatpush1.bf16.msra.mxu0 0
    %2479 = vmatprep.subr.bf16.mxu0 0
    %2480 = vmatpush1.bf16.msra.mxu0 0
    %2481 = vmatprep.mubr.bf16.mxu0 0
    %2482 = vmatmul.mubr.bf16.gmra.mrb[0].mxu0 %v2368
    %v2483 = vpop.f32.mrb[0].mxu0
    %v2484 = vadd.f32 %v2399, %v2483
    %v2485 = vpop.f32.mrb[0].mxu0
    %v2486 = vpop.f32.mrb[0].mxu0
    %v2487 = vadd.f32 %v2399, %v2486
    %v2488 = vpop.f32.mrb[0].mxu0
    %2489 = vmatprep.mubr.bf16.mxu0 0
    %2490 = vmatmul.mubr.bf16.gmra.mrb[0].mxu0 %v2369
    %v2491 = vpop.f32.mrb[0].mxu0
    %v2492 = vadd.f32 %v2399, %v2491
    %v2493 = vpop.f32.mrb[0].mxu0
    %v2494 = vpop.f32.mrb[0].mxu0
    %v2495 = vadd.f32 %v2399, %v2494
    %v2496 = vpop.f32.mrb[0].mxu0
    %2497 = vmatprep.mubr.bf16.mxu0 0
    %2498 = vmatmul.mubr.bf16.gmra.mrb[0].mxu0 %v2370
    %v2499 = vpop.f32.mrb[0].mxu0
    %v2500 = vadd.f32 %v2399, %v2499
    %v2501 = vpop.f32.mrb[0].mxu0
    %v2502 = vpop.f32.mrb[0].mxu0
    %v2503 = vadd.f32 %v2399, %v2502
    %v2504 = vpop.f32.mrb[0].mxu0
    %2505 = vmatprep.mubr.bf16.mxu0 0
    %2506 = vmatmul.mubr.bf16.gmra.mrb[0].mxu0 %v2371
    %v2507 = vpop.f32.mrb[0].mxu0
    %v2508 = vadd.f32 %v2399, %v2507
    %v2509 = vpop.f32.mrb[0].mxu0
    %v2510 = vpop.f32.mrb[0].mxu0
    %v2511 = vadd.f32 %v2399, %v2510
    %v2512 = vpop.f32.mrb[0].mxu0
    %2513 = vmatprep.mubr.bf16.mxu0 0
    %2514 = vmatmul.mubr.bf16.gmra.mrb[0].mxu0 %v2372
    %v2515 = vpop.f32.mrb[0].mxu0
    %v2516 = vadd.f32 %v2399, %v2515
    %v2517 = vpop.f32.mrb[0].mxu0
    %v2518 = vpop.f32.mrb[0].mxu0
    %v2519 = vadd.f32 %v2399, %v2518
    %v2520 = vpop.f32.mrb[0].mxu0
    %2521 = vmatprep.mubr.bf16.mxu0 0
    %2522 = vmatmul.mubr.bf16.gmra.mrb[0].mxu0 %v2373
    %v2523 = vpop.f32.mrb[0].mxu0
    %v2524 = vadd.f32 %v2399, %v2523
    %v2525 = vpop.f32.mrb[0].mxu0
    %v2526 = vpop.f32.mrb[0].mxu0
    %v2527 = vadd.f32 %v2399, %v2526
    %v2528 = vpop.f32.mrb[0].mxu0
    %2529 = vmatprep.mubr.bf16.mxu0 0
    %2530 = vmatmul.mubr.bf16.gmra.mrb[0].mxu0 %v2374
    %v2531 = vpop.f32.mrb[0].mxu0
    %v2532 = vadd.f32 %v2399, %v2531
    %v2533 = vpop.f32.mrb[0].mxu0
    %v2534 = vpop.f32.mrb[0].mxu0
    %v2535 = vadd.f32 %v2399, %v2534
    %v2536 = vpop.f32.mrb[0].mxu0
    %2537 = vmatprep.mubr.bf16.mxu0 0
    %2538 = vmatmul.mubr.bf16.gmra.mrb[0].mxu0 %v2375
    %v2539 = vpop.f32.mrb[0].mxu0
    %v2540 = vadd.f32 %v2399, %v2539
    %v2541 = vpop.f32.mrb[0].mxu0
    %v2542 = vpop.f32.mrb[0].mxu0
    %v2543 = vadd.f32 %v2399, %v2542
    %v2544 = vpop.f32.mrb[0].mxu0
    %2545 = vdwg.mxu0
    %v2546 = vmul.f32 %v2484, 0.1
    %v2547 = vmul.f32 %v2487, 0.1
    %v2548 = vmul.f32 %v2492, 0.1
    %v2549 = vmul.f32 %v2495, 0.1
    %v2550 = vmul.f32 %v2500, 0.1
    %v2551 = vmul.f32 %v2503, 0.1
    %v2552 = vmul.f32 %v2508, 0.1
    %v2553 = vmul.f32 %v2511, 0.1
    %v2554 = vmul.f32 %v2516, 0.1
    %v2555 = vmul.f32 %v2519, 0.1
    %v2556 = vmul.f32 %v2524, 0.1
    %v2557 = vmul.f32 %v2527, 0.1
    %v2558 = vmul.f32 %v2532, 0.1
    %v2559 = vmul.f32 %v2535, 0.1
    %v2560 = vmul.f32 %v2540, 0.1
    %v2561 = vmul.f32 %v2543, 0.1
    %v2562 = vmax.f32 %v2484, %v2546
    %v2563 = vmax.f32 %v2487, %v2547
    %v2564 = vmax.f32 %v2492, %v2548
    %v2565 = vmax.f32 %v2495, %v2549
    %v2566 = vmax.f32 %v2500, %v2550
    %v2567 = vmax.f32 %v2503, %v2551
    %v2568 = vmax.f32 %v2508, %v2552
    %v2569 = vmax.f32 %v2511, %v2553
    %v2570 = vmax.f32 %v2516, %v2554
    %v2571 = vmax.f32 %v2519, %v2555
    %v2572 = vmax.f32 %v2524, %v2556
    %v2573 = vmax.f32 %v2527, %v2557
    %v2574 = vmax.f32 %v2532, %v2558
    %v2575 = vmax.f32 %v2535, %v2559
    %v2576 = vmax.f32 %v2540, %v2560
    %v2577 = vmax.f32 %v2543, %v2561
    %v2578 = vpack.c.bf16 %v2563, %v2562
    %v2579 = vpack.c.bf16 %v2565, %v2564
    %v2580 = vpack.c.bf16 %v2567, %v2566
    %v2581 = vpack.c.bf16 %v2569, %v2568
    %v2582 = vpack.c.bf16 %v2571, %v2570
    %v2583 = vpack.c.bf16 %v2573, %v2572
    %v2584 = vpack.c.bf16 %v2575, %v2574
    %v2585 = vpack.c.bf16 %v2577, %v2576
    %s2586 = scalar_lea.vmem [#allocation5], 2816
    %v2587 = vld [vmem:[%s2586] sm:$0xf]
    %v2588 = vld [vmem:[%s2586 + $0x8] sm:$0xf]
    %v2589 = vld [vmem:[%s2586 + $0x10] sm:$0xf]
    %v2590 = vld [vmem:[%s2586 + $0x18] sm:$0xf]
    %v2591 = vld [vmem:[%s2586 + $0x20] sm:$0xf]
    %v2592 = vld [vmem:[%s2586 + $0x28] sm:$0xf]
    %v2593 = vld [vmem:[%s2586 + $0x30] sm:$0xf]
    %v2594 = vld [vmem:[%s2586 + $0x38] sm:$0xf]
    %v2595 = vld [vmem:[%s2586 + $0x40] sm:$0xf]
    %v2596 = vld [vmem:[%s2586 + $0x48] sm:$0xf]
    %v2597 = vld [vmem:[%s2586 + $0x50] sm:$0xf]
    %v2598 = vld [vmem:[%s2586 + $0x58] sm:$0xf]
    %v2599 = vld [vmem:[%s2586 + $0x60] sm:$0xf]
    %v2600 = vld [vmem:[%s2586 + $0x68] sm:$0xf]
    %v2601 = vld [vmem:[%s2586 + $0x70] sm:$0xf]
    %v2602 = vld [vmem:[%s2586 + $0x78] sm:$0xf]
    %s2603 = scalar_lea.vmem [#allocation7], 22
    %v2604 = vld [vmem:[%s2603] sm:$0x1]
    %v2606 = vlaneseq
    %v2607 = vshrl.u32 %v2606, 7
    %v2608 = vsub.s32 0, %v2607
    %v2609 = vrot.slane %v2604, %v2608
    %v2627 = vunpack.c.l.b16 %v2587
    %v2628 = vunpack.c.l.b16 %v2588
    %v2629 = vunpack.c.l.b16 %v2589
    %v2630 = vunpack.c.l.b16 %v2590
    %v2631 = vunpack.c.l.b16 %v2591
    %v2632 = vunpack.c.l.b16 %v2592
    %v2633 = vunpack.c.l.b16 %v2593
    %v2634 = vunpack.c.l.b16 %v2594
    %v2635 = vunpack.c.l.b16 %v2595
    %v2636 = vunpack.c.l.b16 %v2596
    %v2637 = vunpack.c.l.b16 %v2597
    %v2638 = vunpack.c.l.b16 %v2598
    %v2639 = vunpack.c.l.b16 %v2599
    %v2640 = vunpack.c.l.b16 %v2600
    %v2641 = vunpack.c.l.b16 %v2601
    %v2642 = vunpack.c.l.b16 %v2602
    %v2643 = vpack.c.b16 %v2628, %v2627
    %v2644 = vpack.c.b16 %v2630, %v2629
    %v2645 = vpack.c.b16 %v2632, %v2631
    %v2646 = vpack.c.b16 %v2634, %v2633
    %v2647 = vpack.c.b16 %v2636, %v2635
    %v2648 = vpack.c.b16 %v2638, %v2637
    %v2649 = vpack.c.b16 %v2640, %v2639
    %v2650 = vpack.c.b16 %v2642, %v2641
    %2659 = vmatprep.subr.bf16.mxu0 0
    %2660 = vmatpush1.bf16.msra.mxu0 %v2643
    %2661 = vmatprep.subr.bf16.mxu0 0
    %2662 = vmatpush1.bf16.msra.mxu0 %v2644
    %2663 = vmatprep.subr.bf16.mxu0 0
    %2664 = vmatpush1.bf16.msra.mxu0 %v2645
    %2665 = vmatprep.subr.bf16.mxu0 0
    %2666 = vmatpush1.bf16.msra.mxu0 %v2646
    %2667 = vmatprep.subr.bf16.mxu0 0
    %2668 = vmatpush1.bf16.msra.mxu0 %v2647
    %2669 = vmatprep.subr.bf16.mxu0 0
    %2670 = vmatpush1.bf16.msra.mxu0 %v2648
    %2671 = vmatprep.subr.bf16.mxu0 0
    %2672 = vmatpush1.bf16.msra.mxu0 %v2649
    %2673 = vmatprep.subr.bf16.mxu0 0
    %2674 = vmatpush1.bf16.msra.mxu0 %v2650
    %2675 = vmatprep.subr.bf16.mxu0 0
    %2676 = vmatpush1.bf16.msra.mxu0 0
    %2677 = vmatprep.subr.bf16.mxu0 0
    %2678 = vmatpush1.bf16.msra.mxu0 0
    %2679 = vmatprep.subr.bf16.mxu0 0
    %2680 = vmatpush1.bf16.msra.mxu0 0
    %2681 = vmatprep.subr.bf16.mxu0 0
    %2682 = vmatpush1.bf16.msra.mxu0 0
    %2683 = vmatprep.subr.bf16.mxu0 0
    %2684 = vmatpush1.bf16.msra.mxu0 0
    %2685 = vmatprep.subr.bf16.mxu0 0
    %2686 = vmatpush1.bf16.msra.mxu0 0
    %2687 = vmatprep.subr.bf16.mxu0 0
    %2688 = vmatpush1.bf16.msra.mxu0 0
    %2689 = vmatprep.subr.bf16.mxu0 0
    %2690 = vmatpush1.bf16.msra.mxu0 0
    %2691 = vmatprep.mubr.bf16.mxu0 0
    %2692 = vmatmul.mubr.bf16.gmra.mrb[0].mxu0 %v2578
    %v2693 = vpop.f32.mrb[0].mxu0
    %v2694 = vadd.f32 %v2609, %v2693
    %v2695 = vpop.f32.mrb[0].mxu0
    %v2696 = vpop.f32.mrb[0].mxu0
    %v2697 = vadd.f32 %v2609, %v2696
    %v2698 = vpop.f32.mrb[0].mxu0
    %2699 = vmatprep.mubr.bf16.mxu0 0
    %2700 = vmatmul.mubr.bf16.gmra.mrb[0].mxu0 %v2579
    %v2701 = vpop.f32.mrb[0].mxu0
    %v2702 = vadd.f32 %v2609, %v2701
    %v2703 = vpop.f32.mrb[0].mxu0
    %v2704 = vpop.f32.mrb[0].mxu0
    %v2705 = vadd.f32 %v2609, %v2704
    %v2706 = vpop.f32.mrb[0].mxu0
    %2707 = vmatprep.mubr.bf16.mxu0 0
    %2708 = vmatmul.mubr.bf16.gmra.mrb[0].mxu0 %v2580
    %v2709 = vpop.f32.mrb[0].mxu0
    %v2710 = vadd.f32 %v2609, %v2709
    %v2711 = vpop.f32.mrb[0].mxu0
    %v2712 = vpop.f32.mrb[0].mxu0
    %v2713 = vadd.f32 %v2609, %v2712
    %v2714 = vpop.f32.mrb[0].mxu0
    %2715 = vmatprep.mubr.bf16.mxu0 0
    %2716 = vmatmul.mubr.bf16.gmra.mrb[0].mxu0 %v2581
    %v2717 = vpop.f32.mrb[0].mxu0
    %v2718 = vadd.f32 %v2609, %v2717
    %v2719 = vpop.f32.mrb[0].mxu0
    %v2720 = vpop.f32.mrb[0].mxu0
    %v2721 = vadd.f32 %v2609, %v2720
    %v2722 = vpop.f32.mrb[0].mxu0
    %2723 = vmatprep.mubr.bf16.mxu0 0
    %2724 = vmatmul.mubr.bf16.gmra.mrb[0].mxu0 %v2582
    %v2725 = vpop.f32.mrb[0].mxu0
    %v2726 = vadd.f32 %v2609, %v2725
    %v2727 = vpop.f32.mrb[0].mxu0
    %v2728 = vpop.f32.mrb[0].mxu0
    %v2729 = vadd.f32 %v2609, %v2728
    %v2730 = vpop.f32.mrb[0].mxu0
    %2731 = vmatprep.mubr.bf16.mxu0 0
    %2732 = vmatmul.mubr.bf16.gmra.mrb[0].mxu0 %v2583
    %v2733 = vpop.f32.mrb[0].mxu0
    %v2734 = vadd.f32 %v2609, %v2733
    %v2735 = vpop.f32.mrb[0].mxu0
    %v2736 = vpop.f32.mrb[0].mxu0
    %v2737 = vadd.f32 %v2609, %v2736
    %v2738 = vpop.f32.mrb[0].mxu0
    %2739 = vmatprep.mubr.bf16.mxu0 0
    %2740 = vmatmul.mubr.bf16.gmra.mrb[0].mxu0 %v2584
    %v2741 = vpop.f32.mrb[0].mxu0
    %v2742 = vadd.f32 %v2609, %v2741
    %v2743 = vpop.f32.mrb[0].mxu0
    %v2744 = vpop.f32.mrb[0].mxu0
    %v2745 = vadd.f32 %v2609, %v2744
    %v2746 = vpop.f32.mrb[0].mxu0
    %2747 = vmatprep.mubr.bf16.mxu0 0
    %2748 = vmatmul.mubr.bf16.gmra.mrb[0].mxu0 %v2585
    %v2749 = vpop.f32.mrb[0].mxu0
    %v2750 = vadd.f32 %v2609, %v2749
    %v2751 = vpop.f32.mrb[0].mxu0
    %v2752 = vpop.f32.mrb[0].mxu0
    %v2753 = vadd.f32 %v2609, %v2752
    %v2754 = vpop.f32.mrb[0].mxu0
    %2755 = vdwg.mxu0
    %v2756 = vmul.f32 %v2694, 0.1
    %v2757 = vmul.f32 %v2697, 0.1
    %v2758 = vmul.f32 %v2702, 0.1
    %v2759 = vmul.f32 %v2705, 0.1
    %v2760 = vmul.f32 %v2710, 0.1
    %v2761 = vmul.f32 %v2713, 0.1
    %v2762 = vmul.f32 %v2718, 0.1
    %v2763 = vmul.f32 %v2721, 0.1
    %v2764 = vmul.f32 %v2726, 0.1
    %v2765 = vmul.f32 %v2729, 0.1
    %v2766 = vmul.f32 %v2734, 0.1
    %v2767 = vmul.f32 %v2737, 0.1
    %v2768 = vmul.f32 %v2742, 0.1
    %v2769 = vmul.f32 %v2745, 0.1
    %v2770 = vmul.f32 %v2750, 0.1
    %v2771 = vmul.f32 %v2753, 0.1
    %v2772 = vmax.f32 %v2694, %v2756
    %v2773 = vmax.f32 %v2697, %v2757
    %v2774 = vmax.f32 %v2702, %v2758
    %v2775 = vmax.f32 %v2705, %v2759
    %v2776 = vmax.f32 %v2710, %v2760
    %v2777 = vmax.f32 %v2713, %v2761
    %v2778 = vmax.f32 %v2718, %v2762
    %v2779 = vmax.f32 %v2721, %v2763
    %v2780 = vmax.f32 %v2726, %v2764
    %v2781 = vmax.f32 %v2729, %v2765
    %v2782 = vmax.f32 %v2734, %v2766
    %v2783 = vmax.f32 %v2737, %v2767
    %v2784 = vmax.f32 %v2742, %v2768
    %v2785 = vmax.f32 %v2745, %v2769
    %v2786 = vmax.f32 %v2750, %v2770
    %v2787 = vmax.f32 %v2753, %v2771
    %v2788 = vpack.c.bf16 %v2773, %v2772
    %v2789 = vpack.c.bf16 %v2775, %v2774
    %v2790 = vpack.c.bf16 %v2777, %v2776
    %v2791 = vpack.c.bf16 %v2779, %v2778
    %v2792 = vpack.c.bf16 %v2781, %v2780
    %v2793 = vpack.c.bf16 %v2783, %v2782
    %v2794 = vpack.c.bf16 %v2785, %v2784
    %v2795 = vpack.c.bf16 %v2787, %v2786
    %s2796 = scalar_lea.vmem [#allocation5], 3072
    %v2797 = vld [vmem:[%s2796] sm:$0xf]
    %v2798 = vld [vmem:[%s2796 + $0x8] sm:$0xf]
    %v2799 = vld [vmem:[%s2796 + $0x10] sm:$0xf]
    %v2800 = vld [vmem:[%s2796 + $0x18] sm:$0xf]
    %v2801 = vld [vmem:[%s2796 + $0x20] sm:$0xf]
    %v2802 = vld [vmem:[%s2796 + $0x28] sm:$0xf]
    %v2803 = vld [vmem:[%s2796 + $0x30] sm:$0xf]
    %v2804 = vld [vmem:[%s2796 + $0x38] sm:$0xf]
    %v2805 = vld [vmem:[%s2796 + $0x40] sm:$0xf]
    %v2806 = vld [vmem:[%s2796 + $0x48] sm:$0xf]
    %v2807 = vld [vmem:[%s2796 + $0x50] sm:$0xf]
    %v2808 = vld [vmem:[%s2796 + $0x58] sm:$0xf]
    %v2809 = vld [vmem:[%s2796 + $0x60] sm:$0xf]
    %v2810 = vld [vmem:[%s2796 + $0x68] sm:$0xf]
    %v2811 = vld [vmem:[%s2796 + $0x70] sm:$0xf]
    %v2812 = vld [vmem:[%s2796 + $0x78] sm:$0xf]
    %s2813 = scalar_lea.vmem [#allocation7], 24
    %v2814 = vld [vmem:[%s2813] sm:$0x1]
    %v2816 = vlaneseq
    %v2817 = vshrl.u32 %v2816, 7
    %v2818 = vsub.s32 0, %v2817
    %v2819 = vrot.slane %v2814, %v2818
    %v2837 = vunpack.c.l.b16 %v2797
    %v2838 = vunpack.c.l.b16 %v2798
    %v2839 = vunpack.c.l.b16 %v2799
    %v2840 = vunpack.c.l.b16 %v2800
    %v2841 = vunpack.c.l.b16 %v2801
    %v2842 = vunpack.c.l.b16 %v2802
    %v2843 = vunpack.c.l.b16 %v2803
    %v2844 = vunpack.c.l.b16 %v2804
    %v2845 = vunpack.c.l.b16 %v2805
    %v2846 = vunpack.c.l.b16 %v2806
    %v2847 = vunpack.c.l.b16 %v2807
    %v2848 = vunpack.c.l.b16 %v2808
    %v2849 = vunpack.c.l.b16 %v2809
    %v2850 = vunpack.c.l.b16 %v2810
    %v2851 = vunpack.c.l.b16 %v2811
    %v2852 = vunpack.c.l.b16 %v2812
    %v2853 = vpack.c.b16 %v2838, %v2837
    %v2854 = vpack.c.b16 %v2840, %v2839
    %v2855 = vpack.c.b16 %v2842, %v2841
    %v2856 = vpack.c.b16 %v2844, %v2843
    %v2857 = vpack.c.b16 %v2846, %v2845
    %v2858 = vpack.c.b16 %v2848, %v2847
    %v2859 = vpack.c.b16 %v2850, %v2849
    %v2860 = vpack.c.b16 %v2852, %v2851
    %2869 = vmatprep.subr.bf16.mxu0 0
    %2870 = vmatpush1.bf16.msra.mxu0 %v2853
    %2871 = vmatprep.subr.bf16.mxu0 0
    %2872 = vmatpush1.bf16.msra.mxu0 %v2854
    %2873 = vmatprep.subr.bf16.mxu0 0
    %2874 = vmatpush1.bf16.msra.mxu0 %v2855
    %2875 = vmatprep.subr.bf16.mxu0 0
    %2876 = vmatpush1.bf16.msra.mxu0 %v2856
    %2877 = vmatprep.subr.bf16.mxu0 0
    %2878 = vmatpush1.bf16.msra.mxu0 %v2857
    %2879 = vmatprep.subr.bf16.mxu0 0
    %2880 = vmatpush1.bf16.msra.mxu0 %v2858
    %2881 = vmatprep.subr.bf16.mxu0 0
    %2882 = vmatpush1.bf16.msra.mxu0 %v2859
    %2883 = vmatprep.subr.bf16.mxu0 0
    %2884 = vmatpush1.bf16.msra.mxu0 %v2860
    %2885 = vmatprep.subr.bf16.mxu0 0
    %2886 = vmatpush1.bf16.msra.mxu0 0
    %2887 = vmatprep.subr.bf16.mxu0 0
    %2888 = vmatpush1.bf16.msra.mxu0 0
    %2889 = vmatprep.subr.bf16.mxu0 0
    %2890 = vmatpush1.bf16.msra.mxu0 0
    %2891 = vmatprep.subr.bf16.mxu0 0
    %2892 = vmatpush1.bf16.msra.mxu0 0
    %2893 = vmatprep.subr.bf16.mxu0 0
    %2894 = vmatpush1.bf16.msra.mxu0 0
    %2895 = vmatprep.subr.bf16.mxu0 0
    %2896 = vmatpush1.bf16.msra.mxu0 0
    %2897 = vmatprep.subr.bf16.mxu0 0
    %2898 = vmatpush1.bf16.msra.mxu0 0
    %2899 = vmatprep.subr.bf16.mxu0 0
    %2900 = vmatpush1.bf16.msra.mxu0 0
    %2901 = vmatprep.mubr.bf16.mxu0 0
    %2902 = vmatmul.mubr.bf16.gmra.mrb[0].mxu0 %v2788
    %v2903 = vpop.f32.mrb[0].mxu0
    %v2904 = vadd.f32 %v2819, %v2903
    %v2905 = vpop.f32.mrb[0].mxu0
    %v2906 = vpop.f32.mrb[0].mxu0
    %v2907 = vadd.f32 %v2819, %v2906
    %v2908 = vpop.f32.mrb[0].mxu0
    %2909 = vmatprep.mubr.bf16.mxu0 0
    %2910 = vmatmul.mubr.bf16.gmra.mrb[0].mxu0 %v2789
    %v2911 = vpop.f32.mrb[0].mxu0
    %v2912 = vadd.f32 %v2819, %v2911
    %v2913 = vpop.f32.mrb[0].mxu0
    %v2914 = vpop.f32.mrb[0].mxu0
    %v2915 = vadd.f32 %v2819, %v2914
    %v2916 = vpop.f32.mrb[0].mxu0
    %2917 = vmatprep.mubr.bf16.mxu0 0
    %2918 = vmatmul.mubr.bf16.gmra.mrb[0].mxu0 %v2790
    %v2919 = vpop.f32.mrb[0].mxu0
    %v2920 = vadd.f32 %v2819, %v2919
    %v2921 = vpop.f32.mrb[0].mxu0
    %v2922 = vpop.f32.mrb[0].mxu0
    %v2923 = vadd.f32 %v2819, %v2922
    %v2924 = vpop.f32.mrb[0].mxu0
    %2925 = vmatprep.mubr.bf16.mxu0 0
    %2926 = vmatmul.mubr.bf16.gmra.mrb[0].mxu0 %v2791
    %v2927 = vpop.f32.mrb[0].mxu0
    %v2928 = vadd.f32 %v2819, %v2927
    %v2929 = vpop.f32.mrb[0].mxu0
    %v2930 = vpop.f32.mrb[0].mxu0
    %v2931 = vadd.f32 %v2819, %v2930
    %v2932 = vpop.f32.mrb[0].mxu0
    %2933 = vmatprep.mubr.bf16.mxu0 0
    %2934 = vmatmul.mubr.bf16.gmra.mrb[0].mxu0 %v2792
    %v2935 = vpop.f32.mrb[0].mxu0
    %v2936 = vadd.f32 %v2819, %v2935
    %v2937 = vpop.f32.mrb[0].mxu0
    %v2938 = vpop.f32.mrb[0].mxu0
    %v2939 = vadd.f32 %v2819, %v2938
    %v2940 = vpop.f32.mrb[0].mxu0
    %2941 = vmatprep.mubr.bf16.mxu0 0
    %2942 = vmatmul.mubr.bf16.gmra.mrb[0].mxu0 %v2793
    %v2943 = vpop.f32.mrb[0].mxu0
    %v2944 = vadd.f32 %v2819, %v2943
    %v2945 = vpop.f32.mrb[0].mxu0
    %v2946 = vpop.f32.mrb[0].mxu0
    %v2947 = vadd.f32 %v2819, %v2946
    %v2948 = vpop.f32.mrb[0].mxu0
    %2949 = vmatprep.mubr.bf16.mxu0 0
    %2950 = vmatmul.mubr.bf16.gmra.mrb[0].mxu0 %v2794
    %v2951 = vpop.f32.mrb[0].mxu0
    %v2952 = vadd.f32 %v2819, %v2951
    %v2953 = vpop.f32.mrb[0].mxu0
    %v2954 = vpop.f32.mrb[0].mxu0
    %v2955 = vadd.f32 %v2819, %v2954
    %v2956 = vpop.f32.mrb[0].mxu0
    %2957 = vmatprep.mubr.bf16.mxu0 0
    %2958 = vmatmul.mubr.bf16.gmra.mrb[0].mxu0 %v2795
    %v2959 = vpop.f32.mrb[0].mxu0
    %v2960 = vadd.f32 %v2819, %v2959
    %v2961 = vpop.f32.mrb[0].mxu0
    %v2962 = vpop.f32.mrb[0].mxu0
    %v2963 = vadd.f32 %v2819, %v2962
    %v2964 = vpop.f32.mrb[0].mxu0
    %2965 = vdwg.mxu0
    %v2966 = vmul.f32 %v2904, 0.1
    %v2967 = vmul.f32 %v2907, 0.1
    %v2968 = vmul.f32 %v2912, 0.1
    %v2969 = vmul.f32 %v2915, 0.1
    %v2970 = vmul.f32 %v2920, 0.1
    %v2971 = vmul.f32 %v2923, 0.1
    %v2972 = vmul.f32 %v2928, 0.1
    %v2973 = vmul.f32 %v2931, 0.1
    %v2974 = vmul.f32 %v2936, 0.1
    %v2975 = vmul.f32 %v2939, 0.1
    %v2976 = vmul.f32 %v2944, 0.1
    %v2977 = vmul.f32 %v2947, 0.1
    %v2978 = vmul.f32 %v2952, 0.1
    %v2979 = vmul.f32 %v2955, 0.1
    %v2980 = vmul.f32 %v2960, 0.1
    %v2981 = vmul.f32 %v2963, 0.1
    %v2982 = vmax.f32 %v2904, %v2966
    %v2983 = vmax.f32 %v2907, %v2967
    %v2984 = vmax.f32 %v2912, %v2968
    %v2985 = vmax.f32 %v2915, %v2969
    %v2986 = vmax.f32 %v2920, %v2970
    %v2987 = vmax.f32 %v2923, %v2971
    %v2988 = vmax.f32 %v2928, %v2972
    %v2989 = vmax.f32 %v2931, %v2973
    %v2990 = vmax.f32 %v2936, %v2974
    %v2991 = vmax.f32 %v2939, %v2975
    %v2992 = vmax.f32 %v2944, %v2976
    %v2993 = vmax.f32 %v2947, %v2977
    %v2994 = vmax.f32 %v2952, %v2978
    %v2995 = vmax.f32 %v2955, %v2979
    %v2996 = vmax.f32 %v2960, %v2980
    %v2997 = vmax.f32 %v2963, %v2981
    %v2998 = vpack.c.bf16 %v2983, %v2982
    %v2999 = vpack.c.bf16 %v2985, %v2984
    %v3000 = vpack.c.bf16 %v2987, %v2986
    %v3001 = vpack.c.bf16 %v2989, %v2988
    %v3002 = vpack.c.bf16 %v2991, %v2990
    %v3003 = vpack.c.bf16 %v2993, %v2992
    %v3004 = vpack.c.bf16 %v2995, %v2994
    %v3005 = vpack.c.bf16 %v2997, %v2996
    %s3006 = scalar_lea.vmem [#allocation5], 3328
    %v3007 = vld [vmem:[%s3006] sm:$0xf]
    %v3008 = vld [vmem:[%s3006 + $0x8] sm:$0xf]
    %v3009 = vld [vmem:[%s3006 + $0x10] sm:$0xf]
    %v3010 = vld [vmem:[%s3006 + $0x18] sm:$0xf]
    %v3011 = vld [vmem:[%s3006 + $0x20] sm:$0xf]
    %v3012 = vld [vmem:[%s3006 + $0x28] sm:$0xf]
    %v3013 = vld [vmem:[%s3006 + $0x30] sm:$0xf]
    %v3014 = vld [vmem:[%s3006 + $0x38] sm:$0xf]
    %v3015 = vld [vmem:[%s3006 + $0x40] sm:$0xf]
    %v3016 = vld [vmem:[%s3006 + $0x48] sm:$0xf]
    %v3017 = vld [vmem:[%s3006 + $0x50] sm:$0xf]
    %v3018 = vld [vmem:[%s3006 + $0x58] sm:$0xf]
    %v3019 = vld [vmem:[%s3006 + $0x60] sm:$0xf]
    %v3020 = vld [vmem:[%s3006 + $0x68] sm:$0xf]
    %v3021 = vld [vmem:[%s3006 + $0x70] sm:$0xf]
    %v3022 = vld [vmem:[%s3006 + $0x78] sm:$0xf]
    %s3023 = scalar_lea.vmem [#allocation7], 26
    %v3024 = vld [vmem:[%s3023] sm:$0x1]
    %v3026 = vlaneseq
    %v3027 = vshrl.u32 %v3026, 7
    %v3028 = vsub.s32 0, %v3027
    %v3029 = vrot.slane %v3024, %v3028
    %v3047 = vunpack.c.l.b16 %v3007
    %v3048 = vunpack.c.l.b16 %v3008
    %v3049 = vunpack.c.l.b16 %v3009
    %v3050 = vunpack.c.l.b16 %v3010
    %v3051 = vunpack.c.l.b16 %v3011
    %v3052 = vunpack.c.l.b16 %v3012
    %v3053 = vunpack.c.l.b16 %v3013
    %v3054 = vunpack.c.l.b16 %v3014
    %v3055 = vunpack.c.l.b16 %v3015
    %v3056 = vunpack.c.l.b16 %v3016
    %v3057 = vunpack.c.l.b16 %v3017
    %v3058 = vunpack.c.l.b16 %v3018
    %v3059 = vunpack.c.l.b16 %v3019
    %v3060 = vunpack.c.l.b16 %v3020
    %v3061 = vunpack.c.l.b16 %v3021
    %v3062 = vunpack.c.l.b16 %v3022
    %v3063 = vpack.c.b16 %v3048, %v3047
    %v3064 = vpack.c.b16 %v3050, %v3049
    %v3065 = vpack.c.b16 %v3052, %v3051
    %v3066 = vpack.c.b16 %v3054, %v3053
    %v3067 = vpack.c.b16 %v3056, %v3055
    %v3068 = vpack.c.b16 %v3058, %v3057
    %v3069 = vpack.c.b16 %v3060, %v3059
    %v3070 = vpack.c.b16 %v3062, %v3061
    %3079 = vmatprep.subr.bf16.mxu0 0
    %3080 = vmatpush1.bf16.msra.mxu0 %v3063
    %3081 = vmatprep.subr.bf16.mxu0 0
    %3082 = vmatpush1.bf16.msra.mxu0 %v3064
    %3083 = vmatprep.subr.bf16.mxu0 0
    %3084 = vmatpush1.bf16.msra.mxu0 %v3065
    %3085 = vmatprep.subr.bf16.mxu0 0
    %3086 = vmatpush1.bf16.msra.mxu0 %v3066
    %3087 = vmatprep.subr.bf16.mxu0 0
    %3088 = vmatpush1.bf16.msra.mxu0 %v3067
    %3089 = vmatprep.subr.bf16.mxu0 0
    %3090 = vmatpush1.bf16.msra.mxu0 %v3068
    %3091 = vmatprep.subr.bf16.mxu0 0
    %3092 = vmatpush1.bf16.msra.mxu0 %v3069
    %3093 = vmatprep.subr.bf16.mxu0 0
    %3094 = vmatpush1.bf16.msra.mxu0 %v3070
    %3095 = vmatprep.subr.bf16.mxu0 0
    %3096 = vmatpush1.bf16.msra.mxu0 0
    %3097 = vmatprep.subr.bf16.mxu0 0
    %3098 = vmatpush1.bf16.msra.mxu0 0
    %3099 = vmatprep.subr.bf16.mxu0 0
    %3100 = vmatpush1.bf16.msra.mxu0 0
    %3101 = vmatprep.subr.bf16.mxu0 0
    %3102 = vmatpush1.bf16.msra.mxu0 0
    %3103 = vmatprep.subr.bf16.mxu0 0
    %3104 = vmatpush1.bf16.msra.mxu0 0
    %3105 = vmatprep.subr.bf16.mxu0 0
    %3106 = vmatpush1.bf16.msra.mxu0 0
    %3107 = vmatprep.subr.bf16.mxu0 0
    %3108 = vmatpush1.bf16.msra.mxu0 0
    %3109 = vmatprep.subr.bf16.mxu0 0
    %3110 = vmatpush1.bf16.msra.mxu0 0
    %3111 = vmatprep.mubr.bf16.mxu0 0
    %3112 = vmatmul.mubr.bf16.gmra.mrb[0].mxu0 %v2998
    %v3113 = vpop.f32.mrb[0].mxu0
    %v3114 = vadd.f32 %v3029, %v3113
    %v3115 = vpop.f32.mrb[0].mxu0
    %v3116 = vpop.f32.mrb[0].mxu0
    %v3117 = vadd.f32 %v3029, %v3116
    %v3118 = vpop.f32.mrb[0].mxu0
    %3119 = vmatprep.mubr.bf16.mxu0 0
    %3120 = vmatmul.mubr.bf16.gmra.mrb[0].mxu0 %v2999
    %v3121 = vpop.f32.mrb[0].mxu0
    %v3122 = vadd.f32 %v3029, %v3121
    %v3123 = vpop.f32.mrb[0].mxu0
    %v3124 = vpop.f32.mrb[0].mxu0
    %v3125 = vadd.f32 %v3029, %v3124
    %v3126 = vpop.f32.mrb[0].mxu0
    %3127 = vmatprep.mubr.bf16.mxu0 0
    %3128 = vmatmul.mubr.bf16.gmra.mrb[0].mxu0 %v3000
    %v3129 = vpop.f32.mrb[0].mxu0
    %v3130 = vadd.f32 %v3029, %v3129
    %v3131 = vpop.f32.mrb[0].mxu0
    %v3132 = vpop.f32.mrb[0].mxu0
    %v3133 = vadd.f32 %v3029, %v3132
    %v3134 = vpop.f32.mrb[0].mxu0
    %3135 = vmatprep.mubr.bf16.mxu0 0
    %3136 = vmatmul.mubr.bf16.gmra.mrb[0].mxu0 %v3001
    %v3137 = vpop.f32.mrb[0].mxu0
    %v3138 = vadd.f32 %v3029, %v3137
    %v3139 = vpop.f32.mrb[0].mxu0
    %v3140 = vpop.f32.mrb[0].mxu0
    %v3141 = vadd.f32 %v3029, %v3140
    %v3142 = vpop.f32.mrb[0].mxu0
    %3143 = vmatprep.mubr.bf16.mxu0 0
    %3144 = vmatmul.mubr.bf16.gmra.mrb[0].mxu0 %v3002
    %v3145 = vpop.f32.mrb[0].mxu0
    %v3146 = vadd.f32 %v3029, %v3145
    %v3147 = vpop.f32.mrb[0].mxu0
    %v3148 = vpop.f32.mrb[0].mxu0
    %v3149 = vadd.f32 %v3029, %v3148
    %v3150 = vpop.f32.mrb[0].mxu0
    %3151 = vmatprep.mubr.bf16.mxu0 0
    %3152 = vmatmul.mubr.bf16.gmra.mrb[0].mxu0 %v3003
    %v3153 = vpop.f32.mrb[0].mxu0
    %v3154 = vadd.f32 %v3029, %v3153
    %v3155 = vpop.f32.mrb[0].mxu0
    %v3156 = vpop.f32.mrb[0].mxu0
    %v3157 = vadd.f32 %v3029, %v3156
    %v3158 = vpop.f32.mrb[0].mxu0
    %3159 = vmatprep.mubr.bf16.mxu0 0
    %3160 = vmatmul.mubr.bf16.gmra.mrb[0].mxu0 %v3004
    %v3161 = vpop.f32.mrb[0].mxu0
    %v3162 = vadd.f32 %v3029, %v3161
    %v3163 = vpop.f32.mrb[0].mxu0
    %v3164 = vpop.f32.mrb[0].mxu0
    %v3165 = vadd.f32 %v3029, %v3164
    %v3166 = vpop.f32.mrb[0].mxu0
    %3167 = vmatprep.mubr.bf16.mxu0 0
    %3168 = vmatmul.mubr.bf16.gmra.mrb[0].mxu0 %v3005
    %v3169 = vpop.f32.mrb[0].mxu0
    %v3170 = vadd.f32 %v3029, %v3169
    %v3171 = vpop.f32.mrb[0].mxu0
    %v3172 = vpop.f32.mrb[0].mxu0
    %v3173 = vadd.f32 %v3029, %v3172
    %v3174 = vpop.f32.mrb[0].mxu0
    %3175 = vdwg.mxu0
    %v3176 = vmul.f32 %v3114, 0.1
    %v3177 = vmul.f32 %v3117, 0.1
    %v3178 = vmul.f32 %v3122, 0.1
    %v3179 = vmul.f32 %v3125, 0.1
    %v3180 = vmul.f32 %v3130, 0.1
    %v3181 = vmul.f32 %v3133, 0.1
    %v3182 = vmul.f32 %v3138, 0.1
    %v3183 = vmul.f32 %v3141, 0.1
    %v3184 = vmul.f32 %v3146, 0.1
    %v3185 = vmul.f32 %v3149, 0.1
    %v3186 = vmul.f32 %v3154, 0.1
    %v3187 = vmul.f32 %v3157, 0.1
    %v3188 = vmul.f32 %v3162, 0.1
    %v3189 = vmul.f32 %v3165, 0.1
    %v3190 = vmul.f32 %v3170, 0.1
    %v3191 = vmul.f32 %v3173, 0.1
    %v3192 = vmax.f32 %v3114, %v3176
    %v3193 = vmax.f32 %v3117, %v3177
    %v3194 = vmax.f32 %v3122, %v3178
    %v3195 = vmax.f32 %v3125, %v3179
    %v3196 = vmax.f32 %v3130, %v3180
    %v3197 = vmax.f32 %v3133, %v3181
    %v3198 = vmax.f32 %v3138, %v3182
    %v3199 = vmax.f32 %v3141, %v3183
    %v3200 = vmax.f32 %v3146, %v3184
    %v3201 = vmax.f32 %v3149, %v3185
    %v3202 = vmax.f32 %v3154, %v3186
    %v3203 = vmax.f32 %v3157, %v3187
    %v3204 = vmax.f32 %v3162, %v3188
    %v3205 = vmax.f32 %v3165, %v3189
    %v3206 = vmax.f32 %v3170, %v3190
    %v3207 = vmax.f32 %v3173, %v3191
    %v3208 = vpack.c.bf16 %v3193, %v3192
    %v3209 = vpack.c.bf16 %v3195, %v3194
    %v3210 = vpack.c.bf16 %v3197, %v3196
    %v3211 = vpack.c.bf16 %v3199, %v3198
    %v3212 = vpack.c.bf16 %v3201, %v3200
    %v3213 = vpack.c.bf16 %v3203, %v3202
    %v3214 = vpack.c.bf16 %v3205, %v3204
    %v3215 = vpack.c.bf16 %v3207, %v3206
    %s3216 = scalar_lea.vmem [#allocation5], 3584
    %v3217 = vld [vmem:[%s3216] sm:$0xf]
    %v3218 = vld [vmem:[%s3216 + $0x8] sm:$0xf]
    %v3219 = vld [vmem:[%s3216 + $0x10] sm:$0xf]
    %v3220 = vld [vmem:[%s3216 + $0x18] sm:$0xf]
    %v3221 = vld [vmem:[%s3216 + $0x20] sm:$0xf]
    %v3222 = vld [vmem:[%s3216 + $0x28] sm:$0xf]
    %v3223 = vld [vmem:[%s3216 + $0x30] sm:$0xf]
    %v3224 = vld [vmem:[%s3216 + $0x38] sm:$0xf]
    %v3225 = vld [vmem:[%s3216 + $0x40] sm:$0xf]
    %v3226 = vld [vmem:[%s3216 + $0x48] sm:$0xf]
    %v3227 = vld [vmem:[%s3216 + $0x50] sm:$0xf]
    %v3228 = vld [vmem:[%s3216 + $0x58] sm:$0xf]
    %v3229 = vld [vmem:[%s3216 + $0x60] sm:$0xf]
    %v3230 = vld [vmem:[%s3216 + $0x68] sm:$0xf]
    %v3231 = vld [vmem:[%s3216 + $0x70] sm:$0xf]
    %v3232 = vld [vmem:[%s3216 + $0x78] sm:$0xf]
    %s3233 = scalar_lea.vmem [#allocation7], 28
    %v3234 = vld [vmem:[%s3233] sm:$0x1]
    %v3236 = vlaneseq
    %v3237 = vshrl.u32 %v3236, 7
    %v3238 = vsub.s32 0, %v3237
    %v3239 = vrot.slane %v3234, %v3238
    %v3257 = vunpack.c.l.b16 %v3217
    %v3258 = vunpack.c.l.b16 %v3218
    %v3259 = vunpack.c.l.b16 %v3219
    %v3260 = vunpack.c.l.b16 %v3220
    %v3261 = vunpack.c.l.b16 %v3221
    %v3262 = vunpack.c.l.b16 %v3222
    %v3263 = vunpack.c.l.b16 %v3223
    %v3264 = vunpack.c.l.b16 %v3224
    %v3265 = vunpack.c.l.b16 %v3225
    %v3266 = vunpack.c.l.b16 %v3226
    %v3267 = vunpack.c.l.b16 %v3227
    %v3268 = vunpack.c.l.b16 %v3228
    %v3269 = vunpack.c.l.b16 %v3229
    %v3270 = vunpack.c.l.b16 %v3230
    %v3271 = vunpack.c.l.b16 %v3231
    %v3272 = vunpack.c.l.b16 %v3232
    %v3273 = vpack.c.b16 %v3258, %v3257
    %v3274 = vpack.c.b16 %v3260, %v3259
    %v3275 = vpack.c.b16 %v3262, %v3261
    %v3276 = vpack.c.b16 %v3264, %v3263
    %v3277 = vpack.c.b16 %v3266, %v3265
    %v3278 = vpack.c.b16 %v3268, %v3267
    %v3279 = vpack.c.b16 %v3270, %v3269
    %v3280 = vpack.c.b16 %v3272, %v3271
    %3289 = vmatprep.subr.bf16.mxu0 0
    %3290 = vmatpush1.bf16.msra.mxu0 %v3273
    %3291 = vmatprep.subr.bf16.mxu0 0
    %3292 = vmatpush1.bf16.msra.mxu0 %v3274
    %3293 = vmatprep.subr.bf16.mxu0 0
    %3294 = vmatpush1.bf16.msra.mxu0 %v3275
    %3295 = vmatprep.subr.bf16.mxu0 0
    %3296 = vmatpush1.bf16.msra.mxu0 %v3276
    %3297 = vmatprep.subr.bf16.mxu0 0
    %3298 = vmatpush1.bf16.msra.mxu0 %v3277
    %3299 = vmatprep.subr.bf16.mxu0 0
    %3300 = vmatpush1.bf16.msra.mxu0 %v3278
    %3301 = vmatprep.subr.bf16.mxu0 0
    %3302 = vmatpush1.bf16.msra.mxu0 %v3279
    %3303 = vmatprep.subr.bf16.mxu0 0
    %3304 = vmatpush1.bf16.msra.mxu0 %v3280
    %3305 = vmatprep.subr.bf16.mxu0 0
    %3306 = vmatpush1.bf16.msra.mxu0 0
    %3307 = vmatprep.subr.bf16.mxu0 0
    %3308 = vmatpush1.bf16.msra.mxu0 0
    %3309 = vmatprep.subr.bf16.mxu0 0
    %3310 = vmatpush1.bf16.msra.mxu0 0
    %3311 = vmatprep.subr.bf16.mxu0 0
    %3312 = vmatpush1.bf16.msra.mxu0 0
    %3313 = vmatprep.subr.bf16.mxu0 0
    %3314 = vmatpush1.bf16.msra.mxu0 0
    %3315 = vmatprep.subr.bf16.mxu0 0
    %3316 = vmatpush1.bf16.msra.mxu0 0
    %3317 = vmatprep.subr.bf16.mxu0 0
    %3318 = vmatpush1.bf16.msra.mxu0 0
    %3319 = vmatprep.subr.bf16.mxu0 0
    %3320 = vmatpush1.bf16.msra.mxu0 0
    %3321 = vmatprep.mubr.bf16.mxu0 0
    %3322 = vmatmul.mubr.bf16.gmra.mrb[0].mxu0 %v3208
    %v3323 = vpop.f32.mrb[0].mxu0
    %v3324 = vadd.f32 %v3239, %v3323
    %v3325 = vpop.f32.mrb[0].mxu0
    %v3326 = vpop.f32.mrb[0].mxu0
    %v3327 = vadd.f32 %v3239, %v3326
    %v3328 = vpop.f32.mrb[0].mxu0
    %3329 = vmatprep.mubr.bf16.mxu0 0
    %3330 = vmatmul.mubr.bf16.gmra.mrb[0].mxu0 %v3209
    %v3331 = vpop.f32.mrb[0].mxu0
    %v3332 = vadd.f32 %v3239, %v3331
    %v3333 = vpop.f32.mrb[0].mxu0
    %v3334 = vpop.f32.mrb[0].mxu0
    %v3335 = vadd.f32 %v3239, %v3334
    %v3336 = vpop.f32.mrb[0].mxu0
    %3337 = vmatprep.mubr.bf16.mxu0 0
    %3338 = vmatmul.mubr.bf16.gmra.mrb[0].mxu0 %v3210
    %v3339 = vpop.f32.mrb[0].mxu0
    %v3340 = vadd.f32 %v3239, %v3339
    %v3341 = vpop.f32.mrb[0].mxu0
    %v3342 = vpop.f32.mrb[0].mxu0
    %v3343 = vadd.f32 %v3239, %v3342
    %v3344 = vpop.f32.mrb[0].mxu0
    %3345 = vmatprep.mubr.bf16.mxu0 0
    %3346 = vmatmul.mubr.bf16.gmra.mrb[0].mxu0 %v3211
    %v3347 = vpop.f32.mrb[0].mxu0
    %v3348 = vadd.f32 %v3239, %v3347
    %v3349 = vpop.f32.mrb[0].mxu0
    %v3350 = vpop.f32.mrb[0].mxu0
    %v3351 = vadd.f32 %v3239, %v3350
    %v3352 = vpop.f32.mrb[0].mxu0
    %3353 = vmatprep.mubr.bf16.mxu0 0
    %3354 = vmatmul.mubr.bf16.gmra.mrb[0].mxu0 %v3212
    %v3355 = vpop.f32.mrb[0].mxu0
    %v3356 = vadd.f32 %v3239, %v3355
    %v3357 = vpop.f32.mrb[0].mxu0
    %v3358 = vpop.f32.mrb[0].mxu0
    %v3359 = vadd.f32 %v3239, %v3358
    %v3360 = vpop.f32.mrb[0].mxu0
    %3361 = vmatprep.mubr.bf16.mxu0 0
    %3362 = vmatmul.mubr.bf16.gmra.mrb[0].mxu0 %v3213
    %v3363 = vpop.f32.mrb[0].mxu0
    %v3364 = vadd.f32 %v3239, %v3363
    %v3365 = vpop.f32.mrb[0].mxu0
    %v3366 = vpop.f32.mrb[0].mxu0
    %v3367 = vadd.f32 %v3239, %v3366
    %v3368 = vpop.f32.mrb[0].mxu0
    %3369 = vmatprep.mubr.bf16.mxu0 0
    %3370 = vmatmul.mubr.bf16.gmra.mrb[0].mxu0 %v3214
    %v3371 = vpop.f32.mrb[0].mxu0
    %v3372 = vadd.f32 %v3239, %v3371
    %v3373 = vpop.f32.mrb[0].mxu0
    %v3374 = vpop.f32.mrb[0].mxu0
    %v3375 = vadd.f32 %v3239, %v3374
    %v3376 = vpop.f32.mrb[0].mxu0
    %3377 = vmatprep.mubr.bf16.mxu0 0
    %3378 = vmatmul.mubr.bf16.gmra.mrb[0].mxu0 %v3215
    %v3379 = vpop.f32.mrb[0].mxu0
    %v3380 = vadd.f32 %v3239, %v3379
    %v3381 = vpop.f32.mrb[0].mxu0
    %v3382 = vpop.f32.mrb[0].mxu0
    %v3383 = vadd.f32 %v3239, %v3382
    %v3384 = vpop.f32.mrb[0].mxu0
    %3385 = vdwg.mxu0
    %v3386 = vmul.f32 %v3324, 0.1
    %v3387 = vmul.f32 %v3327, 0.1
    %v3388 = vmul.f32 %v3332, 0.1
    %v3389 = vmul.f32 %v3335, 0.1
    %v3390 = vmul.f32 %v3340, 0.1
    %v3391 = vmul.f32 %v3343, 0.1
    %v3392 = vmul.f32 %v3348, 0.1
    %v3393 = vmul.f32 %v3351, 0.1
    %v3394 = vmul.f32 %v3356, 0.1
    %v3395 = vmul.f32 %v3359, 0.1
    %v3396 = vmul.f32 %v3364, 0.1
    %v3397 = vmul.f32 %v3367, 0.1
    %v3398 = vmul.f32 %v3372, 0.1
    %v3399 = vmul.f32 %v3375, 0.1
    %v3400 = vmul.f32 %v3380, 0.1
    %v3401 = vmul.f32 %v3383, 0.1
    %v3402 = vmax.f32 %v3324, %v3386
    %v3403 = vmax.f32 %v3327, %v3387
    %v3404 = vmax.f32 %v3332, %v3388
    %v3405 = vmax.f32 %v3335, %v3389
    %v3406 = vmax.f32 %v3340, %v3390
    %v3407 = vmax.f32 %v3343, %v3391
    %v3408 = vmax.f32 %v3348, %v3392
    %v3409 = vmax.f32 %v3351, %v3393
    %v3410 = vmax.f32 %v3356, %v3394
    %v3411 = vmax.f32 %v3359, %v3395
    %v3412 = vmax.f32 %v3364, %v3396
    %v3413 = vmax.f32 %v3367, %v3397
    %v3414 = vmax.f32 %v3372, %v3398
    %v3415 = vmax.f32 %v3375, %v3399
    %v3416 = vmax.f32 %v3380, %v3400
    %v3417 = vmax.f32 %v3383, %v3401
    %v3418 = vpack.c.bf16 %v3403, %v3402
    %v3419 = vpack.c.bf16 %v3405, %v3404
    %v3420 = vpack.c.bf16 %v3407, %v3406
    %v3421 = vpack.c.bf16 %v3409, %v3408
    %v3422 = vpack.c.bf16 %v3411, %v3410
    %v3423 = vpack.c.bf16 %v3413, %v3412
    %v3424 = vpack.c.bf16 %v3415, %v3414
    %v3425 = vpack.c.bf16 %v3417, %v3416
    %s3426 = scalar_lea.vmem [#allocation5], 3840
    %v3427 = vld [vmem:[%s3426] sm:$0xf]
    %v3428 = vld [vmem:[%s3426 + $0x8] sm:$0xf]
    %v3429 = vld [vmem:[%s3426 + $0x10] sm:$0xf]
    %v3430 = vld [vmem:[%s3426 + $0x18] sm:$0xf]
    %v3431 = vld [vmem:[%s3426 + $0x20] sm:$0xf]
    %v3432 = vld [vmem:[%s3426 + $0x28] sm:$0xf]
    %v3433 = vld [vmem:[%s3426 + $0x30] sm:$0xf]
    %v3434 = vld [vmem:[%s3426 + $0x38] sm:$0xf]
    %v3435 = vld [vmem:[%s3426 + $0x40] sm:$0xf]
    %v3436 = vld [vmem:[%s3426 + $0x48] sm:$0xf]
    %v3437 = vld [vmem:[%s3426 + $0x50] sm:$0xf]
    %v3438 = vld [vmem:[%s3426 + $0x58] sm:$0xf]
    %v3439 = vld [vmem:[%s3426 + $0x60] sm:$0xf]
    %v3440 = vld [vmem:[%s3426 + $0x68] sm:$0xf]
    %v3441 = vld [vmem:[%s3426 + $0x70] sm:$0xf]
    %v3442 = vld [vmem:[%s3426 + $0x78] sm:$0xf]
    %s3443 = scalar_lea.vmem [#allocation7], 30
    %v3444 = vld [vmem:[%s3443] sm:$0x1]
    %v3446 = vlaneseq
    %v3447 = vshrl.u32 %v3446, 7
    %v3448 = vsub.s32 0, %v3447
    %v3449 = vrot.slane %v3444, %v3448
    %v3467 = vunpack.c.l.b16 %v3427
    %v3468 = vunpack.c.l.b16 %v3428
    %v3469 = vunpack.c.l.b16 %v3429
    %v3470 = vunpack.c.l.b16 %v3430
    %v3471 = vunpack.c.l.b16 %v3431
    %v3472 = vunpack.c.l.b16 %v3432
    %v3473 = vunpack.c.l.b16 %v3433
    %v3474 = vunpack.c.l.b16 %v3434
    %v3475 = vunpack.c.l.b16 %v3435
    %v3476 = vunpack.c.l.b16 %v3436
    %v3477 = vunpack.c.l.b16 %v3437
    %v3478 = vunpack.c.l.b16 %v3438
    %v3479 = vunpack.c.l.b16 %v3439
    %v3480 = vunpack.c.l.b16 %v3440
    %v3481 = vunpack.c.l.b16 %v3441
    %v3482 = vunpack.c.l.b16 %v3442
    %v3483 = vpack.c.b16 %v3468, %v3467
    %v3484 = vpack.c.b16 %v3470, %v3469
    %v3485 = vpack.c.b16 %v3472, %v3471
    %v3486 = vpack.c.b16 %v3474, %v3473
    %v3487 = vpack.c.b16 %v3476, %v3475
    %v3488 = vpack.c.b16 %v3478, %v3477
    %v3489 = vpack.c.b16 %v3480, %v3479
    %v3490 = vpack.c.b16 %v3482, %v3481
    %3499 = vmatprep.subr.bf16.mxu0 0
    %3500 = vmatpush1.bf16.msra.mxu0 %v3483
    %3501 = vmatprep.subr.bf16.mxu0 0
    %3502 = vmatpush1.bf16.msra.mxu0 %v3484
    %3503 = vmatprep.subr.bf16.mxu0 0
    %3504 = vmatpush1.bf16.msra.mxu0 %v3485
    %3505 = vmatprep.subr.bf16.mxu0 0
    %3506 = vmatpush1.bf16.msra.mxu0 %v3486
    %3507 = vmatprep.subr.bf16.mxu0 0
    %3508 = vmatpush1.bf16.msra.mxu0 %v3487
    %3509 = vmatprep.subr.bf16.mxu0 0
    %3510 = vmatpush1.bf16.msra.mxu0 %v3488
    %3511 = vmatprep.subr.bf16.mxu0 0
    %3512 = vmatpush1.bf16.msra.mxu0 %v3489
    %3513 = vmatprep.subr.bf16.mxu0 0
    %3514 = vmatpush1.bf16.msra.mxu0 %v3490
    %3515 = vmatprep.subr.bf16.mxu0 0
    %3516 = vmatpush1.bf16.msra.mxu0 0
    %3517 = vmatprep.subr.bf16.mxu0 0
    %3518 = vmatpush1.bf16.msra.mxu0 0
    %3519 = vmatprep.subr.bf16.mxu0 0
    %3520 = vmatpush1.bf16.msra.mxu0 0
    %3521 = vmatprep.subr.bf16.mxu0 0
    %3522 = vmatpush1.bf16.msra.mxu0 0
    %3523 = vmatprep.subr.bf16.mxu0 0
    %3524 = vmatpush1.bf16.msra.mxu0 0
    %3525 = vmatprep.subr.bf16.mxu0 0
    %3526 = vmatpush1.bf16.msra.mxu0 0
    %3527 = vmatprep.subr.bf16.mxu0 0
    %3528 = vmatpush1.bf16.msra.mxu0 0
    %3529 = vmatprep.subr.bf16.mxu0 0
    %3530 = vmatpush1.bf16.msra.mxu0 0
    %3531 = vmatprep.mubr.bf16.mxu0 0
    %3532 = vmatmul.mubr.bf16.gmra.mrb[0].mxu0 %v3418
    %v3533 = vpop.f32.mrb[0].mxu0
    %v3534 = vadd.f32 %v3449, %v3533
    %v3535 = vpop.f32.mrb[0].mxu0
    %v3536 = vpop.f32.mrb[0].mxu0
    %v3537 = vadd.f32 %v3449, %v3536
    %v3538 = vpop.f32.mrb[0].mxu0
    %3539 = vmatprep.mubr.bf16.mxu0 0
    %3540 = vmatmul.mubr.bf16.gmra.mrb[0].mxu0 %v3419
    %v3541 = vpop.f32.mrb[0].mxu0
    %v3542 = vadd.f32 %v3449, %v3541
    %v3543 = vpop.f32.mrb[0].mxu0
    %v3544 = vpop.f32.mrb[0].mxu0
    %v3545 = vadd.f32 %v3449, %v3544
    %v3546 = vpop.f32.mrb[0].mxu0
    %3547 = vmatprep.mubr.bf16.mxu0 0
    %3548 = vmatmul.mubr.bf16.gmra.mrb[0].mxu0 %v3420
    %v3549 = vpop.f32.mrb[0].mxu0
    %v3550 = vadd.f32 %v3449, %v3549
    %v3551 = vpop.f32.mrb[0].mxu0
    %v3552 = vpop.f32.mrb[0].mxu0
    %v3553 = vadd.f32 %v3449, %v3552
    %v3554 = vpop.f32.mrb[0].mxu0
    %3555 = vmatprep.mubr.bf16.mxu0 0
    %3556 = vmatmul.mubr.bf16.gmra.mrb[0].mxu0 %v3421
    %v3557 = vpop.f32.mrb[0].mxu0
    %v3558 = vadd.f32 %v3449, %v3557
    %v3559 = vpop.f32.mrb[0].mxu0
    %v3560 = vpop.f32.mrb[0].mxu0
    %v3561 = vadd.f32 %v3449, %v3560
    %v3562 = vpop.f32.mrb[0].mxu0
    %3563 = vmatprep.mubr.bf16.mxu0 0
    %3564 = vmatmul.mubr.bf16.gmra.mrb[0].mxu0 %v3422
    %v3565 = vpop.f32.mrb[0].mxu0
    %v3566 = vadd.f32 %v3449, %v3565
    %v3567 = vpop.f32.mrb[0].mxu0
    %v3568 = vpop.f32.mrb[0].mxu0
    %v3569 = vadd.f32 %v3449, %v3568
    %v3570 = vpop.f32.mrb[0].mxu0
    %3571 = vmatprep.mubr.bf16.mxu0 0
    %3572 = vmatmul.mubr.bf16.gmra.mrb[0].mxu0 %v3423
    %v3573 = vpop.f32.mrb[0].mxu0
    %v3574 = vadd.f32 %v3449, %v3573
    %v3575 = vpop.f32.mrb[0].mxu0
    %v3576 = vpop.f32.mrb[0].mxu0
    %v3577 = vadd.f32 %v3449, %v3576
    %v3578 = vpop.f32.mrb[0].mxu0
    %3579 = vmatprep.mubr.bf16.mxu0 0
    %3580 = vmatmul.mubr.bf16.gmra.mrb[0].mxu0 %v3424
    %v3581 = vpop.f32.mrb[0].mxu0
    %v3582 = vadd.f32 %v3449, %v3581
    %v3583 = vpop.f32.mrb[0].mxu0
    %v3584 = vpop.f32.mrb[0].mxu0
    %v3585 = vadd.f32 %v3449, %v3584
    %v3586 = vpop.f32.mrb[0].mxu0
    %3587 = vmatprep.mubr.bf16.mxu0 0
    %3588 = vmatmul.mubr.bf16.gmra.mrb[0].mxu0 %v3425
    %v3589 = vpop.f32.mrb[0].mxu0
    %v3590 = vadd.f32 %v3449, %v3589
    %v3591 = vpop.f32.mrb[0].mxu0
    %v3592 = vpop.f32.mrb[0].mxu0
    %v3593 = vadd.f32 %v3449, %v3592
    %v3594 = vpop.f32.mrb[0].mxu0
    %3595 = vdwg.mxu0
    %v3596 = vmul.f32 %v3534, 0.1
    %v3597 = vmul.f32 %v3537, 0.1
    %v3598 = vmul.f32 %v3542, 0.1
    %v3599 = vmul.f32 %v3545, 0.1
    %v3600 = vmul.f32 %v3550, 0.1
    %v3601 = vmul.f32 %v3553, 0.1
    %v3602 = vmul.f32 %v3558, 0.1
    %v3603 = vmul.f32 %v3561, 0.1
    %v3604 = vmul.f32 %v3566, 0.1
    %v3605 = vmul.f32 %v3569, 0.1
    %v3606 = vmul.f32 %v3574, 0.1
    %v3607 = vmul.f32 %v3577, 0.1
    %v3608 = vmul.f32 %v3582, 0.1
    %v3609 = vmul.f32 %v3585, 0.1
    %v3610 = vmul.f32 %v3590, 0.1
    %v3611 = vmul.f32 %v3593, 0.1
    %v3612 = vmax.f32 %v3534, %v3596
    %v3613 = vmax.f32 %v3537, %v3597
    %v3614 = vmax.f32 %v3542, %v3598
    %v3615 = vmax.f32 %v3545, %v3599
    %v3616 = vmax.f32 %v3550, %v3600
    %v3617 = vmax.f32 %v3553, %v3601
    %v3618 = vmax.f32 %v3558, %v3602
    %v3619 = vmax.f32 %v3561, %v3603
    %v3620 = vmax.f32 %v3566, %v3604
    %v3621 = vmax.f32 %v3569, %v3605
    %v3622 = vmax.f32 %v3574, %v3606
    %v3623 = vmax.f32 %v3577, %v3607
    %v3624 = vmax.f32 %v3582, %v3608
    %v3625 = vmax.f32 %v3585, %v3609
    %v3626 = vmax.f32 %v3590, %v3610
    %v3627 = vmax.f32 %v3593, %v3611
    %v3628 = vpack.c.bf16 %v3613, %v3612
    %v3629 = vpack.c.bf16 %v3615, %v3614
    %v3630 = vpack.c.bf16 %v3617, %v3616
    %v3631 = vpack.c.bf16 %v3619, %v3618
    %v3632 = vpack.c.bf16 %v3621, %v3620
    %v3633 = vpack.c.bf16 %v3623, %v3622
    %v3634 = vpack.c.bf16 %v3625, %v3624
    %v3635 = vpack.c.bf16 %v3627, %v3626
    %s3636 = scalar_lea.vmem [#allocation5], 4096
    %v3637 = vld [vmem:[%s3636] sm:$0xf]
    %v3638 = vld [vmem:[%s3636 + $0x8] sm:$0xf]
    %v3639 = vld [vmem:[%s3636 + $0x10] sm:$0xf]
    %v3640 = vld [vmem:[%s3636 + $0x18] sm:$0xf]
    %v3641 = vld [vmem:[%s3636 + $0x20] sm:$0xf]
    %v3642 = vld [vmem:[%s3636 + $0x28] sm:$0xf]
    %v3643 = vld [vmem:[%s3636 + $0x30] sm:$0xf]
    %v3644 = vld [vmem:[%s3636 + $0x38] sm:$0xf]
    %v3645 = vld [vmem:[%s3636 + $0x40] sm:$0xf]
    %v3646 = vld [vmem:[%s3636 + $0x48] sm:$0xf]
    %v3647 = vld [vmem:[%s3636 + $0x50] sm:$0xf]
    %v3648 = vld [vmem:[%s3636 + $0x58] sm:$0xf]
    %v3649 = vld [vmem:[%s3636 + $0x60] sm:$0xf]
    %v3650 = vld [vmem:[%s3636 + $0x68] sm:$0xf]
    %v3651 = vld [vmem:[%s3636 + $0x70] sm:$0xf]
    %v3652 = vld [vmem:[%s3636 + $0x78] sm:$0xf]
    %s3653 = scalar_lea.vmem [#allocation7], 32
    %v3654 = vld [vmem:[%s3653] sm:$0x1]
    %v3656 = vlaneseq
    %v3657 = vshrl.u32 %v3656, 7
    %v3658 = vsub.s32 0, %v3657
    %v3659 = vrot.slane %v3654, %v3658
    %v3677 = vunpack.c.l.b16 %v3637
    %v3678 = vunpack.c.l.b16 %v3638
    %v3679 = vunpack.c.l.b16 %v3639
    %v3680 = vunpack.c.l.b16 %v3640
    %v3681 = vunpack.c.l.b16 %v3641
    %v3682 = vunpack.c.l.b16 %v3642
    %v3683 = vunpack.c.l.b16 %v3643
    %v3684 = vunpack.c.l.b16 %v3644
    %v3685 = vunpack.c.l.b16 %v3645
    %v3686 = vunpack.c.l.b16 %v3646
    %v3687 = vunpack.c.l.b16 %v3647
    %v3688 = vunpack.c.l.b16 %v3648
    %v3689 = vunpack.c.l.b16 %v3649
    %v3690 = vunpack.c.l.b16 %v3650
    %v3691 = vunpack.c.l.b16 %v3651
    %v3692 = vunpack.c.l.b16 %v3652
    %v3693 = vpack.c.b16 %v3678, %v3677
    %v3694 = vpack.c.b16 %v3680, %v3679
    %v3695 = vpack.c.b16 %v3682, %v3681
    %v3696 = vpack.c.b16 %v3684, %v3683
    %v3697 = vpack.c.b16 %v3686, %v3685
    %v3698 = vpack.c.b16 %v3688, %v3687
    %v3699 = vpack.c.b16 %v3690, %v3689
    %v3700 = vpack.c.b16 %v3692, %v3691
    %3709 = vmatprep.subr.bf16.mxu0 0
    %3710 = vmatpush1.bf16.msra.mxu0 %v3693
    %3711 = vmatprep.subr.bf16.mxu0 0
    %3712 = vmatpush1.bf16.msra.mxu0 %v3694
    %3713 = vmatprep.subr.bf16.mxu0 0
    %3714 = vmatpush1.bf16.msra.mxu0 %v3695
    %3715 = vmatprep.subr.bf16.mxu0 0
    %3716 = vmatpush1.bf16.msra.mxu0 %v3696
    %3717 = vmatprep.subr.bf16.mxu0 0
    %3718 = vmatpush1.bf16.msra.mxu0 %v3697
    %3719 = vmatprep.subr.bf16.mxu0 0
    %3720 = vmatpush1.bf16.msra.mxu0 %v3698
    %3721 = vmatprep.subr.bf16.mxu0 0
    %3722 = vmatpush1.bf16.msra.mxu0 %v3699
    %3723 = vmatprep.subr.bf16.mxu0 0
    %3724 = vmatpush1.bf16.msra.mxu0 %v3700
    %3725 = vmatprep.subr.bf16.mxu0 0
    %3726 = vmatpush1.bf16.msra.mxu0 0
    %3727 = vmatprep.subr.bf16.mxu0 0
    %3728 = vmatpush1.bf16.msra.mxu0 0
    %3729 = vmatprep.subr.bf16.mxu0 0
    %3730 = vmatpush1.bf16.msra.mxu0 0
    %3731 = vmatprep.subr.bf16.mxu0 0
    %3732 = vmatpush1.bf16.msra.mxu0 0
    %3733 = vmatprep.subr.bf16.mxu0 0
    %3734 = vmatpush1.bf16.msra.mxu0 0
    %3735 = vmatprep.subr.bf16.mxu0 0
    %3736 = vmatpush1.bf16.msra.mxu0 0
    %3737 = vmatprep.subr.bf16.mxu0 0
    %3738 = vmatpush1.bf16.msra.mxu0 0
    %3739 = vmatprep.subr.bf16.mxu0 0
    %3740 = vmatpush1.bf16.msra.mxu0 0
    %3741 = vmatprep.mubr.bf16.mxu0 0
    %3742 = vmatmul.mubr.bf16.gmra.mrb[0].mxu0 %v3628
    %v3743 = vpop.f32.mrb[0].mxu0
    %v3744 = vadd.f32 %v3659, %v3743
    %v3745 = vpop.f32.mrb[0].mxu0
    %v3746 = vpop.f32.mrb[0].mxu0
    %v3747 = vadd.f32 %v3659, %v3746
    %v3748 = vpop.f32.mrb[0].mxu0
    %3749 = vmatprep.mubr.bf16.mxu0 0
    %3750 = vmatmul.mubr.bf16.gmra.mrb[0].mxu0 %v3629
    %v3751 = vpop.f32.mrb[0].mxu0
    %v3752 = vadd.f32 %v3659, %v3751
    %v3753 = vpop.f32.mrb[0].mxu0
    %v3754 = vpop.f32.mrb[0].mxu0
    %v3755 = vadd.f32 %v3659, %v3754
    %v3756 = vpop.f32.mrb[0].mxu0
    %3757 = vmatprep.mubr.bf16.mxu0 0
    %3758 = vmatmul.mubr.bf16.gmra.mrb[0].mxu0 %v3630
    %v3759 = vpop.f32.mrb[0].mxu0
    %v3760 = vadd.f32 %v3659, %v3759
    %v3761 = vpop.f32.mrb[0].mxu0
    %v3762 = vpop.f32.mrb[0].mxu0
    %v3763 = vadd.f32 %v3659, %v3762
    %v3764 = vpop.f32.mrb[0].mxu0
    %3765 = vmatprep.mubr.bf16.mxu0 0
    %3766 = vmatmul.mubr.bf16.gmra.mrb[0].mxu0 %v3631
    %v3767 = vpop.f32.mrb[0].mxu0
    %v3768 = vadd.f32 %v3659, %v3767
    %v3769 = vpop.f32.mrb[0].mxu0
    %v3770 = vpop.f32.mrb[0].mxu0
    %v3771 = vadd.f32 %v3659, %v3770
    %v3772 = vpop.f32.mrb[0].mxu0
    %3773 = vmatprep.mubr.bf16.mxu0 0
    %3774 = vmatmul.mubr.bf16.gmra.mrb[0].mxu0 %v3632
    %v3775 = vpop.f32.mrb[0].mxu0
    %v3776 = vadd.f32 %v3659, %v3775
    %v3777 = vpop.f32.mrb[0].mxu0
    %v3778 = vpop.f32.mrb[0].mxu0
    %v3779 = vadd.f32 %v3659, %v3778
    %v3780 = vpop.f32.mrb[0].mxu0
    %3781 = vmatprep.mubr.bf16.mxu0 0
    %3782 = vmatmul.mubr.bf16.gmra.mrb[0].mxu0 %v3633
    %v3783 = vpop.f32.mrb[0].mxu0
    %v3784 = vadd.f32 %v3659, %v3783
    %v3785 = vpop.f32.mrb[0].mxu0
    %v3786 = vpop.f32.mrb[0].mxu0
    %v3787 = vadd.f32 %v3659, %v3786
    %v3788 = vpop.f32.mrb[0].mxu0
    %3789 = vmatprep.mubr.bf16.mxu0 0
    %3790 = vmatmul.mubr.bf16.gmra.mrb[0].mxu0 %v3634
    %v3791 = vpop.f32.mrb[0].mxu0
    %v3792 = vadd.f32 %v3659, %v3791
    %v3793 = vpop.f32.mrb[0].mxu0
    %v3794 = vpop.f32.mrb[0].mxu0
    %v3795 = vadd.f32 %v3659, %v3794
    %v3796 = vpop.f32.mrb[0].mxu0
    %3797 = vmatprep.mubr.bf16.mxu0 0
    %3798 = vmatmul.mubr.bf16.gmra.mrb[0].mxu0 %v3635
    %v3799 = vpop.f32.mrb[0].mxu0
    %v3800 = vadd.f32 %v3659, %v3799
    %v3801 = vpop.f32.mrb[0].mxu0
    %v3802 = vpop.f32.mrb[0].mxu0
    %v3803 = vadd.f32 %v3659, %v3802
    %v3804 = vpop.f32.mrb[0].mxu0
    %3805 = vdwg.mxu0
    %v3806 = vmul.f32 %v3744, 0.1
    %v3807 = vmul.f32 %v3747, 0.1
    %v3808 = vmul.f32 %v3752, 0.1
    %v3809 = vmul.f32 %v3755, 0.1
    %v3810 = vmul.f32 %v3760, 0.1
    %v3811 = vmul.f32 %v3763, 0.1
    %v3812 = vmul.f32 %v3768, 0.1
    %v3813 = vmul.f32 %v3771, 0.1
    %v3814 = vmul.f32 %v3776, 0.1
    %v3815 = vmul.f32 %v3779, 0.1
    %v3816 = vmul.f32 %v3784, 0.1
    %v3817 = vmul.f32 %v3787, 0.1
    %v3818 = vmul.f32 %v3792, 0.1
    %v3819 = vmul.f32 %v3795, 0.1
    %v3820 = vmul.f32 %v3800, 0.1
    %v3821 = vmul.f32 %v3803, 0.1
    %v3822 = vmax.f32 %v3744, %v3806
    %v3823 = vmax.f32 %v3747, %v3807
    %v3824 = vmax.f32 %v3752, %v3808
    %v3825 = vmax.f32 %v3755, %v3809
    %v3826 = vmax.f32 %v3760, %v3810
    %v3827 = vmax.f32 %v3763, %v3811
    %v3828 = vmax.f32 %v3768, %v3812
    %v3829 = vmax.f32 %v3771, %v3813
    %v3830 = vmax.f32 %v3776, %v3814
    %v3831 = vmax.f32 %v3779, %v3815
    %v3832 = vmax.f32 %v3784, %v3816
    %v3833 = vmax.f32 %v3787, %v3817
    %v3834 = vmax.f32 %v3792, %v3818
    %v3835 = vmax.f32 %v3795, %v3819
    %v3836 = vmax.f32 %v3800, %v3820
    %v3837 = vmax.f32 %v3803, %v3821
    %v3838 = vpack.c.bf16 %v3823, %v3822
    %v3839 = vpack.c.bf16 %v3825, %v3824
    %v3840 = vpack.c.bf16 %v3827, %v3826
    %v3841 = vpack.c.bf16 %v3829, %v3828
    %v3842 = vpack.c.bf16 %v3831, %v3830
    %v3843 = vpack.c.bf16 %v3833, %v3832
    %v3844 = vpack.c.bf16 %v3835, %v3834
    %v3845 = vpack.c.bf16 %v3837, %v3836
    %s3846 = scalar_lea.vmem [#allocation5], 4352
    %v3847 = vld [vmem:[%s3846] sm:$0xf]
    %v3848 = vld [vmem:[%s3846 + $0x8] sm:$0xf]
    %v3849 = vld [vmem:[%s3846 + $0x10] sm:$0xf]
    %v3850 = vld [vmem:[%s3846 + $0x18] sm:$0xf]
    %v3851 = vld [vmem:[%s3846 + $0x20] sm:$0xf]
    %v3852 = vld [vmem:[%s3846 + $0x28] sm:$0xf]
    %v3853 = vld [vmem:[%s3846 + $0x30] sm:$0xf]
    %v3854 = vld [vmem:[%s3846 + $0x38] sm:$0xf]
    %v3855 = vld [vmem:[%s3846 + $0x40] sm:$0xf]
    %v3856 = vld [vmem:[%s3846 + $0x48] sm:$0xf]
    %v3857 = vld [vmem:[%s3846 + $0x50] sm:$0xf]
    %v3858 = vld [vmem:[%s3846 + $0x58] sm:$0xf]
    %v3859 = vld [vmem:[%s3846 + $0x60] sm:$0xf]
    %v3860 = vld [vmem:[%s3846 + $0x68] sm:$0xf]
    %v3861 = vld [vmem:[%s3846 + $0x70] sm:$0xf]
    %v3862 = vld [vmem:[%s3846 + $0x78] sm:$0xf]
    %s3863 = scalar_lea.vmem [#allocation7], 34
    %v3864 = vld [vmem:[%s3863] sm:$0x1]
    %v3866 = vlaneseq
    %v3867 = vshrl.u32 %v3866, 7
    %v3868 = vsub.s32 0, %v3867
    %v3869 = vrot.slane %v3864, %v3868
    %v3887 = vunpack.c.l.b16 %v3847
    %v3888 = vunpack.c.l.b16 %v3848
    %v3889 = vunpack.c.l.b16 %v3849
    %v3890 = vunpack.c.l.b16 %v3850
    %v3891 = vunpack.c.l.b16 %v3851
    %v3892 = vunpack.c.l.b16 %v3852
    %v3893 = vunpack.c.l.b16 %v3853
    %v3894 = vunpack.c.l.b16 %v3854
    %v3895 = vunpack.c.l.b16 %v3855
    %v3896 = vunpack.c.l.b16 %v3856
    %v3897 = vunpack.c.l.b16 %v3857
    %v3898 = vunpack.c.l.b16 %v3858
    %v3899 = vunpack.c.l.b16 %v3859
    %v3900 = vunpack.c.l.b16 %v3860
    %v3901 = vunpack.c.l.b16 %v3861
    %v3902 = vunpack.c.l.b16 %v3862
    %v3903 = vpack.c.b16 %v3888, %v3887
    %v3904 = vpack.c.b16 %v3890, %v3889
    %v3905 = vpack.c.b16 %v3892, %v3891
    %v3906 = vpack.c.b16 %v3894, %v3893
    %v3907 = vpack.c.b16 %v3896, %v3895
    %v3908 = vpack.c.b16 %v3898, %v3897
    %v3909 = vpack.c.b16 %v3900, %v3899
    %v3910 = vpack.c.b16 %v3902, %v3901
    %3919 = vmatprep.subr.bf16.mxu0 0
    %3920 = vmatpush1.bf16.msra.mxu0 %v3903
    %3921 = vmatprep.subr.bf16.mxu0 0
    %3922 = vmatpush1.bf16.msra.mxu0 %v3904
    %3923 = vmatprep.subr.bf16.mxu0 0
    %3924 = vmatpush1.bf16.msra.mxu0 %v3905
    %3925 = vmatprep.subr.bf16.mxu0 0
    %3926 = vmatpush1.bf16.msra.mxu0 %v3906
    %3927 = vmatprep.subr.bf16.mxu0 0
    %3928 = vmatpush1.bf16.msra.mxu0 %v3907
    %3929 = vmatprep.subr.bf16.mxu0 0
    %3930 = vmatpush1.bf16.msra.mxu0 %v3908
    %3931 = vmatprep.subr.bf16.mxu0 0
    %3932 = vmatpush1.bf16.msra.mxu0 %v3909
    %3933 = vmatprep.subr.bf16.mxu0 0
    %3934 = vmatpush1.bf16.msra.mxu0 %v3910
    %3935 = vmatprep.subr.bf16.mxu0 0
    %3936 = vmatpush1.bf16.msra.mxu0 0
    %3937 = vmatprep.subr.bf16.mxu0 0
    %3938 = vmatpush1.bf16.msra.mxu0 0
    %3939 = vmatprep.subr.bf16.mxu0 0
    %3940 = vmatpush1.bf16.msra.mxu0 0
    %3941 = vmatprep.subr.bf16.mxu0 0
    %3942 = vmatpush1.bf16.msra.mxu0 0
    %3943 = vmatprep.subr.bf16.mxu0 0
    %3944 = vmatpush1.bf16.msra.mxu0 0
    %3945 = vmatprep.subr.bf16.mxu0 0
    %3946 = vmatpush1.bf16.msra.mxu0 0
    %3947 = vmatprep.subr.bf16.mxu0 0
    %3948 = vmatpush1.bf16.msra.mxu0 0
    %3949 = vmatprep.subr.bf16.mxu0 0
    %3950 = vmatpush1.bf16.msra.mxu0 0
    %3951 = vmatprep.mubr.bf16.mxu0 0
    %3952 = vmatmul.mubr.bf16.gmra.mrb[0].mxu0 %v3838
    %v3953 = vpop.f32.mrb[0].mxu0
    %v3954 = vadd.f32 %v3869, %v3953
    %v3955 = vpop.f32.mrb[0].mxu0
    %v3956 = vpop.f32.mrb[0].mxu0
    %v3957 = vadd.f32 %v3869, %v3956
    %v3958 = vpop.f32.mrb[0].mxu0
    %3959 = vmatprep.mubr.bf16.mxu0 0
    %3960 = vmatmul.mubr.bf16.gmra.mrb[0].mxu0 %v3839
    %v3961 = vpop.f32.mrb[0].mxu0
    %v3962 = vadd.f32 %v3869, %v3961
    %v3963 = vpop.f32.mrb[0].mxu0
    %v3964 = vpop.f32.mrb[0].mxu0
    %v3965 = vadd.f32 %v3869, %v3964
    %v3966 = vpop.f32.mrb[0].mxu0
    %3967 = vmatprep.mubr.bf16.mxu0 0
    %3968 = vmatmul.mubr.bf16.gmra.mrb[0].mxu0 %v3840
    %v3969 = vpop.f32.mrb[0].mxu0
    %v3970 = vadd.f32 %v3869, %v3969
    %v3971 = vpop.f32.mrb[0].mxu0
    %v3972 = vpop.f32.mrb[0].mxu0
    %v3973 = vadd.f32 %v3869, %v3972
    %v3974 = vpop.f32.mrb[0].mxu0
    %3975 = vmatprep.mubr.bf16.mxu0 0
    %3976 = vmatmul.mubr.bf16.gmra.mrb[0].mxu0 %v3841
    %v3977 = vpop.f32.mrb[0].mxu0
    %v3978 = vadd.f32 %v3869, %v3977
    %v3979 = vpop.f32.mrb[0].mxu0
    %v3980 = vpop.f32.mrb[0].mxu0
    %v3981 = vadd.f32 %v3869, %v3980
    %v3982 = vpop.f32.mrb[0].mxu0
    %3983 = vmatprep.mubr.bf16.mxu0 0
    %3984 = vmatmul.mubr.bf16.gmra.mrb[0].mxu0 %v3842
    %v3985 = vpop.f32.mrb[0].mxu0
    %v3986 = vadd.f32 %v3869, %v3985
    %v3987 = vpop.f32.mrb[0].mxu0
    %v3988 = vpop.f32.mrb[0].mxu0
    %v3989 = vadd.f32 %v3869, %v3988
    %v3990 = vpop.f32.mrb[0].mxu0
    %3991 = vmatprep.mubr.bf16.mxu0 0
    %3992 = vmatmul.mubr.bf16.gmra.mrb[0].mxu0 %v3843
    %v3993 = vpop.f32.mrb[0].mxu0
    %v3994 = vadd.f32 %v3869, %v3993
    %v3995 = vpop.f32.mrb[0].mxu0
    %v3996 = vpop.f32.mrb[0].mxu0
    %v3997 = vadd.f32 %v3869, %v3996
    %v3998 = vpop.f32.mrb[0].mxu0
    %3999 = vmatprep.mubr.bf16.mxu0 0
    %4000 = vmatmul.mubr.bf16.gmra.mrb[0].mxu0 %v3844
    %v4001 = vpop.f32.mrb[0].mxu0
    %v4002 = vadd.f32 %v3869, %v4001
    %v4003 = vpop.f32.mrb[0].mxu0
    %v4004 = vpop.f32.mrb[0].mxu0
    %v4005 = vadd.f32 %v3869, %v4004
    %v4006 = vpop.f32.mrb[0].mxu0
    %4007 = vmatprep.mubr.bf16.mxu0 0
    %4008 = vmatmul.mubr.bf16.gmra.mrb[0].mxu0 %v3845
    %v4009 = vpop.f32.mrb[0].mxu0
    %v4010 = vadd.f32 %v3869, %v4009
    %v4011 = vpop.f32.mrb[0].mxu0
    %v4012 = vpop.f32.mrb[0].mxu0
    %v4013 = vadd.f32 %v3869, %v4012
    %v4014 = vpop.f32.mrb[0].mxu0
    %4015 = vdwg.mxu0
    %v4016 = vmul.f32 %v3954, 0.1
    %v4017 = vmul.f32 %v3957, 0.1
    %v4018 = vmul.f32 %v3962, 0.1
    %v4019 = vmul.f32 %v3965, 0.1
    %v4020 = vmul.f32 %v3970, 0.1
    %v4021 = vmul.f32 %v3973, 0.1
    %v4022 = vmul.f32 %v3978, 0.1
    %v4023 = vmul.f32 %v3981, 0.1
    %v4024 = vmul.f32 %v3986, 0.1
    %v4025 = vmul.f32 %v3989, 0.1
    %v4026 = vmul.f32 %v3994, 0.1
    %v4027 = vmul.f32 %v3997, 0.1
    %v4028 = vmul.f32 %v4002, 0.1
    %v4029 = vmul.f32 %v4005, 0.1
    %v4030 = vmul.f32 %v4010, 0.1
    %v4031 = vmul.f32 %v4013, 0.1
    %v4032 = vmax.f32 %v3954, %v4016
    %v4033 = vmax.f32 %v3957, %v4017
    %v4034 = vmax.f32 %v3962, %v4018
    %v4035 = vmax.f32 %v3965, %v4019
    %v4036 = vmax.f32 %v3970, %v4020
    %v4037 = vmax.f32 %v3973, %v4021
    %v4038 = vmax.f32 %v3978, %v4022
    %v4039 = vmax.f32 %v3981, %v4023
    %v4040 = vmax.f32 %v3986, %v4024
    %v4041 = vmax.f32 %v3989, %v4025
    %v4042 = vmax.f32 %v3994, %v4026
    %v4043 = vmax.f32 %v3997, %v4027
    %v4044 = vmax.f32 %v4002, %v4028
    %v4045 = vmax.f32 %v4005, %v4029
    %v4046 = vmax.f32 %v4010, %v4030
    %v4047 = vmax.f32 %v4013, %v4031
    %v4048 = vpack.c.bf16 %v4033, %v4032
    %v4049 = vpack.c.bf16 %v4035, %v4034
    %v4050 = vpack.c.bf16 %v4037, %v4036
    %v4051 = vpack.c.bf16 %v4039, %v4038
    %v4052 = vpack.c.bf16 %v4041, %v4040
    %v4053 = vpack.c.bf16 %v4043, %v4042
    %v4054 = vpack.c.bf16 %v4045, %v4044
    %v4055 = vpack.c.bf16 %v4047, %v4046
    %s4056 = scalar_lea.vmem [#allocation5], 4608
    %v4057 = vld [vmem:[%s4056] sm:$0xf]
    %v4058 = vld [vmem:[%s4056 + $0x8] sm:$0xf]
    %v4059 = vld [vmem:[%s4056 + $0x10] sm:$0xf]
    %v4060 = vld [vmem:[%s4056 + $0x18] sm:$0xf]
    %v4061 = vld [vmem:[%s4056 + $0x20] sm:$0xf]
    %v4062 = vld [vmem:[%s4056 + $0x28] sm:$0xf]
    %v4063 = vld [vmem:[%s4056 + $0x30] sm:$0xf]
    %v4064 = vld [vmem:[%s4056 + $0x38] sm:$0xf]
    %v4065 = vld [vmem:[%s4056 + $0x40] sm:$0xf]
    %v4066 = vld [vmem:[%s4056 + $0x48] sm:$0xf]
    %v4067 = vld [vmem:[%s4056 + $0x50] sm:$0xf]
    %v4068 = vld [vmem:[%s4056 + $0x58] sm:$0xf]
    %v4069 = vld [vmem:[%s4056 + $0x60] sm:$0xf]
    %v4070 = vld [vmem:[%s4056 + $0x68] sm:$0xf]
    %v4071 = vld [vmem:[%s4056 + $0x70] sm:$0xf]
    %v4072 = vld [vmem:[%s4056 + $0x78] sm:$0xf]
    %s4073 = scalar_lea.vmem [#allocation7], 36
    %v4074 = vld [vmem:[%s4073] sm:$0x1]
    %v4076 = vlaneseq
    %v4077 = vshrl.u32 %v4076, 7
    %v4078 = vsub.s32 0, %v4077
    %v4079 = vrot.slane %v4074, %v4078
    %v4097 = vunpack.c.l.b16 %v4057
    %v4098 = vunpack.c.l.b16 %v4058
    %v4099 = vunpack.c.l.b16 %v4059
    %v4100 = vunpack.c.l.b16 %v4060
    %v4101 = vunpack.c.l.b16 %v4061
    %v4102 = vunpack.c.l.b16 %v4062
    %v4103 = vunpack.c.l.b16 %v4063
    %v4104 = vunpack.c.l.b16 %v4064
    %v4105 = vunpack.c.l.b16 %v4065
    %v4106 = vunpack.c.l.b16 %v4066
    %v4107 = vunpack.c.l.b16 %v4067
    %v4108 = vunpack.c.l.b16 %v4068
    %v4109 = vunpack.c.l.b16 %v4069
    %v4110 = vunpack.c.l.b16 %v4070
    %v4111 = vunpack.c.l.b16 %v4071
    %v4112 = vunpack.c.l.b16 %v4072
    %v4113 = vpack.c.b16 %v4098, %v4097
    %v4114 = vpack.c.b16 %v4100, %v4099
    %v4115 = vpack.c.b16 %v4102, %v4101
    %v4116 = vpack.c.b16 %v4104, %v4103
    %v4117 = vpack.c.b16 %v4106, %v4105
    %v4118 = vpack.c.b16 %v4108, %v4107
    %v4119 = vpack.c.b16 %v4110, %v4109
    %v4120 = vpack.c.b16 %v4112, %v4111
    %4129 = vmatprep.subr.bf16.mxu0 0
    %4130 = vmatpush1.bf16.msra.mxu0 %v4113
    %4131 = vmatprep.subr.bf16.mxu0 0
    %4132 = vmatpush1.bf16.msra.mxu0 %v4114
    %4133 = vmatprep.subr.bf16.mxu0 0
    %4134 = vmatpush1.bf16.msra.mxu0 %v4115
    %4135 = vmatprep.subr.bf16.mxu0 0
    %4136 = vmatpush1.bf16.msra.mxu0 %v4116
    %4137 = vmatprep.subr.bf16.mxu0 0
    %4138 = vmatpush1.bf16.msra.mxu0 %v4117
    %4139 = vmatprep.subr.bf16.mxu0 0
    %4140 = vmatpush1.bf16.msra.mxu0 %v4118
    %4141 = vmatprep.subr.bf16.mxu0 0
    %4142 = vmatpush1.bf16.msra.mxu0 %v4119
    %4143 = vmatprep.subr.bf16.mxu0 0
    %4144 = vmatpush1.bf16.msra.mxu0 %v4120
    %4145 = vmatprep.subr.bf16.mxu0 0
    %4146 = vmatpush1.bf16.msra.mxu0 0
    %4147 = vmatprep.subr.bf16.mxu0 0
    %4148 = vmatpush1.bf16.msra.mxu0 0
    %4149 = vmatprep.subr.bf16.mxu0 0
    %4150 = vmatpush1.bf16.msra.mxu0 0
    %4151 = vmatprep.subr.bf16.mxu0 0
    %4152 = vmatpush1.bf16.msra.mxu0 0
    %4153 = vmatprep.subr.bf16.mxu0 0
    %4154 = vmatpush1.bf16.msra.mxu0 0
    %4155 = vmatprep.subr.bf16.mxu0 0
    %4156 = vmatpush1.bf16.msra.mxu0 0
    %4157 = vmatprep.subr.bf16.mxu0 0
    %4158 = vmatpush1.bf16.msra.mxu0 0
    %4159 = vmatprep.subr.bf16.mxu0 0
    %4160 = vmatpush1.bf16.msra.mxu0 0
    %4161 = vmatprep.mubr.bf16.mxu0 0
    %4162 = vmatmul.mubr.bf16.gmra.mrb[0].mxu0 %v4048
    %v4163 = vpop.f32.mrb[0].mxu0
    %v4164 = vadd.f32 %v4079, %v4163
    %v4165 = vpop.f32.mrb[0].mxu0
    %v4166 = vpop.f32.mrb[0].mxu0
    %v4167 = vadd.f32 %v4079, %v4166
    %v4168 = vpop.f32.mrb[0].mxu0
    %4169 = vmatprep.mubr.bf16.mxu0 0
    %4170 = vmatmul.mubr.bf16.gmra.mrb[0].mxu0 %v4049
    %v4171 = vpop.f32.mrb[0].mxu0
    %v4172 = vadd.f32 %v4079, %v4171
    %v4173 = vpop.f32.mrb[0].mxu0
    %v4174 = vpop.f32.mrb[0].mxu0
    %v4175 = vadd.f32 %v4079, %v4174
    %v4176 = vpop.f32.mrb[0].mxu0
    %4177 = vmatprep.mubr.bf16.mxu0 0
    %4178 = vmatmul.mubr.bf16.gmra.mrb[0].mxu0 %v4050
    %v4179 = vpop.f32.mrb[0].mxu0
    %v4180 = vadd.f32 %v4079, %v4179
    %v4181 = vpop.f32.mrb[0].mxu0
    %v4182 = vpop.f32.mrb[0].mxu0
    %v4183 = vadd.f32 %v4079, %v4182
    %v4184 = vpop.f32.mrb[0].mxu0
    %4185 = vmatprep.mubr.bf16.mxu0 0
    %4186 = vmatmul.mubr.bf16.gmra.mrb[0].mxu0 %v4051
    %v4187 = vpop.f32.mrb[0].mxu0
    %v4188 = vadd.f32 %v4079, %v4187
    %v4189 = vpop.f32.mrb[0].mxu0
    %v4190 = vpop.f32.mrb[0].mxu0
    %v4191 = vadd.f32 %v4079, %v4190
    %v4192 = vpop.f32.mrb[0].mxu0
    %4193 = vmatprep.mubr.bf16.mxu0 0
    %4194 = vmatmul.mubr.bf16.gmra.mrb[0].mxu0 %v4052
    %v4195 = vpop.f32.mrb[0].mxu0
    %v4196 = vadd.f32 %v4079, %v4195
    %v4197 = vpop.f32.mrb[0].mxu0
    %v4198 = vpop.f32.mrb[0].mxu0
    %v4199 = vadd.f32 %v4079, %v4198
    %v4200 = vpop.f32.mrb[0].mxu0
    %4201 = vmatprep.mubr.bf16.mxu0 0
    %4202 = vmatmul.mubr.bf16.gmra.mrb[0].mxu0 %v4053
    %v4203 = vpop.f32.mrb[0].mxu0
    %v4204 = vadd.f32 %v4079, %v4203
    %v4205 = vpop.f32.mrb[0].mxu0
    %v4206 = vpop.f32.mrb[0].mxu0
    %v4207 = vadd.f32 %v4079, %v4206
    %v4208 = vpop.f32.mrb[0].mxu0
    %4209 = vmatprep.mubr.bf16.mxu0 0
    %4210 = vmatmul.mubr.bf16.gmra.mrb[0].mxu0 %v4054
    %v4211 = vpop.f32.mrb[0].mxu0
    %v4212 = vadd.f32 %v4079, %v4211
    %v4213 = vpop.f32.mrb[0].mxu0
    %v4214 = vpop.f32.mrb[0].mxu0
    %v4215 = vadd.f32 %v4079, %v4214
    %v4216 = vpop.f32.mrb[0].mxu0
    %4217 = vmatprep.mubr.bf16.mxu0 0
    %4218 = vmatmul.mubr.bf16.gmra.mrb[0].mxu0 %v4055
    %v4219 = vpop.f32.mrb[0].mxu0
    %v4220 = vadd.f32 %v4079, %v4219
    %v4221 = vpop.f32.mrb[0].mxu0
    %v4222 = vpop.f32.mrb[0].mxu0
    %v4223 = vadd.f32 %v4079, %v4222
    %v4224 = vpop.f32.mrb[0].mxu0
    %4225 = vdwg.mxu0
    %v4226 = vmul.f32 %v4164, 0.1
    %v4227 = vmul.f32 %v4167, 0.1
    %v4228 = vmul.f32 %v4172, 0.1
    %v4229 = vmul.f32 %v4175, 0.1
    %v4230 = vmul.f32 %v4180, 0.1
    %v4231 = vmul.f32 %v4183, 0.1
    %v4232 = vmul.f32 %v4188, 0.1
    %v4233 = vmul.f32 %v4191, 0.1
    %v4234 = vmul.f32 %v4196, 0.1
    %v4235 = vmul.f32 %v4199, 0.1
    %v4236 = vmul.f32 %v4204, 0.1
    %v4237 = vmul.f32 %v4207, 0.1
    %v4238 = vmul.f32 %v4212, 0.1
    %v4239 = vmul.f32 %v4215, 0.1
    %v4240 = vmul.f32 %v4220, 0.1
    %v4241 = vmul.f32 %v4223, 0.1
    %v4242 = vmax.f32 %v4164, %v4226
    %v4243 = vmax.f32 %v4167, %v4227
    %v4244 = vmax.f32 %v4172, %v4228
    %v4245 = vmax.f32 %v4175, %v4229
    %v4246 = vmax.f32 %v4180, %v4230
    %v4247 = vmax.f32 %v4183, %v4231
    %v4248 = vmax.f32 %v4188, %v4232
    %v4249 = vmax.f32 %v4191, %v4233
    %v4250 = vmax.f32 %v4196, %v4234
    %v4251 = vmax.f32 %v4199, %v4235
    %v4252 = vmax.f32 %v4204, %v4236
    %v4253 = vmax.f32 %v4207, %v4237
    %v4254 = vmax.f32 %v4212, %v4238
    %v4255 = vmax.f32 %v4215, %v4239
    %v4256 = vmax.f32 %v4220, %v4240
    %v4257 = vmax.f32 %v4223, %v4241
    %v4258 = vpack.c.bf16 %v4243, %v4242
    %v4259 = vpack.c.bf16 %v4245, %v4244
    %v4260 = vpack.c.bf16 %v4247, %v4246
    %v4261 = vpack.c.bf16 %v4249, %v4248
    %v4262 = vpack.c.bf16 %v4251, %v4250
    %v4263 = vpack.c.bf16 %v4253, %v4252
    %v4264 = vpack.c.bf16 %v4255, %v4254
    %v4265 = vpack.c.bf16 %v4257, %v4256
    %s4266 = scalar_lea.vmem [#allocation5], 4864
    %v4267 = vld [vmem:[%s4266] sm:$0xf]
    %v4268 = vld [vmem:[%s4266 + $0x8] sm:$0xf]
    %v4269 = vld [vmem:[%s4266 + $0x10] sm:$0xf]
    %v4270 = vld [vmem:[%s4266 + $0x18] sm:$0xf]
    %v4271 = vld [vmem:[%s4266 + $0x20] sm:$0xf]
    %v4272 = vld [vmem:[%s4266 + $0x28] sm:$0xf]
    %v4273 = vld [vmem:[%s4266 + $0x30] sm:$0xf]
    %v4274 = vld [vmem:[%s4266 + $0x38] sm:$0xf]
    %v4275 = vld [vmem:[%s4266 + $0x40] sm:$0xf]
    %v4276 = vld [vmem:[%s4266 + $0x48] sm:$0xf]
    %v4277 = vld [vmem:[%s4266 + $0x50] sm:$0xf]
    %v4278 = vld [vmem:[%s4266 + $0x58] sm:$0xf]
    %v4279 = vld [vmem:[%s4266 + $0x60] sm:$0xf]
    %v4280 = vld [vmem:[%s4266 + $0x68] sm:$0xf]
    %v4281 = vld [vmem:[%s4266 + $0x70] sm:$0xf]
    %v4282 = vld [vmem:[%s4266 + $0x78] sm:$0xf]
    %s4283 = scalar_lea.vmem [#allocation7], 38
    %v4284 = vld [vmem:[%s4283] sm:$0x1]
    %v4286 = vlaneseq
    %v4287 = vshrl.u32 %v4286, 7
    %v4288 = vsub.s32 0, %v4287
    %v4289 = vrot.slane %v4284, %v4288
    %v4307 = vunpack.c.l.b16 %v4267
    %v4308 = vunpack.c.l.b16 %v4268
    %v4309 = vunpack.c.l.b16 %v4269
    %v4310 = vunpack.c.l.b16 %v4270
    %v4311 = vunpack.c.l.b16 %v4271
    %v4312 = vunpack.c.l.b16 %v4272
    %v4313 = vunpack.c.l.b16 %v4273
    %v4314 = vunpack.c.l.b16 %v4274
    %v4315 = vunpack.c.l.b16 %v4275
    %v4316 = vunpack.c.l.b16 %v4276
    %v4317 = vunpack.c.l.b16 %v4277
    %v4318 = vunpack.c.l.b16 %v4278
    %v4319 = vunpack.c.l.b16 %v4279
    %v4320 = vunpack.c.l.b16 %v4280
    %v4321 = vunpack.c.l.b16 %v4281
    %v4322 = vunpack.c.l.b16 %v4282
    %v4323 = vpack.c.b16 %v4308, %v4307
    %v4324 = vpack.c.b16 %v4310, %v4309
    %v4325 = vpack.c.b16 %v4312, %v4311
    %v4326 = vpack.c.b16 %v4314, %v4313
    %v4327 = vpack.c.b16 %v4316, %v4315
    %v4328 = vpack.c.b16 %v4318, %v4317
    %v4329 = vpack.c.b16 %v4320, %v4319
    %v4330 = vpack.c.b16 %v4322, %v4321
    %4339 = vmatprep.subr.bf16.mxu0 0
    %4340 = vmatpush1.bf16.msra.mxu0 %v4323
    %4341 = vmatprep.subr.bf16.mxu0 0
    %4342 = vmatpush1.bf16.msra.mxu0 %v4324
    %4343 = vmatprep.subr.bf16.mxu0 0
    %4344 = vmatpush1.bf16.msra.mxu0 %v4325
    %4345 = vmatprep.subr.bf16.mxu0 0
    %4346 = vmatpush1.bf16.msra.mxu0 %v4326
    %4347 = vmatprep.subr.bf16.mxu0 0
    %4348 = vmatpush1.bf16.msra.mxu0 %v4327
    %4349 = vmatprep.subr.bf16.mxu0 0
    %4350 = vmatpush1.bf16.msra.mxu0 %v4328
    %4351 = vmatprep.subr.bf16.mxu0 0
    %4352 = vmatpush1.bf16.msra.mxu0 %v4329
    %4353 = vmatprep.subr.bf16.mxu0 0
    %4354 = vmatpush1.bf16.msra.mxu0 %v4330
    %4355 = vmatprep.subr.bf16.mxu0 0
    %4356 = vmatpush1.bf16.msra.mxu0 0
    %4357 = vmatprep.subr.bf16.mxu0 0
    %4358 = vmatpush1.bf16.msra.mxu0 0
    %4359 = vmatprep.subr.bf16.mxu0 0
    %4360 = vmatpush1.bf16.msra.mxu0 0
    %4361 = vmatprep.subr.bf16.mxu0 0
    %4362 = vmatpush1.bf16.msra.mxu0 0
    %4363 = vmatprep.subr.bf16.mxu0 0
    %4364 = vmatpush1.bf16.msra.mxu0 0
    %4365 = vmatprep.subr.bf16.mxu0 0
    %4366 = vmatpush1.bf16.msra.mxu0 0
    %4367 = vmatprep.subr.bf16.mxu0 0
    %4368 = vmatpush1.bf16.msra.mxu0 0
    %4369 = vmatprep.subr.bf16.mxu0 0
    %4370 = vmatpush1.bf16.msra.mxu0 0
    %4371 = vmatprep.mubr.bf16.mxu0 0
    %4372 = vmatmul.mubr.bf16.gmra.mrb[0].mxu0 %v4258
    %v4373 = vpop.f32.mrb[0].mxu0
    %v4374 = vadd.f32 %v4289, %v4373
    %v4375 = vpop.f32.mrb[0].mxu0
    %v4376 = vpop.f32.mrb[0].mxu0
    %v4377 = vadd.f32 %v4289, %v4376
    %v4378 = vpop.f32.mrb[0].mxu0
    %4379 = vmatprep.mubr.bf16.mxu0 0
    %4380 = vmatmul.mubr.bf16.gmra.mrb[0].mxu0 %v4259
    %v4381 = vpop.f32.mrb[0].mxu0
    %v4382 = vadd.f32 %v4289, %v4381
    %v4383 = vpop.f32.mrb[0].mxu0
    %v4384 = vpop.f32.mrb[0].mxu0
    %v4385 = vadd.f32 %v4289, %v4384
    %v4386 = vpop.f32.mrb[0].mxu0
    %4387 = vmatprep.mubr.bf16.mxu0 0
    %4388 = vmatmul.mubr.bf16.gmra.mrb[0].mxu0 %v4260
    %v4389 = vpop.f32.mrb[0].mxu0
    %v4390 = vadd.f32 %v4289, %v4389
    %v4391 = vpop.f32.mrb[0].mxu0
    %v4392 = vpop.f32.mrb[0].mxu0
    %v4393 = vadd.f32 %v4289, %v4392
    %v4394 = vpop.f32.mrb[0].mxu0
    %4395 = vmatprep.mubr.bf16.mxu0 0
    %4396 = vmatmul.mubr.bf16.gmra.mrb[0].mxu0 %v4261
    %v4397 = vpop.f32.mrb[0].mxu0
    %v4398 = vadd.f32 %v4289, %v4397
    %v4399 = vpop.f32.mrb[0].mxu0
    %v4400 = vpop.f32.mrb[0].mxu0
    %v4401 = vadd.f32 %v4289, %v4400
    %v4402 = vpop.f32.mrb[0].mxu0
    %4403 = vmatprep.mubr.bf16.mxu0 0
    %4404 = vmatmul.mubr.bf16.gmra.mrb[0].mxu0 %v4262
    %v4405 = vpop.f32.mrb[0].mxu0
    %v4406 = vadd.f32 %v4289, %v4405
    %v4407 = vpop.f32.mrb[0].mxu0
    %v4408 = vpop.f32.mrb[0].mxu0
    %v4409 = vadd.f32 %v4289, %v4408
    %v4410 = vpop.f32.mrb[0].mxu0
    %4411 = vmatprep.mubr.bf16.mxu0 0
    %4412 = vmatmul.mubr.bf16.gmra.mrb[0].mxu0 %v4263
    %v4413 = vpop.f32.mrb[0].mxu0
    %v4414 = vadd.f32 %v4289, %v4413
    %v4415 = vpop.f32.mrb[0].mxu0
    %v4416 = vpop.f32.mrb[0].mxu0
    %v4417 = vadd.f32 %v4289, %v4416
    %v4418 = vpop.f32.mrb[0].mxu0
    %4419 = vmatprep.mubr.bf16.mxu0 0
    %4420 = vmatmul.mubr.bf16.gmra.mrb[0].mxu0 %v4264
    %v4421 = vpop.f32.mrb[0].mxu0
    %v4422 = vadd.f32 %v4289, %v4421
    %v4423 = vpop.f32.mrb[0].mxu0
    %v4424 = vpop.f32.mrb[0].mxu0
    %v4425 = vadd.f32 %v4289, %v4424
    %v4426 = vpop.f32.mrb[0].mxu0
    %4427 = vmatprep.mubr.bf16.mxu0 0
    %4428 = vmatmul.mubr.bf16.gmra.mrb[0].mxu0 %v4265
    %v4429 = vpop.f32.mrb[0].mxu0
    %v4430 = vadd.f32 %v4289, %v4429
    %v4431 = vpop.f32.mrb[0].mxu0
    %v4432 = vpop.f32.mrb[0].mxu0
    %v4433 = vadd.f32 %v4289, %v4432
    %v4434 = vpop.f32.mrb[0].mxu0
    %4435 = vdwg.mxu0
    %v4436 = vlaneseq
    %v4437 = vand.u32 %v4436, 127
    %v4438 = vunpack.c.l.bf16 %v57
    %v4439 = vunpack.c.l.bf16 %v58
    %v4440 = vunpack.c.l.bf16 %v59
    %v4441 = vunpack.c.l.bf16 %v60
    %v4442 = vunpack.c.l.bf16 %v61
    %v4443 = vunpack.c.l.bf16 %v62
    %v4444 = vunpack.c.l.bf16 %v63
    %v4445 = vunpack.c.l.bf16 %v64
    %v4446 = vunpack.c.l.bf16 %v65
    %v4447 = vunpack.c.l.bf16 %v66
    %v4448 = vunpack.c.l.bf16 %v67
    %v4449 = vunpack.c.l.bf16 %v68
    %v4450 = vunpack.c.l.bf16 %v69
    %v4451 = vunpack.c.l.bf16 %v70
    %v4452 = vunpack.c.l.bf16 %v71
    %v4453 = vunpack.c.l.bf16 %v72
    %vm4454 = vcmp.lt.s32.totalorder %v4437, 3
    %v4455 = vmul.f32 %v4374, 0.01
    %v4456 = vmul.f32 %v4377, 0.01
    %v4457 = vmul.f32 %v4382, 0.01
    %v4458 = vmul.f32 %v4385, 0.01
    %v4459 = vmul.f32 %v4390, 0.01
    %v4460 = vmul.f32 %v4393, 0.01
    %v4461 = vmul.f32 %v4398, 0.01
    %v4462 = vmul.f32 %v4401, 0.01
    %v4463 = vmul.f32 %v4406, 0.01
    %v4464 = vmul.f32 %v4409, 0.01
    %v4465 = vmul.f32 %v4414, 0.01
    %v4466 = vmul.f32 %v4417, 0.01
    %v4467 = vmul.f32 %v4422, 0.01
    %v4468 = vmul.f32 %v4425, 0.01
    %v4469 = vmul.f32 %v4430, 0.01
    %v4470 = vmul.f32 %v4433, 0.01
    %v4471 = vadd.f32 %v4455, %v4438
    %v4472 = vadd.f32 %v4456, %v4439
    %v4473 = vadd.f32 %v4457, %v4440
    %v4474 = vadd.f32 %v4458, %v4441
    %v4475 = vadd.f32 %v4459, %v4442
    %v4476 = vadd.f32 %v4460, %v4443
    %v4477 = vadd.f32 %v4461, %v4444
    %v4478 = vadd.f32 %v4462, %v4445
    %v4479 = vadd.f32 %v4463, %v4446
    %v4480 = vadd.f32 %v4464, %v4447
    %v4481 = vadd.f32 %v4465, %v4448
    %v4482 = vadd.f32 %v4466, %v4449
    %v4483 = vadd.f32 %v4467, %v4450
    %v4484 = vadd.f32 %v4468, %v4451
    %v4485 = vadd.f32 %v4469, %v4452
    %v4486 = vadd.f32 %v4470, %v4453
    %v4487 = vsel %vm4454, %v4471, %v4374
    %v4488 = vsel %vm4454, %v4472, %v4377
    %v4489 = vsel %vm4454, %v4473, %v4382
    %v4490 = vsel %vm4454, %v4474, %v4385
    %v4491 = vsel %vm4454, %v4475, %v4390
    %v4492 = vsel %vm4454, %v4476, %v4393
    %v4493 = vsel %vm4454, %v4477, %v4398
    %v4494 = vsel %vm4454, %v4478, %v4401
    %v4495 = vsel %vm4454, %v4479, %v4406
    %v4496 = vsel %vm4454, %v4480, %v4409
    %v4497 = vsel %vm4454, %v4481, %v4414
    %v4498 = vsel %vm4454, %v4482, %v4417
    %v4499 = vsel %vm4454, %v4483, %v4422
    %v4500 = vsel %vm4454, %v4484, %v4425
    %v4501 = vsel %vm4454, %v4485, %v4430
    %v4502 = vsel %vm4454, %v4486, %v4433
    %vm4503 = vcmp.ge.s32.totalorder %v4437, 64
    %vm4504 = vcmp.lt.s32.totalorder %v4437, 67
    %vm4505 = vmand %vm4503, %vm4504
    %v4506 = vsel %vm4505, 6.0, 0.0
    %v4507 = vsub.f32 %v4487, %v4506
    %v4508 = vsub.f32 %v4488, %v4506
    %v4509 = vsub.f32 %v4489, %v4506
    %v4510 = vsub.f32 %v4490, %v4506
    %v4511 = vsub.f32 %v4491, %v4506
    %v4512 = vsub.f32 %v4492, %v4506
    %v4513 = vsub.f32 %v4493, %v4506
    %v4514 = vsub.f32 %v4494, %v4506
    %v4515 = vsub.f32 %v4495, %v4506
    %v4516 = vsub.f32 %v4496, %v4506
    %v4517 = vsub.f32 %v4497, %v4506
    %v4518 = vsub.f32 %v4498, %v4506
    %v4519 = vsub.f32 %v4499, %v4506
    %v4520 = vsub.f32 %v4500, %v4506
    %v4521 = vsub.f32 %v4501, %v4506
    %v4522 = vsub.f32 %v4502, %v4506
    %4523 = vst [vmem:[#allocation8] sm:$0xff] %v4507
    %4524 = vst [vmem:[#allocation8 + $0x8] sm:$0xff] %v4508
    %4525 = vst [vmem:[#allocation8 + $0x10] sm:$0xff] %v4509
    %4526 = vst [vmem:[#allocation8 + $0x18] sm:$0xff] %v4510
    %4527 = vst [vmem:[#allocation8 + $0x20] sm:$0xff] %v4511
    %4528 = vst [vmem:[#allocation8 + $0x28] sm:$0xff] %v4512
    %4529 = vst [vmem:[#allocation8 + $0x30] sm:$0xff] %v4513
    %4530 = vst [vmem:[#allocation8 + $0x38] sm:$0xff] %v4514
    %4531 = vst [vmem:[#allocation8 + $0x40] sm:$0xff] %v4515
    %4532 = vst [vmem:[#allocation8 + $0x48] sm:$0xff] %v4516
    %4533 = vst [vmem:[#allocation8 + $0x50] sm:$0xff] %v4517
    %4534 = vst [vmem:[#allocation8 + $0x58] sm:$0xff] %v4518
    %4535 = vst [vmem:[#allocation8 + $0x60] sm:$0xff] %v4519
    %4536 = vst [vmem:[#allocation8 + $0x68] sm:$0xff] %v4520
    %4537 = vst [vmem:[#allocation8 + $0x70] sm:$0xff] %v4521
    %4538 = vst [vmem:[#allocation8 + $0x78] sm:$0xff] %v4522
    // Predicated region
    $region26: #{tpu_custom_call.1} parent=1 // pred_check
      _
    $region27: #{tpu_custom_call.1} parent=1 // pred_check_branch
      %4540 = sbr.rel (0) target = $region29
    $region28: #{tpu_custom_call.1} parent=1 // pred_region
      %s4542 = ssub.s32 2048, 2048
      %4543 = vsyncadd [#allocation4], %s4542
      %s4544 = sshll.u32 [#allocation8], 4
      %s4545 = int_to_ptr.vmem [resolvable:$true] %s4544
      %4550 = dma.vmem_to_hbm [thread:$0]  %s4545, 2048, %s3, [#allocation4], 128, 128, 8
    $region29: #{tpu_custom_call.1} parent=1 // pred_fallthru
      _
    // Predicated region
    $region30: #{tpu_custom_call.1} parent=1 // pred_check
      _
    $region31: #{tpu_custom_call.1} parent=1 // pred_check_branch
      %4552 = sbr.rel (0) target = $region33
    $region32: #{tpu_custom_call.1} parent=1 // pred_region
      %4553 = dma.done [#allocation4], 2048
    $region33: #{tpu_custom_call.1} parent=1 // pred_fallthru
      _
    %4554 = vsyncpa [#allocation3], 1
    %4555 = vsyncpa [#allocation6], 1
    %4556 = vsyncpa [#allocation4], 1

</llo_original>
